<compile_context>
chip_gen: v5e
topology: v5e:2x2
jax: 0.10.0
libtpu: 0.0.40
codegen_flags: <defaults>
</compile_context>

<pallas_src>
import functools

import jax
import jax.numpy as jnp
import numpy as np
from jax.experimental import pallas as pl
from jax.experimental.pallas import tpu as pltpu


# --------------------------- SMEM scalar indices ----------------------------
_S_CONVH_W, _S_CONVH_B = 0, 1
_S_CONVH2_W0, _S_CONVH2_W1, _S_CONVH2_W2, _S_CONVH2_B = 2, 3, 4, 5
_S_MIXHW_WH, _S_MIXHW_WW, _S_MIXHW_B = 6, 7, 8
_S_MIXHW2_W0, _S_MIXHW2_W1, _S_MIXHW2_W2, _S_MIXHW2_B = 9, 10, 11, 12
_S_HWS2_W0, _S_HWS2_W1, _S_HWS2_W2, _S_HWS2_B = 13, 14, 15, 16
_S_W0, _S_W1 = 17, 18


def _gelu_exact(v):
    # erf-based GELU (nn.GELU default) via the Numerical-Recipes erfc rational
    # approximation (|err| < 1.3e-7); built only from VPU/EUP-friendly ops.
    a = jnp.abs(v) * 0.7071067811865476
    t = 1.0 / (1.0 + 0.5 * a)
    poly = -1.26551223 + t * (1.00002368 + t * (0.37409196 + t * (
        0.09678418 + t * (-0.18628806 + t * (0.27886807 + t * (
            -1.13520398 + t * (1.48851587 + t * (
                -0.82215223 + t * 0.17087277))))))))
    erfc_a = t * jnp.exp(-a * a + poly)
    erf_v = jnp.where(v >= 0.0, 1.0 - erfc_a, erfc_a - 1.0)
    return 0.5 * v * (1.0 + erf_v)


# ------------------------------ fused kernel --------------------------------
def _eisa_kernel(x_ref, w_in_ref, b_in_ref, w_out_ref, rows_ref,
                 prc_ref, mrc_ref, sel_ref, exp_ref, bexp_ref,
                 pgh_ref, pgs_ref, lin_ref, hmask_ref, scal_ref, o_ref,
                 *, mm_dtype):
    TL = x_ref.shape[-1]                       # lane width = TBL * C
    x = x_ref[0]                               # (M, TL) f32, M = TBS*HW

    def S(k):                                  # packed SMEM scalar
        return scal_ref[k]

    def dot32(a, b):
        return jnp.dot(a, b, preferred_element_type=jnp.float32)

    sig = jax.nn.sigmoid

    rows = rows_ref[...]                       # (4, TL) packed lane-row consts
    b_out = rows[0:1, :]                       # fused mix_all∘proj bias
    gs_bias = rows[1:2, :]                     # folded mix_hws bias terms
    lane_ok_l = rows[2:3, :]                   # 0 where channel-in-image == 0
    lane_ok_r = rows[3:4, :]                   # 0 where channel-in-image == C-1
    row_ok_up = hmask_ref[0]                   # (L,1): 0 where spatial idx == 0
    row_ok_dn = hmask_ref[1]                   # (L,1): 0 where spatial idx == H-1

    # ---- fused mlp_h|mlp_w|mlp_s (block-diag 1x1 convs) + one wide GELU ----
    y = dot32(x.astype(mm_dtype), w_in_ref[...]) + b_in_ref[...]   # (M, 3TL)
    y = _gelu_exact(y)
    y_h, y_w, y_s = y[:, :TL], y[:, TL:2 * TL], y[:, 2 * TL:]      # 128-aligned

    # ---- adaptive-average pools (matmuls against constant block masks) ----
    sel = sel_ref[...]                                             # (TL, TBL)
    h2 = dot32(dot32(prc_ref[0], y_h), sel)                        # (L, TBL)
    w2 = dot32(dot32(prc_ref[1], y_w), sel)                        # (L, TBL)
    s1s = dot32(pgs_ref[...], y_s)                                 # (TBS, TL), S15/HW folded

    # ---- 3-tap Conv1d helpers (zero pad, no cross-image leakage) ----
    def conv3_rows(v, kw0, kw1, kw2, kb):      # conv along spatial axis (sublanes)
        z = jnp.zeros((1, v.shape[1]), jnp.float32)
        up = jnp.concatenate([z, v[:-1, :]], axis=0) * row_ok_up
        dn = jnp.concatenate([v[1:, :], z], axis=0) * row_ok_dn
        return S(kw0) * up + S(kw1) * v + S(kw2) * dn + S(kb)

    def conv3_lanes(v, kw0, kw1, kw2, kb):     # conv along channel axis (lanes)
        z = jnp.zeros((v.shape[0], 1), jnp.float32)
        lf = jnp.concatenate([z, v[:, :-1]], axis=1) * lane_ok_l
        rt = jnp.concatenate([v[:, 1:], z], axis=1) * lane_ok_r
        return S(kw0) * lf + S(kw1) * v + S(kw2) * rt + S(kb)

    # ---- H gate: convH -> sig -> convH2 -> sig (per image, per row) ----
    gh = sig(S(_S_CONVH_W) * h2 + S(_S_CONVH_B))
    gh = sig(conv3_rows(gh, _S_CONVH2_W0, _S_CONVH2_W1, _S_CONVH2_W2,
                        _S_CONVH2_B))                              # (L, TBL)

    # ---- HW-mix gate for the W branch (per image, per column) ----
    gw = sig(S(_S_MIXHW_WH) * h2 + S(_S_MIXHW_WW) * w2 + S(_S_MIXHW_B))
    gw = sig(conv3_rows(gw, _S_MIXHW2_W0, _S_MIXHW2_W1, _S_MIXHW2_W2,
                        _S_MIXHW2_B))                              # (L, TBL)

    # ---- HWS-mix gate for the S branch (per image, per channel) ----
    expand = exp_ref[...]                                          # (TBL, TL)
    pgh = pgh_ref[...]                                             # (TBS, L)
    h2l = dot32(pgh, dot32(h2, expand) * lin_ref[0])               # S13*linearH folded
    w2l = dot32(pgh, dot32(w2, expand) * lin_ref[1])               # S14*linearW folded
    gs = sig(h2l + w2l + s1s + gs_bias)                            # (TBS, TL)
    gs = sig(conv3_lanes(gs, _S_HWS2_W0, _S_HWS2_W1, _S_HWS2_W2, _S_HWS2_B))

    # ---- broadcast gates back to pixels (small block-mask matmuls) ----
    rg = dot32(mrc_ref[0], dot32(gh, expand))                      # (M, TL)
    cg = dot32(mrc_ref[1], dot32(gw, expand))                      # (M, TL)
    sg = dot32(bexp_ref[...], gs)                                  # (M, TL)

    # ---- fused mix_all + proj: 128-aligned lane concat, single K=3TL dot ----
    gated = jnp.concatenate([y_h * rg, y_w * cg, y_s * sg], axis=1)
    prj = dot32(gated.astype(mm_dtype), w_out_ref[...]) + b_out    # (M, TL)
    o_ref[0] = prj * S(_S_W0) + x * S(_S_W1)


# --------------------------------- wrapper ----------------------------------
def eisa_forward(x_bhwc, p, *, lane_batches=None, sub_batches=2,
                 matmul_dtype=jnp.bfloat16):
    B, H, W, C = x_bhwc.shape
    assert H == W, "EISA requires square spatial input (H == W)"
    HW = H * W
    f32 = jnp.float32

    TBL = lane_batches
    if TBL is None:                       # pack batches along lanes to 128 wide
        TBL = 128 // C if (C <= 128 and 128 % C == 0) else 1
    TBS = max(1, sub_batches)             # extra batches along sublanes
    group = TBS * TBL
    G = -(-B // group)                    # grid steps (keep >= 2 for v7x)
    B_pad = G * group
    M = TBS * HW                          # rows per grid step
    L = TBS * H                           # gate-length rows per step
    TL = TBL * C                          # lane width

    # ---- parameters -> block-diagonal / lane-tiled operands ----
    eye = jnp.eye(TBL, dtype=f32)
    whT = p["mlp_h_w"][:, :, 0, 0].T
    wwT = p["mlp_w_w"][:, :, 0, 0].T
    wsT = p["mlp_s_w"][:, :, 0, 0].T
    w_in = jnp.concatenate(
        [jnp.kron(eye, whT), jnp.kron(eye, wwT), jnp.kron(eye, wsT)],
        axis=1).astype(matmul_dtype)                                # (TL, 3TL)
    b_in = jnp.concatenate(
        [jnp.tile(p["mlp_h_b"], TBL), jnp.tile(p["mlp_w_b"], TBL),
         jnp.tile(p["mlp_s_b"], TBL)]).reshape(1, 3 * TL).astype(f32)

    hi = jax.lax.Precision.HIGHEST
    wprojT = p["proj_w"].T                                          # (C, C)
    wmixT = p["mix_all_w"][:, :, 0, 0].T                            # (3C, C)
    w_full = jnp.matmul(wmixT, wprojT, precision=hi)                # mix_all∘proj
    b_full = jnp.matmul(p["mix_all_b"].reshape(1, C), wprojT,
                        precision=hi)[0] + p["proj_b"]              # (C,)
    w_out = jnp.concatenate(
        [jnp.kron(eye, w_full[0:C]), jnp.kron(eye, w_full[C:2 * C]),
         jnp.kron(eye, w_full[2 * C:])], axis=0).astype(matmul_dtype)  # (3TL, TL)
    b_out = jnp.tile(b_full, TBL).reshape(1, TL).astype(f32)

    # mix_hws (Conv1d(3,1,1)) weights/bias folded into linearH/linearW/pool_c
    s13 = p["mix_hws_w"][0, 0, 0]
    s14 = p["mix_hws_w"][0, 1, 0]
    s15 = p["mix_hws_w"][0, 2, 0]
    s16 = p["mix_hws_b"][0]
    lin_tile = jnp.stack(
        [s13 * jnp.tile(p["linearH_w"].T, (TBS, TBL)),
         s14 * jnp.tile(p["linearW_w"].T, (TBS, TBL))]).astype(f32)  # (2, L, TL)
    gs_bias = jnp.tile(s13 * p["linearH_b"] + s14 * p["linearW_b"] + s16,
                       TBL).reshape(1, TL).astype(f32)

    # 19 runtime scalars -> SMEM
    scal = jnp.concatenate([
        p["convH_w"].reshape(-1), p["convH_b"].reshape(-1),          # 0, 1
        p["convH2_w"].reshape(-1), p["convH2_b"].reshape(-1),        # 2-4, 5
        p["mix_hw_w"].reshape(-1), p["mix_hw_b"].reshape(-1),        # 6-7, 8
        p["mix_hw2_w"].reshape(-1), p["mix_hw2_b"].reshape(-1),      # 9-11, 12
        p["mix_hws2_w"].reshape(-1), p["mix_hws2_b"].reshape(-1),    # 13-15, 16
        p["weights"].reshape(-1),                                    # 17, 18
    ]).astype(f32)

    # ---- constant pooling / selection / broadcast masks (structure only) ----
    pix_row = np.arange(HW) // W
    pix_col = np.arange(HW) % W
    prow = np.zeros((L, M), np.float32)
    pcol = np.zeros((L, M), np.float32)
    for g in range(TBS):
        prow[g * H + pix_row, g * HW + np.arange(HW)] = 1.0
        pcol[g * W + pix_col, g * HW + np.arange(HW)] = 1.0
    prc = jnp.asarray(np.stack([prow, pcol]))                       # (2, L, M)
    mrc = jnp.asarray(np.stack([prow.T, pcol.T]))                   # (2, M, L)

    sel_np = np.zeros((TL, TBL), np.float32)
    exp_np = np.zeros((TBL, TL), np.float32)
    for b in range(TBL):
        sel_np[b * C:(b + 1) * C, b] = 1.0 / (W * C)                # pool_h/pool_w
        exp_np[b, b * C:(b + 1) * C] = 1.0
    sel = jnp.asarray(sel_np)
    expand = jnp.asarray(exp_np)

    bexp_np = np.zeros((M, TBS), np.float32)
    pgh_np = np.zeros((TBS, L), np.float32)
    pgs_np = np.zeros((TBS, M), np.float32)
    for g in range(TBS):
        bexp_np[g * HW:(g + 1) * HW, g] = 1.0
        pgh_np[g, g * H:(g + 1) * H] = 1.0
        pgs_np[g, g * HW:(g + 1) * HW] = 1.0 / HW                   # pool_c
    bexp = jnp.asarray(bexp_np)
    pgh = jnp.asarray(pgh_np)
    pgs = s15 * jnp.asarray(pgs_np)                                 # S15 folded

    row_up = (np.arange(L) % H != 0).astype(np.float32).reshape(L, 1)
    row_dn = (np.arange(L) % H != H - 1).astype(np.float32).reshape(L, 1)
    hmask = jnp.asarray(np.stack([row_up, row_dn]))                 # (2, L, 1)
    lane_l = (np.arange(TL) % C != 0).astype(np.float32).reshape(1, TL)
    lane_r = (np.arange(TL) % C != C - 1).astype(np.float32).reshape(1, TL)
    rows4 = jnp.concatenate(
        [b_out, gs_bias, jnp.asarray(lane_l), jnp.asarray(lane_r)], axis=0)

    # ---- batch packing: (B,H,W,C) -> (G, TBS*HW, TBL*C), lane-dense ----
    xf = x_bhwc.astype(f32)
    if B_pad != B:
        xf = jnp.concatenate([xf, jnp.zeros((B_pad - B, H, W, C), f32)], 0)
    xg = xf.reshape(G, TBS, TBL, H, W, C).transpose(0, 1, 3, 4, 2, 5)
    xg = xg.reshape(G, M, TL)

    operands = [xg, w_in, b_in, w_out, rows4, prc, mrc, sel, expand,
                bexp, pgh, pgs, lin_tile, hmask]

    def _const_spec(a):
        z = (0,) * a.ndim
        return pl.BlockSpec(a.shape, lambda i, z=z: z)

    in_specs = ([pl.BlockSpec((1, M, TL), lambda i: (i, 0, 0))]
                + [_const_spec(a) for a in operands[1:]]
                + [pl.BlockSpec(memory_space=pltpu.MemorySpace.SMEM)])

    out = pl.pallas_call(
        functools.partial(_eisa_kernel, mm_dtype=matmul_dtype),
        out_shape=jax.ShapeDtypeStruct((G, M, TL), f32),
        grid=(G,),
        in_specs=in_specs,
        out_specs=pl.BlockSpec((1, M, TL), lambda i: (i, 0, 0)),
        compiler_params=pltpu.CompilerParams(
            dimension_semantics=("parallel",)),
    )(*operands, scal)

    out = out.reshape(G, TBS, H, W, TBL, C).transpose(0, 1, 4, 2, 3, 5)
    return out.reshape(B_pad, H, W, C)[:B]


eisa_forward_jit = jax.jit(
    eisa_forward,
    static_argnames=("lane_batches", "sub_batches", "matmul_dtype"))


# ------------------------- pure-JAX reference (check) -----------------------
_HIGH = jax.lax.Precision.HIGHEST


def _gelu_ref(v):
    return jax.nn.gelu(v, approximate=False)     # PyTorch nn.GELU default


def _conv1x1_ref(t, w4, b):                      # t (B,Cin,H,W), w4 (Cout,Cin,1,1)
    return jnp.einsum("bchw,oc->bohw", t, w4[:, :, 0, 0],
                      precision=_HIGH) + b[None, :, None, None]


def _conv1d_k1_ref(t, w3, b):                    # t (B,Cin,L), w3 (1,Cin,1)
    return jnp.einsum("bcl,oc->bol", t, w3[:, :, 0],
                      precision=_HIGH) + b[None, :, None]


def _conv1d_k3_ref(t, w3, b):                    # t (B,1,L), w3 (1,1,3), pad=1
    tp = jnp.pad(t, ((0, 0), (0, 0), (1, 1)))
    return (w3[0, 0, 0] * tp[:, :, :-2] + w3[0, 0, 1] * tp[:, :, 1:-1]
            + w3[0, 0, 2] * tp[:, :, 2:] + b[None, :, None])


def eisa_ref(x_bhwc, p):
    sg = jax.nn.sigmoid
    add = x_bhwc
    x1 = jnp.transpose(x_bhwc, (0, 3, 1, 2))                       # (B,C,H,W)

    h = _gelu_ref(_conv1x1_ref(x1, p["mlp_h_w"], p["mlp_h_b"]))
    h1 = jnp.transpose(h, (0, 2, 1, 3))                            # (B,H,C,W)
    h2 = jnp.mean(h1, axis=(2, 3))[:, None, :]                     # (B,1,H)
    h3 = sg(_conv1d_k1_ref(h2, p["convH_w"], p["convH_b"]))
    h3 = sg(_conv1d_k3_ref(h3, p["convH2_w"], p["convH2_b"]))
    h3 = h1 * jnp.transpose(h3, (0, 2, 1))[..., None]
    h3 = jnp.transpose(h3, (0, 2, 1, 3))                           # (B,C,H,W)

    w_ = _gelu_ref(_conv1x1_ref(x1, p["mlp_w_w"], p["mlp_w_b"]))
    w1 = jnp.transpose(w_, (0, 3, 2, 1))                           # (B,W,H,C)
    w2 = jnp.mean(w1, axis=(2, 3))[:, None, :]                     # (B,1,W)
    mhw = jnp.concatenate([h2, w2], axis=1)
    mhw = sg(_conv1d_k1_ref(mhw, p["mix_hw_w"], p["mix_hw_b"]))
    mhw = sg(_conv1d_k3_ref(mhw, p["mix_hw2_w"], p["mix_hw2_b"]))
    w3 = w1 * jnp.transpose(mhw, (0, 2, 1))[..., None]
    w3 = jnp.transpose(w3, (0, 3, 2, 1))                           # (B,C,H,W)

    s = _gelu_ref(_conv1x1_ref(x1, p["mlp_s_w"], p["mlp_s_b"]))
    s1 = jnp.mean(s, axis=(2, 3))[:, None, :]                      # (B,1,C)
    h2l = jnp.matmul(h2, p["linearH_w"].T, precision=_HIGH) + p["linearH_b"]
    w2l = jnp.matmul(w2, p["linearW_w"].T, precision=_HIGH) + p["linearW_b"]
    mhws = jnp.concatenate([h2l, w2l, s1], axis=1)
    mhws = sg(_conv1d_k1_ref(mhws, p["mix_hws_w"], p["mix_hws_b"]))
    mhws = sg(_conv1d_k3_ref(mhws, p["mix_hws2_w"], p["mix_hws2_b"]))
    s2 = s * jnp.transpose(mhws, (0, 2, 1))[..., None]

    xc = jnp.concatenate([h3, w3, s2], axis=1)                     # (B,3C,H,W)
    xm = _conv1x1_ref(xc, p["mix_all_w"], p["mix_all_b"])
    xm = jnp.transpose(xm, (0, 2, 3, 1))                           # (B,H,W,C)
    xp = jnp.matmul(xm, p["proj_w"].T, precision=_HIGH) + p["proj_b"]
    return xp * p["weights"][0] + add * p["weights"][1]


# ----------------------------------- main ------------------------------------
if __name__ == "__main__":
    # segment_dim=8 => linearH/linearW = Linear(7, dim) => H = W = 7.
    B, H, W, dim = 16, 7, 7, 32   # B=16 -> grid of 2 steps of 8 packed images

    key = jax.random.PRNGKey(0)
    ks = jax.random.split(key, 28)

    def rnd(k, shape, scale=0.2):
        return scale * jax.random.normal(k, shape, jnp.float32)

    p = {
        "mlp_h_w": rnd(ks[0], (dim, dim, 1, 1)), "mlp_h_b": rnd(ks[1], (dim,), 0.1),
        "mlp_w_w": rnd(ks[2], (dim, dim, 1, 1)), "mlp_w_b": rnd(ks[3], (dim,), 0.1),
        "mlp_s_w": rnd(ks[4], (dim, dim, 1, 1)), "mlp_s_b": rnd(ks[5], (dim,), 0.1),
        "linearH_w": rnd(ks[6], (dim, H)), "linearH_b": rnd(ks[7], (dim,), 0.1),
        "linearW_w": rnd(ks[8], (dim, W)), "linearW_b": rnd(ks[9], (dim,), 0.1),
        "convH_w": rnd(ks[10], (1, 1, 1), 0.5), "convH_b": rnd(ks[11], (1,), 0.1),
        "convH2_w": rnd(ks[12], (1, 1, 3), 0.5), "convH2_b": rnd(ks[13], (1,), 0.1),
        "mix_hw_w": rnd(ks[14], (1, 2, 1), 0.5), "mix_hw_b": rnd(ks[15], (1,), 0.1),
        "mix_hw2_w": rnd(ks[16], (1, 1, 3), 0.5), "mix_hw2_b": rnd(ks[17], (1,), 0.1),
        "mix_hws_w": rnd(ks[18], (1, 3, 1), 0.5), "mix_hws_b": rnd(ks[19], (1,), 0.1),
        "mix_hws2_w": rnd(ks[20], (1, 1, 3), 0.5), "mix_hws2_b": rnd(ks[21], (1,), 0.1),
        "mix_all_w": rnd(ks[22], (dim, 3 * dim, 1, 1)), "mix_all_b": rnd(ks[23], (dim,), 0.1),
        "proj_w": rnd(ks[24], (dim, dim)), "proj_b": rnd(ks[25], (dim,), 0.1),
        "weights": jnp.ones((2,), jnp.float32),   # nn.Parameter(torch.ones(2))
    }

    x = jax.random.normal(ks[26], (B, H, W, dim), jnp.float32)     # (B,H,W,C)
    ref = jax.block_until_ready(eisa_ref(x, p))

    # 1) routing / layout / folding validated with f32 MXU operands.
    out_f32 = jax.block_until_ready(
        eisa_forward_jit(x, p, matmul_dtype=jnp.float32))
    np.testing.assert_allclose(np.asarray(out_f32), np.asarray(ref),
                               rtol=1e-2, atol=1e-2)

    # 2) performance path: bf16 MXU operands, f32 accumulation & element-wise.
    out = jax.block_until_ready(eisa_forward_jit(x, p))
    np.testing.assert_allclose(np.asarray(out), np.asarray(ref),
                               rtol=5e-2, atol=5e-2)

    assert out.shape == (B, H, W, dim) and out.dtype == jnp.float32
    print("KERNEL_OK")
</pallas_src>

<mosaic_0001>
module attributes {stable_mosaic.version = 11 : i64} {
  func.func @_eisa_kernel(%arg0: i32, %arg1: memref<1x98x128xf32, #tpu.memory_space<vmem>>, %arg2: memref<128x384xf32, #tpu.memory_space<vmem>>, %arg3: memref<1x384xf32, #tpu.memory_space<vmem>>, %arg4: memref<384x128xf32, #tpu.memory_space<vmem>>, %arg5: memref<4x128xf32, #tpu.memory_space<vmem>>, %arg6: memref<2x14x98xf32, #tpu.memory_space<vmem>>, %arg7: memref<2x98x14xf32, #tpu.memory_space<vmem>>, %arg8: memref<128x4xf32, #tpu.memory_space<vmem>>, %arg9: memref<4x128xf32, #tpu.memory_space<vmem>>, %arg10: memref<98x2xf32, #tpu.memory_space<vmem>>, %arg11: memref<2x14xf32, #tpu.memory_space<vmem>>, %arg12: memref<2x98xf32, #tpu.memory_space<vmem>>, %arg13: memref<2x14x128xf32, #tpu.memory_space<vmem>>, %arg14: memref<2x14x1xf32, #tpu.memory_space<vmem>>, %arg15: memref<19xf32, #tpu.memory_space<smem>>, %arg16: memref<1x98x128xf32, #tpu.memory_space<vmem>>) attributes {dimension_semantics = [#tpu.dimension_semantics<parallel>], iteration_bounds = array<i64: 2>, scalar_prefetch = 0 : i64, scratch_operands = 0 : i64, tpu.core_type = #tpu.core_type<tc>, window_params = [{transform_indices = @transform_0, window_bounds = array<i64: 1, 98, 128>}, {pipeline_mode = #tpu.pipeline_mode<synchronous>, transform_indices = @transform_1, window_bounds = array<i64: 128, 384>}, {pipeline_mode = #tpu.pipeline_mode<synchronous>, transform_indices = @transform_2, window_bounds = array<i64: 1, 384>}, {pipeline_mode = #tpu.pipeline_mode<synchronous>, transform_indices = @transform_3, window_bounds = array<i64: 384, 128>}, {pipeline_mode = #tpu.pipeline_mode<synchronous>, transform_indices = @transform_4, window_bounds = array<i64: 4, 128>}, {pipeline_mode = #tpu.pipeline_mode<synchronous>, transform_indices = @transform_5, window_bounds = array<i64: 2, 14, 98>}, {pipeline_mode = #tpu.pipeline_mode<synchronous>, transform_indices = @transform_6, window_bounds = array<i64: 2, 98, 14>}, {pipeline_mode = #tpu.pipeline_mode<synchronous>, transform_indices = @transform_7, window_bounds = array<i64: 128, 4>}, {pipeline_mode = #tpu.pipeline_mode<synchronous>, transform_indices = @transform_8, window_bounds = array<i64: 4, 128>}, {pipeline_mode = #tpu.pipeline_mode<synchronous>, transform_indices = @transform_9, window_bounds = array<i64: 98, 2>}, {pipeline_mode = #tpu.pipeline_mode<synchronous>, transform_indices = @transform_10, window_bounds = array<i64: 2, 14>}, {pipeline_mode = #tpu.pipeline_mode<synchronous>, transform_indices = @transform_11, window_bounds = array<i64: 2, 98>}, {pipeline_mode = #tpu.pipeline_mode<synchronous>, transform_indices = @transform_12, window_bounds = array<i64: 2, 14, 128>}, {pipeline_mode = #tpu.pipeline_mode<synchronous>, transform_indices = @transform_13, window_bounds = array<i64: 2, 14, 1>}, {transform_indices = @transform_14, window_bounds = array<i64: 19>}, {transform_indices = @transform_15, window_bounds = array<i64: 1, 98, 128>}]} {
    %c0 = arith.constant 0 : index
    %c0_0 = arith.constant 0 : index
    %c0_1 = arith.constant 0 : index
    %0 = vector.load %arg1[%c0, %c0_0, %c0_1] : memref<1x98x128xf32, #tpu.memory_space<vmem>>, vector<1x98x128xf32>
    %1 = vector.shape_cast %0 : vector<1x98x128xf32> to vector<98x128xf32>
    %c0_2 = arith.constant 0 : index
    %c0_3 = arith.constant 0 : index
    %2 = vector.load %arg5[%c0_2, %c0_3] : memref<4x128xf32, #tpu.memory_space<vmem>>, vector<4x128xf32>
    %3 = vector.extract_strided_slice %2 {offsets = [0, 0], sizes = [1, 128], strides = [1, 1]} : vector<4x128xf32> to vector<1x128xf32>
    %4 = vector.extract_strided_slice %2 {offsets = [1, 0], sizes = [1, 128], strides = [1, 1]} : vector<4x128xf32> to vector<1x128xf32>
    %5 = vector.extract_strided_slice %2 {offsets = [2, 0], sizes = [1, 128], strides = [1, 1]} : vector<4x128xf32> to vector<1x128xf32>
    %6 = vector.extract_strided_slice %2 {offsets = [3, 0], sizes = [1, 128], strides = [1, 1]} : vector<4x128xf32> to vector<1x128xf32>
    %c0_4 = arith.constant 0 : index
    %c0_5 = arith.constant 0 : index
    %c0_6 = arith.constant 0 : index
    %7 = vector.load %arg14[%c0_4, %c0_5, %c0_6] : memref<2x14x1xf32, #tpu.memory_space<vmem>>, vector<1x14x1xf32>
    %8 = vector.shape_cast %7 : vector<1x14x1xf32> to vector<14x1xf32>
    %c1 = arith.constant 1 : index
    %c0_7 = arith.constant 0 : index
    %c0_8 = arith.constant 0 : index
    %9 = vector.load %arg14[%c1, %c0_7, %c0_8] : memref<2x14x1xf32, #tpu.memory_space<vmem>>, vector<1x14x1xf32>
    %10 = vector.shape_cast %9 : vector<1x14x1xf32> to vector<14x1xf32>
    %c0_9 = arith.constant 0 : index
    %c0_10 = arith.constant 0 : index
    %11 = vector.load %arg2[%c0_9, %c0_10] : memref<128x384xf32, #tpu.memory_space<vmem>>, vector<128x384xf32>
    %cst = arith.constant dense<0.000000e+00> : vector<98x384xf32>
    %12 = tpu.matmul %1, %11, %cst {dimension_numbers = #tpu.dot_dimension_numbers<[1], [0], [0], [1], [0, 0, 1, 1], [], []>} : vector<98x128xf32>, vector<128x384xf32>, vector<98x384xf32> -> vector<98x384xf32>
    %c0_11 = arith.constant 0 : index
    %c0_12 = arith.constant 0 : index
    %13 = vector.load %arg3[%c0_11, %c0_12] : memref<1x384xf32, #tpu.memory_space<vmem>>, vector<1x384xf32>
    %14 = vector.broadcast %13 : vector<1x384xf32> to vector<98x384xf32>
    %15 = arith.addf %12, %14 : vector<98x384xf32>
    %16 = math.absf %15 : vector<98x384xf32>
    %cst_13 = arith.constant 0.707106769 : f32
    %17 = vector.broadcast %cst_13 : f32 to vector<98x384xf32>
    %18 = arith.mulf %16, %17 : vector<98x384xf32>
    %cst_14 = arith.constant 5.000000e-01 : f32
    %19 = vector.broadcast %cst_14 : f32 to vector<98x384xf32>
    %20 = arith.mulf %19, %18 : vector<98x384xf32>
    %cst_15 = arith.constant 1.000000e+00 : f32
    %21 = vector.broadcast %cst_15 : f32 to vector<98x384xf32>
    %22 = arith.addf %21, %20 : vector<98x384xf32>
    %cst_16 = arith.constant 1.000000e+00 : f32
    %23 = vector.broadcast %cst_16 : f32 to vector<98x384xf32>
    %24 = arith.divf %23, %22 : vector<98x384xf32>
    %cst_17 = arith.constant 0.170872763 : f32
    %25 = vector.broadcast %cst_17 : f32 to vector<98x384xf32>
    %26 = arith.mulf %24, %25 : vector<98x384xf32>
    %cst_18 = arith.constant -0.822152256 : f32
    %27 = vector.broadcast %cst_18 : f32 to vector<98x384xf32>
    %28 = arith.addf %27, %26 : vector<98x384xf32>
    %29 = arith.mulf %24, %28 : vector<98x384xf32>
    %cst_19 = arith.constant 1.48851585 : f32
    %30 = vector.broadcast %cst_19 : f32 to vector<98x384xf32>
    %31 = arith.addf %30, %29 : vector<98x384xf32>
    %32 = arith.mulf %24, %31 : vector<98x384xf32>
    %cst_20 = arith.constant -1.13520396 : f32
    %33 = vector.broadcast %cst_20 : f32 to vector<98x384xf32>
    %34 = arith.addf %33, %32 : vector<98x384xf32>
    %35 = arith.mulf %24, %34 : vector<98x384xf32>
    %cst_21 = arith.constant 0.278868079 : f32
    %36 = vector.broadcast %cst_21 : f32 to vector<98x384xf32>
    %37 = arith.addf %36, %35 : vector<98x384xf32>
    %38 = arith.mulf %24, %37 : vector<98x384xf32>
    %cst_22 = arith.constant -0.186288059 : f32
    %39 = vector.broadcast %cst_22 : f32 to vector<98x384xf32>
    %40 = arith.addf %39, %38 : vector<98x384xf32>
    %41 = arith.mulf %24, %40 : vector<98x384xf32>
    %cst_23 = arith.constant 0.0967841818 : f32
    %42 = vector.broadcast %cst_23 : f32 to vector<98x384xf32>
    %43 = arith.addf %42, %41 : vector<98x384xf32>
    %44 = arith.mulf %24, %43 : vector<98x384xf32>
    %cst_24 = arith.constant 0.374091953 : f32
    %45 = vector.broadcast %cst_24 : f32 to vector<98x384xf32>
    %46 = arith.addf %45, %44 : vector<98x384xf32>
    %47 = arith.mulf %24, %46 : vector<98x384xf32>
    %cst_25 = arith.constant 1.00002372 : f32
    %48 = vector.broadcast %cst_25 : f32 to vector<98x384xf32>
    %49 = arith.addf %48, %47 : vector<98x384xf32>
    %50 = arith.mulf %24, %49 : vector<98x384xf32>
    %cst_26 = arith.constant -1.26551223 : f32
    %51 = vector.broadcast %cst_26 : f32 to vector<98x384xf32>
    %52 = arith.addf %51, %50 : vector<98x384xf32>
    %cst_27 = arith.constant 0.000000e+00 : f32
    %53 = vector.broadcast %cst_27 : f32 to vector<98x384xf32>
    %54 = arith.subf %53, %18 : vector<98x384xf32>
    %55 = arith.mulf %54, %18 : vector<98x384xf32>
    %56 = arith.addf %55, %52 : vector<98x384xf32>
    %57 = math.exp %56 : vector<98x384xf32>
    %58 = arith.mulf %24, %57 : vector<98x384xf32>
    %cst_28 = arith.constant 0.000000e+00 : f32
    %59 = vector.broadcast %cst_28 : f32 to vector<98x384xf32>
    %60 = arith.cmpf oge, %15, %59 : vector<98x384xf32>
    %cst_29 = arith.constant 1.000000e+00 : f32
    %61 = vector.broadcast %cst_29 : f32 to vector<98x384xf32>
    %62 = arith.subf %61, %58 : vector<98x384xf32>
    %cst_30 = arith.constant 1.000000e+00 : f32
    %63 = vector.broadcast %cst_30 : f32 to vector<98x384xf32>
    %64 = arith.subf %58, %63 : vector<98x384xf32>
    %65 = arith.select %60, %62, %64 : vector<98x384xi1>, vector<98x384xf32>
    %cst_31 = arith.constant 5.000000e-01 : f32
    %66 = vector.broadcast %cst_31 : f32 to vector<98x384xf32>
    %67 = arith.mulf %66, %15 : vector<98x384xf32>
    %cst_32 = arith.constant 1.000000e+00 : f32
    %68 = vector.broadcast %cst_32 : f32 to vector<98x384xf32>
    %69 = arith.addf %68, %65 : vector<98x384xf32>
    %70 = arith.mulf %67, %69 : vector<98x384xf32>
    %71 = vector.extract_strided_slice %70 {offsets = [0, 0], sizes = [98, 128], strides = [1, 1]} : vector<98x384xf32> to vector<98x128xf32>
    %72 = vector.extract_strided_slice %70 {offsets = [0, 128], sizes = [98, 128], strides = [1, 1]} : vector<98x384xf32> to vector<98x128xf32>
    %73 = vector.extract_strided_slice %70 {offsets = [0, 256], sizes = [98, 128], strides = [1, 1]} : vector<98x384xf32> to vector<98x128xf32>
    %c0_33 = arith.constant 0 : index
    %c0_34 = arith.constant 0 : index
    %74 = vector.load %arg8[%c0_33, %c0_34] : memref<128x4xf32, #tpu.memory_space<vmem>>, vector<128x4xf32>
    %c0_35 = arith.constant 0 : index
    %c0_36 = arith.constant 0 : index
    %c0_37 = arith.constant 0 : index
    %75 = vector.load %arg6[%c0_35, %c0_36, %c0_37] : memref<2x14x98xf32, #tpu.memory_space<vmem>>, vector<1x14x98xf32>
    %76 = vector.shape_cast %75 : vector<1x14x98xf32> to vector<14x98xf32>
    %cst_38 = arith.constant dense<0.000000e+00> : vector<14x128xf32>
    %77 = tpu.matmul %76, %71, %cst_38 {dimension_numbers = #tpu.dot_dimension_numbers<[1], [0], [0], [1], [0, 0, 1, 1], [], []>} : vector<14x98xf32>, vector<98x128xf32>, vector<14x128xf32> -> vector<14x128xf32>
    %cst_39 = arith.constant dense<0.000000e+00> : vector<14x4xf32>
    %78 = tpu.matmul %77, %74, %cst_39 {dimension_numbers = #tpu.dot_dimension_numbers<[1], [0], [0], [1], [0, 0, 1, 1], [], []>} : vector<14x128xf32>, vector<128x4xf32>, vector<14x4xf32> -> vector<14x4xf32>
    %c1_40 = arith.constant 1 : index
    %c0_41 = arith.constant 0 : index
    %c0_42 = arith.constant 0 : index
    %79 = vector.load %arg6[%c1_40, %c0_41, %c0_42] : memref<2x14x98xf32, #tpu.memory_space<vmem>>, vector<1x14x98xf32>
    %80 = vector.shape_cast %79 : vector<1x14x98xf32> to vector<14x98xf32>
    %cst_43 = arith.constant dense<0.000000e+00> : vector<14x128xf32>
    %81 = tpu.matmul %80, %72, %cst_43 {dimension_numbers = #tpu.dot_dimension_numbers<[1], [0], [0], [1], [0, 0, 1, 1], [], []>} : vector<14x98xf32>, vector<98x128xf32>, vector<14x128xf32> -> vector<14x128xf32>
    %cst_44 = arith.constant dense<0.000000e+00> : vector<14x4xf32>
    %82 = tpu.matmul %81, %74, %cst_44 {dimension_numbers = #tpu.dot_dimension_numbers<[1], [0], [0], [1], [0, 0, 1, 1], [], []>} : vector<14x128xf32>, vector<128x4xf32>, vector<14x4xf32> -> vector<14x4xf32>
    %c0_45 = arith.constant 0 : index
    %c0_46 = arith.constant 0 : index
    %83 = vector.load %arg12[%c0_45, %c0_46] : memref<2x98xf32, #tpu.memory_space<vmem>>, vector<2x98xf32>
    %cst_47 = arith.constant dense<0.000000e+00> : vector<2x128xf32>
    %84 = tpu.matmul %83, %73, %cst_47 {dimension_numbers = #tpu.dot_dimension_numbers<[1], [0], [0], [1], [0, 0, 1, 1], [], []>} : vector<2x98xf32>, vector<98x128xf32>, vector<2x128xf32> -> vector<2x128xf32>
    %c0_48 = arith.constant 0 : index
    %85 = memref.load %arg15[%c0_48] : memref<19xf32, #tpu.memory_space<smem>>
    %86 = vector.broadcast %85 : f32 to vector<14x4xf32>
    %87 = arith.mulf %86, %78 : vector<14x4xf32>
    %c1_49 = arith.constant 1 : index
    %88 = memref.load %arg15[%c1_49] : memref<19xf32, #tpu.memory_space<smem>>
    %89 = vector.broadcast %88 : f32 to vector<14x4xf32>
    %90 = arith.addf %87, %89 : vector<14x4xf32>
    %91 = arith.negf %90 : vector<14x4xf32>
    %92 = math.exp %91 : vector<14x4xf32>
    %cst_50 = arith.constant 1.000000e+00 : f32
    %93 = vector.broadcast %cst_50 : f32 to vector<14x4xf32>
    %94 = arith.addf %93, %92 : vector<14x4xf32>
    %95 = arith.divf %93, %94 : vector<14x4xf32>
    %cst_51 = arith.constant 0.000000e+00 : f32
    %96 = vector.broadcast %cst_51 : f32 to vector<1x4xf32>
    %97 = vector.extract_strided_slice %95 {offsets = [0, 0], sizes = [13, 4], strides = [1, 1]} : vector<14x4xf32> to vector<13x4xf32>
    %98 = tpu.concatenate %96, %97 in 0 : vector<1x4xf32>, vector<13x4xf32> -> vector<14x4xf32>
    %99 = vector.broadcast %8 : vector<14x1xf32> to vector<14x4xf32>
    %100 = arith.mulf %98, %99 : vector<14x4xf32>
    %101 = vector.extract_strided_slice %95 {offsets = [1, 0], sizes = [13, 4], strides = [1, 1]} : vector<14x4xf32> to vector<13x4xf32>
    %102 = tpu.concatenate %101, %96 in 0 : vector<13x4xf32>, vector<1x4xf32> -> vector<14x4xf32>
    %103 = vector.broadcast %10 : vector<14x1xf32> to vector<14x4xf32>
    %104 = arith.mulf %102, %103 : vector<14x4xf32>
    %c2 = arith.constant 2 : index
    %105 = memref.load %arg15[%c2] : memref<19xf32, #tpu.memory_space<smem>>
    %106 = vector.broadcast %105 : f32 to vector<14x4xf32>
    %107 = arith.mulf %106, %100 : vector<14x4xf32>
    %c3 = arith.constant 3 : index
    %108 = memref.load %arg15[%c3] : memref<19xf32, #tpu.memory_space<smem>>
    %109 = vector.broadcast %108 : f32 to vector<14x4xf32>
    %110 = arith.mulf %109, %95 : vector<14x4xf32>
    %111 = arith.addf %107, %110 : vector<14x4xf32>
    %c4 = arith.constant 4 : index
    %112 = memref.load %arg15[%c4] : memref<19xf32, #tpu.memory_space<smem>>
    %113 = vector.broadcast %112 : f32 to vector<14x4xf32>
    %114 = arith.mulf %113, %104 : vector<14x4xf32>
    %115 = arith.addf %111, %114 : vector<14x4xf32>
    %c5 = arith.constant 5 : index
    %116 = memref.load %arg15[%c5] : memref<19xf32, #tpu.memory_space<smem>>
    %117 = vector.broadcast %116 : f32 to vector<14x4xf32>
    %118 = arith.addf %115, %117 : vector<14x4xf32>
    %119 = arith.negf %118 : vector<14x4xf32>
    %120 = math.exp %119 : vector<14x4xf32>
    %cst_52 = arith.constant 1.000000e+00 : f32
    %121 = vector.broadcast %cst_52 : f32 to vector<14x4xf32>
    %122 = arith.addf %121, %120 : vector<14x4xf32>
    %123 = arith.divf %121, %122 : vector<14x4xf32>
    %c6 = arith.constant 6 : index
    %124 = memref.load %arg15[%c6] : memref<19xf32, #tpu.memory_space<smem>>
    %125 = vector.broadcast %124 : f32 to vector<14x4xf32>
    %126 = arith.mulf %125, %78 : vector<14x4xf32>
    %c7 = arith.constant 7 : index
    %127 = memref.load %arg15[%c7] : memref<19xf32, #tpu.memory_space<smem>>
    %128 = vector.broadcast %127 : f32 to vector<14x4xf32>
    %129 = arith.mulf %128, %82 : vector<14x4xf32>
    %130 = arith.addf %126, %129 : vector<14x4xf32>
    %c8 = arith.constant 8 : index
    %131 = memref.load %arg15[%c8] : memref<19xf32, #tpu.memory_space<smem>>
    %132 = vector.broadcast %131 : f32 to vector<14x4xf32>
    %133 = arith.addf %130, %132 : vector<14x4xf32>
    %134 = arith.negf %133 : vector<14x4xf32>
    %135 = math.exp %134 : vector<14x4xf32>
    %cst_53 = arith.constant 1.000000e+00 : f32
    %136 = vector.broadcast %cst_53 : f32 to vector<14x4xf32>
    %137 = arith.addf %136, %135 : vector<14x4xf32>
    %138 = arith.divf %136, %137 : vector<14x4xf32>
    %cst_54 = arith.constant 0.000000e+00 : f32
    %139 = vector.broadcast %cst_54 : f32 to vector<1x4xf32>
    %140 = vector.extract_strided_slice %138 {offsets = [0, 0], sizes = [13, 4], strides = [1, 1]} : vector<14x4xf32> to vector<13x4xf32>
    %141 = tpu.concatenate %139, %140 in 0 : vector<1x4xf32>, vector<13x4xf32> -> vector<14x4xf32>
    %142 = vector.broadcast %8 : vector<14x1xf32> to vector<14x4xf32>
    %143 = arith.mulf %141, %142 : vector<14x4xf32>
    %144 = vector.extract_strided_slice %138 {offsets = [1, 0], sizes = [13, 4], strides = [1, 1]} : vector<14x4xf32> to vector<13x4xf32>
    %145 = tpu.concatenate %144, %139 in 0 : vector<13x4xf32>, vector<1x4xf32> -> vector<14x4xf32>
    %146 = vector.broadcast %10 : vector<14x1xf32> to vector<14x4xf32>
    %147 = arith.mulf %145, %146 : vector<14x4xf32>
    %c9 = arith.constant 9 : index
    %148 = memref.load %arg15[%c9] : memref<19xf32, #tpu.memory_space<smem>>
    %149 = vector.broadcast %148 : f32 to vector<14x4xf32>
    %150 = arith.mulf %149, %143 : vector<14x4xf32>
    %c10 = arith.constant 10 : index
    %151 = memref.load %arg15[%c10] : memref<19xf32, #tpu.memory_space<smem>>
    %152 = vector.broadcast %151 : f32 to vector<14x4xf32>
    %153 = arith.mulf %152, %138 : vector<14x4xf32>
    %154 = arith.addf %150, %153 : vector<14x4xf32>
    %c11 = arith.constant 11 : index
    %155 = memref.load %arg15[%c11] : memref<19xf32, #tpu.memory_space<smem>>
    %156 = vector.broadcast %155 : f32 to vector<14x4xf32>
    %157 = arith.mulf %156, %147 : vector<14x4xf32>
    %158 = arith.addf %154, %157 : vector<14x4xf32>
    %c12 = arith.constant 12 : index
    %159 = memref.load %arg15[%c12] : memref<19xf32, #tpu.memory_space<smem>>
    %160 = vector.broadcast %159 : f32 to vector<14x4xf32>
    %161 = arith.addf %158, %160 : vector<14x4xf32>
    %162 = arith.negf %161 : vector<14x4xf32>
    %163 = math.exp %162 : vector<14x4xf32>
    %cst_55 = arith.constant 1.000000e+00 : f32
    %164 = vector.broadcast %cst_55 : f32 to vector<14x4xf32>
    %165 = arith.addf %164, %163 : vector<14x4xf32>
    %166 = arith.divf %164, %165 : vector<14x4xf32>
    %c0_56 = arith.constant 0 : index
    %c0_57 = arith.constant 0 : index
    %167 = vector.load %arg9[%c0_56, %c0_57] : memref<4x128xf32, #tpu.memory_space<vmem>>, vector<4x128xf32>
    %c0_58 = arith.constant 0 : index
    %c0_59 = arith.constant 0 : index
    %168 = vector.load %arg11[%c0_58, %c0_59] : memref<2x14xf32, #tpu.memory_space<vmem>>, vector<2x14xf32>
    %cst_60 = arith.constant dense<0.000000e+00> : vector<14x128xf32>
    %169 = tpu.matmul %78, %167, %cst_60 {dimension_numbers = #tpu.dot_dimension_numbers<[1], [0], [0], [1], [0, 0, 1, 1], [], []>} : vector<14x4xf32>, vector<4x128xf32>, vector<14x128xf32> -> vector<14x128xf32>
    %c0_61 = arith.constant 0 : index
    %c0_62 = arith.constant 0 : index
    %c0_63 = arith.constant 0 : index
    %170 = vector.load %arg13[%c0_61, %c0_62, %c0_63] : memref<2x14x128xf32, #tpu.memory_space<vmem>>, vector<1x14x128xf32>
    %171 = vector.shape_cast %170 : vector<1x14x128xf32> to vector<14x128xf32>
    %172 = arith.mulf %169, %171 : vector<14x128xf32>
    %cst_64 = arith.constant dense<0.000000e+00> : vector<2x128xf32>
    %173 = tpu.matmul %168, %172, %cst_64 {dimension_numbers = #tpu.dot_dimension_numbers<[1], [0], [0], [1], [0, 0, 1, 1], [], []>} : vector<2x14xf32>, vector<14x128xf32>, vector<2x128xf32> -> vector<2x128xf32>
    %cst_65 = arith.constant dense<0.000000e+00> : vector<14x128xf32>
    %174 = tpu.matmul %82, %167, %cst_65 {dimension_numbers = #tpu.dot_dimension_numbers<[1], [0], [0], [1], [0, 0, 1, 1], [], []>} : vector<14x4xf32>, vector<4x128xf32>, vector<14x128xf32> -> vector<14x128xf32>
    %c1_66 = arith.constant 1 : index
    %c0_67 = arith.constant 0 : index
    %c0_68 = arith.constant 0 : index
    %175 = vector.load %arg13[%c1_66, %c0_67, %c0_68] : memref<2x14x128xf32, #tpu.memory_space<vmem>>, vector<1x14x128xf32>
    %176 = vector.shape_cast %175 : vector<1x14x128xf32> to vector<14x128xf32>
    %177 = arith.mulf %174, %176 : vector<14x128xf32>
    %cst_69 = arith.constant dense<0.000000e+00> : vector<2x128xf32>
    %178 = tpu.matmul %168, %177, %cst_69 {dimension_numbers = #tpu.dot_dimension_numbers<[1], [0], [0], [1], [0, 0, 1, 1], [], []>} : vector<2x14xf32>, vector<14x128xf32>, vector<2x128xf32> -> vector<2x128xf32>
    %179 = arith.addf %173, %178 : vector<2x128xf32>
    %180 = arith.addf %179, %84 : vector<2x128xf32>
    %181 = vector.broadcast %4 : vector<1x128xf32> to vector<2x128xf32>
    %182 = arith.addf %180, %181 : vector<2x128xf32>
    %183 = arith.negf %182 : vector<2x128xf32>
    %184 = math.exp %183 : vector<2x128xf32>
    %cst_70 = arith.constant 1.000000e+00 : f32
    %185 = vector.broadcast %cst_70 : f32 to vector<2x128xf32>
    %186 = arith.addf %185, %184 : vector<2x128xf32>
    %187 = arith.divf %185, %186 : vector<2x128xf32>
    %cst_71 = arith.constant 0.000000e+00 : f32
    %188 = vector.broadcast %cst_71 : f32 to vector<2x1xf32>
    %189 = vector.extract_strided_slice %187 {offsets = [0, 0], sizes = [2, 127], strides = [1, 1]} : vector<2x128xf32> to vector<2x127xf32>
    %190 = tpu.concatenate %188, %189 in 1 : vector<2x1xf32>, vector<2x127xf32> -> vector<2x128xf32>
    %191 = vector.broadcast %5 : vector<1x128xf32> to vector<2x128xf32>
    %192 = arith.mulf %190, %191 : vector<2x128xf32>
    %193 = vector.extract_strided_slice %187 {offsets = [0, 1], sizes = [2, 127], strides = [1, 1]} : vector<2x128xf32> to vector<2x127xf32>
    %194 = tpu.concatenate %193, %188 in 1 : vector<2x127xf32>, vector<2x1xf32> -> vector<2x128xf32>
    %195 = vector.broadcast %6 : vector<1x128xf32> to vector<2x128xf32>
    %196 = arith.mulf %194, %195 : vector<2x128xf32>
    %c13 = arith.constant 13 : index
    %197 = memref.load %arg15[%c13] : memref<19xf32, #tpu.memory_space<smem>>
    %198 = vector.broadcast %197 : f32 to vector<2x128xf32>
    %199 = arith.mulf %198, %192 : vector<2x128xf32>
    %c14 = arith.constant 14 : index
    %200 = memref.load %arg15[%c14] : memref<19xf32, #tpu.memory_space<smem>>
    %201 = vector.broadcast %200 : f32 to vector<2x128xf32>
    %202 = arith.mulf %201, %187 : vector<2x128xf32>
    %203 = arith.addf %199, %202 : vector<2x128xf32>
    %c15 = arith.constant 15 : index
    %204 = memref.load %arg15[%c15] : memref<19xf32, #tpu.memory_space<smem>>
    %205 = vector.broadcast %204 : f32 to vector<2x128xf32>
    %206 = arith.mulf %205, %196 : vector<2x128xf32>
    %207 = arith.addf %203, %206 : vector<2x128xf32>
    %c16 = arith.constant 16 : index
    %208 = memref.load %arg15[%c16] : memref<19xf32, #tpu.memory_space<smem>>
    %209 = vector.broadcast %208 : f32 to vector<2x128xf32>
    %210 = arith.addf %207, %209 : vector<2x128xf32>
    %211 = arith.negf %210 : vector<2x128xf32>
    %212 = math.exp %211 : vector<2x128xf32>
    %cst_72 = arith.constant 1.000000e+00 : f32
    %213 = vector.broadcast %cst_72 : f32 to vector<2x128xf32>
    %214 = arith.addf %213, %212 : vector<2x128xf32>
    %215 = arith.divf %213, %214 : vector<2x128xf32>
    %c0_73 = arith.constant 0 : index
    %c0_74 = arith.constant 0 : index
    %c0_75 = arith.constant 0 : index
    %216 = vector.load %arg7[%c0_73, %c0_74, %c0_75] : memref<2x98x14xf32, #tpu.memory_space<vmem>>, vector<1x98x14xf32>
    %217 = vector.shape_cast %216 : vector<1x98x14xf32> to vector<98x14xf32>
    %cst_76 = arith.constant dense<0.000000e+00> : vector<14x128xf32>
    %218 = tpu.matmul %123, %167, %cst_76 {dimension_numbers = #tpu.dot_dimension_numbers<[1], [0], [0], [1], [0, 0, 1, 1], [], []>} : vector<14x4xf32>, vector<4x128xf32>, vector<14x128xf32> -> vector<14x128xf32>
    %cst_77 = arith.constant dense<0.000000e+00> : vector<98x128xf32>
    %219 = tpu.matmul %217, %218, %cst_77 {dimension_numbers = #tpu.dot_dimension_numbers<[1], [0], [0], [1], [0, 0, 1, 1], [], []>} : vector<98x14xf32>, vector<14x128xf32>, vector<98x128xf32> -> vector<98x128xf32>
    %c1_78 = arith.constant 1 : index
    %c0_79 = arith.constant 0 : index
    %c0_80 = arith.constant 0 : index
    %220 = vector.load %arg7[%c1_78, %c0_79, %c0_80] : memref<2x98x14xf32, #tpu.memory_space<vmem>>, vector<1x98x14xf32>
    %221 = vector.shape_cast %220 : vector<1x98x14xf32> to vector<98x14xf32>
    %cst_81 = arith.constant dense<0.000000e+00> : vector<14x128xf32>
    %222 = tpu.matmul %166, %167, %cst_81 {dimension_numbers = #tpu.dot_dimension_numbers<[1], [0], [0], [1], [0, 0, 1, 1], [], []>} : vector<14x4xf32>, vector<4x128xf32>, vector<14x128xf32> -> vector<14x128xf32>
    %cst_82 = arith.constant dense<0.000000e+00> : vector<98x128xf32>
    %223 = tpu.matmul %221, %222, %cst_82 {dimension_numbers = #tpu.dot_dimension_numbers<[1], [0], [0], [1], [0, 0, 1, 1], [], []>} : vector<98x14xf32>, vector<14x128xf32>, vector<98x128xf32> -> vector<98x128xf32>
    %c0_83 = arith.constant 0 : index
    %c0_84 = arith.constant 0 : index
    %224 = vector.load %arg10[%c0_83, %c0_84] : memref<98x2xf32, #tpu.memory_space<vmem>>, vector<98x2xf32>
    %cst_85 = arith.constant dense<0.000000e+00> : vector<98x128xf32>
    %225 = tpu.matmul %224, %215, %cst_85 {dimension_numbers = #tpu.dot_dimension_numbers<[1], [0], [0], [1], [0, 0, 1, 1], [], []>} : vector<98x2xf32>, vector<2x128xf32>, vector<98x128xf32> -> vector<98x128xf32>
    %226 = arith.mulf %71, %219 : vector<98x128xf32>
    %227 = arith.mulf %72, %223 : vector<98x128xf32>
    %228 = arith.mulf %73, %225 : vector<98x128xf32>
    %229 = tpu.concatenate %226, %227, %228 in 1 : vector<98x128xf32>, vector<98x128xf32>, vector<98x128xf32> -> vector<98x384xf32>
    %c0_86 = arith.constant 0 : index
    %c0_87 = arith.constant 0 : index
    %230 = vector.load %arg4[%c0_86, %c0_87] : memref<384x128xf32, #tpu.memory_space<vmem>>, vector<384x128xf32>
    %cst_88 = arith.constant dense<0.000000e+00> : vector<98x128xf32>
    %231 = tpu.matmul %229, %230, %cst_88 {dimension_numbers = #tpu.dot_dimension_numbers<[1], [0], [0], [1], [0, 0, 1, 1], [], []>} : vector<98x384xf32>, vector<384x128xf32>, vector<98x128xf32> -> vector<98x128xf32>
    %232 = vector.broadcast %3 : vector<1x128xf32> to vector<98x128xf32>
    %233 = arith.addf %231, %232 : vector<98x128xf32>
    %c17 = arith.constant 17 : index
    %234 = memref.load %arg15[%c17] : memref<19xf32, #tpu.memory_space<smem>>
    %235 = vector.broadcast %234 : f32 to vector<98x128xf32>
    %236 = arith.mulf %233, %235 : vector<98x128xf32>
    %c18 = arith.constant 18 : index
    %237 = memref.load %arg15[%c18] : memref<19xf32, #tpu.memory_space<smem>>
    %238 = vector.broadcast %237 : f32 to vector<98x128xf32>
    %239 = arith.mulf %1, %238 : vector<98x128xf32>
    %240 = arith.addf %236, %239 : vector<98x128xf32>
    %c0_89 = arith.constant 0 : index
    %c0_90 = arith.constant 0 : index
    %c0_91 = arith.constant 0 : index
    %241 = vector.load %arg16[%c0_89, %c0_90, %c0_91] : memref<1x98x128xf32, #tpu.memory_space<vmem>>, vector<1x98x128xf32>
    %242 = vector.shape_cast %241 : vector<1x98x128xf32> to vector<98x128xf32>
    %243 = vector.shape_cast %240 : vector<98x128xf32> to vector<1x98x128xf32>
    tpu.vector_store %arg16[%c0_89, %c0_90, %c0_91], %243 {strides = array<i32>} : memref<1x98x128xf32, #tpu.memory_space<vmem>>, vector<1x98x128xf32>,
    return
  }
  func.func @transform_0(%arg0: i32) -> (i32, i32, i32) {
    %c0_i32 = arith.constant 0 : i32
    %c0_i32_0 = arith.constant 0 : i32
    %c0_i32_1 = arith.constant 0 : i32
    return %arg0, %c0_i32, %c0_i32_0 : i32, i32, i32
  }
  func.func @transform_1(%arg0: i32) -> (i32, i32) {
    %c0_i32 = arith.constant 0 : i32
    %c0_i32_0 = arith.constant 0 : i32
    %c0_i32_1 = arith.constant 0 : i32
    return %c0_i32, %c0_i32_0 : i32, i32
  }
  func.func @transform_2(%arg0: i32) -> (i32, i32) {
    %c0_i32 = arith.constant 0 : i32
    %c0_i32_0 = arith.constant 0 : i32
    %c0_i32_1 = arith.constant 0 : i32
    return %c0_i32, %c0_i32_0 : i32, i32
  }
  func.func @transform_3(%arg0: i32) -> (i32, i32) {
    %c0_i32 = arith.constant 0 : i32
    %c0_i32_0 = arith.constant 0 : i32
    %c0_i32_1 = arith.constant 0 : i32
    return %c0_i32, %c0_i32_0 : i32, i32
  }
  func.func @transform_4(%arg0: i32) -> (i32, i32) {
    %c0_i32 = arith.constant 0 : i32
    %c0_i32_0 = arith.constant 0 : i32
    %c0_i32_1 = arith.constant 0 : i32
    return %c0_i32, %c0_i32_0 : i32, i32
  }
  func.func @transform_5(%arg0: i32) -> (i32, i32, i32) {
    %c0_i32 = arith.constant 0 : i32
    %c0_i32_0 = arith.constant 0 : i32
    %c0_i32_1 = arith.constant 0 : i32
    %c0_i32_2 = arith.constant 0 : i32
    return %c0_i32, %c0_i32_0, %c0_i32_1 : i32, i32, i32
  }
  func.func @transform_6(%arg0: i32) -> (i32, i32, i32) {
    %c0_i32 = arith.constant 0 : i32
    %c0_i32_0 = arith.constant 0 : i32
    %c0_i32_1 = arith.constant 0 : i32
    %c0_i32_2 = arith.constant 0 : i32
    return %c0_i32, %c0_i32_0, %c0_i32_1 : i32, i32, i32
  }
  func.func @transform_7(%arg0: i32) -> (i32, i32) {
    %c0_i32 = arith.constant 0 : i32
    %c0_i32_0 = arith.constant 0 : i32
    %c0_i32_1 = arith.constant 0 : i32
    return %c0_i32, %c0_i32_0 : i32, i32
  }
  func.func @transform_8(%arg0: i32) -> (i32, i32) {
    %c0_i32 = arith.constant 0 : i32
    %c0_i32_0 = arith.constant 0 : i32
    %c0_i32_1 = arith.constant 0 : i32
    return %c0_i32, %c0_i32_0 : i32, i32
  }
  func.func @transform_9(%arg0: i32) -> (i32, i32) {
    %c0_i32 = arith.constant 0 : i32
    %c0_i32_0 = arith.constant 0 : i32
    %c0_i32_1 = arith.constant 0 : i32
    return %c0_i32, %c0_i32_0 : i32, i32
  }
  func.func @transform_10(%arg0: i32) -> (i32, i32) {
    %c0_i32 = arith.constant 0 : i32
    %c0_i32_0 = arith.constant 0 : i32
    %c0_i32_1 = arith.constant 0 : i32
    return %c0_i32, %c0_i32_0 : i32, i32
  }
  func.func @transform_11(%arg0: i32) -> (i32, i32) {
    %c0_i32 = arith.constant 0 : i32
    %c0_i32_0 = arith.constant 0 : i32
    %c0_i32_1 = arith.constant 0 : i32
    return %c0_i32, %c0_i32_0 : i32, i32
  }
  func.func @transform_12(%arg0: i32) -> (i32, i32, i32) {
    %c0_i32 = arith.constant 0 : i32
    %c0_i32_0 = arith.constant 0 : i32
    %c0_i32_1 = arith.constant 0 : i32
    %c0_i32_2 = arith.constant 0 : i32
    return %c0_i32, %c0_i32_0, %c0_i32_1 : i32, i32, i32
  }
  func.func @transform_13(%arg0: i32) -> (i32, i32, i32) {
    %c0_i32 = arith.constant 0 : i32
    %c0_i32_0 = arith.constant 0 : i32
    %c0_i32_1 = arith.constant 0 : i32
    %c0_i32_2 = arith.constant 0 : i32
    return %c0_i32, %c0_i32_0, %c0_i32_1 : i32, i32, i32
  }
  func.func @transform_14(%arg0: i32) -> i32 {
    %c0_i32 = arith.constant 0 : i32
    %c0_i32_0 = arith.constant 0 : i32
    return %c0_i32 : i32
  }
  func.func @transform_15(%arg0: i32) -> (i32, i32, i32) {
    %c0_i32 = arith.constant 0 : i32
    %c0_i32_0 = arith.constant 0 : i32
    %c0_i32_1 = arith.constant 0 : i32
    return %arg0, %c0_i32, %c0_i32_0 : i32, i32, i32
  }
}

</mosaic_0001>

<llo_original>
// kernel: tile.68
$region0: #{tile.68}
  #allocation0 [shape = 's32[1]{0}', space=sflag, size = 0x4, scoped, tag = 'scoped memory for tile.68']
  %s0 = inlined_call_operand.vmem [shape: f32[32], index: 0, kind: input, shape index: {}]
  %s1 = inlined_call_operand.vmem [shape: f32[4,32], index: 1, kind: output, shape index: {}]
  // Predicated region
  $region2: #{tile.68} parent=0 // pred_check
    _
  $region3: #{tile.68} parent=0 // pred_check_branch
    %3 = sbr.rel (0) target = $region5
  $region4: #{tile.68} parent=0 // pred_region
    _
  $region5: #{tile.68} parent=0 // pred_fallthru
    _
  %v4 = vld [vmem:[%s0] ss:$0 sm:$0xff]
  %5 = vst [vmem:[%s1] sm:$0xf] %v4

// kernel: tile.69
$region0: #{tile.69}
  %s0 = inlined_call_operand.vmem [shape: f32[4,32], index: 0, kind: input, shape index: {}]
  %s1 = inlined_call_operand.vmem [shape: f32[1,128], index: 1, kind: output, shape index: {}]
  $region1: #{tile.69} parent=0
    #allocation0 [shape = 'u8[4096]{0}', space=vmem, size = 0x1000, scoped, tag = 'scoped mem for output reshape']
    #allocation1 [shape = 'u8[4096]{0}', space=vmem, size = 0x1000, scoped, tag = 'scoped mem for input reshape']
    %s3 = ssub.s32 16, 1
    %v4 = vld [vmem:[%s0] sm:%s3]
    %5 = vst [vmem:[#allocation1] sm:%s3] %v4
    %v6 = vld [vmem:[#allocation1] sm:$0x1]
    %vm7 = vcmask 261120
    %8 = vst.msk [vmem:[#allocation0] sm:$0x1] %vm7, %v6
    %s9 = scalar_lea.vmem [#allocation1], 3
    %v10 = vld [vmem:[%s9] sm:$0x1]
    %11 = vrot.lane.b32.xlu0 %v10, 96
    %v12 = vpop.permute.xlu0 %11
    %vm13 = vcmask 1048320
    %14 = vst.msk [vmem:[#allocation0] sm:$0x1] %vm13, %v12
    %s15 = scalar_lea.vmem [#allocation1], 2
    %v16 = vld [vmem:[%s15] sm:$0x1]
    %17 = vrot.lane.b32.xlu0 %v16, 64
    %v18 = vpop.permute.xlu0 %17
    %vm19 = vcmask 785920
    %20 = vst.msk [vmem:[#allocation0] sm:$0x1] %vm19, %v18
    %s21 = scalar_lea.vmem [#allocation1], 1
    %v22 = vld [vmem:[%s21] sm:$0x1]
    %23 = vrot.lane.b32.xlu0 %v22, 32
    %v24 = vpop.permute.xlu0 %23
    %vm25 = vcmask 523520
    %26 = vst.msk [vmem:[#allocation0] sm:$0x1] %vm25, %v24
    %s28 = ssub.s32 2, 1
    %v29 = vld [vmem:[#allocation0] sm:%s28]
    %s31 = ssub.s32 2, 1
    %32 = vst [vmem:[%s1] sm:%s31] %v29

// kernel: tile.39
$region0: #{tile.39}
  %s0 = inlined_call_operand.vmem [shape: f32[4,32], index: 0, kind: input, shape index: {}]
  %s1 = inlined_call_operand.vmem [shape: f32[128], index: 1, kind: output, shape index: {}]
  $region1: #{tile.39} parent=0
    #allocation0 [shape = 'u8[4096]{0}', space=vmem, size = 0x1000, scoped, tag = 'scoped mem for output reshape']
    #allocation1 [shape = 'u8[4096]{0}', space=vmem, size = 0x1000, scoped, tag = 'scoped mem for input reshape']
    %s3 = ssub.s32 16, 1
    %v4 = vld [vmem:[%s0] sm:%s3]
    %5 = vst [vmem:[#allocation1] sm:%s3] %v4
    %v6 = vld [vmem:[#allocation1] sm:$0x1]
    %vm7 = vcmask 261120
    %8 = vst.msk [vmem:[#allocation0] sm:$0x1] %vm7, %v6
    %s9 = scalar_lea.vmem [#allocation1], 3
    %v10 = vld [vmem:[%s9] sm:$0x1]
    %11 = vrot.lane.b32.xlu0 %v10, 96
    %v12 = vpop.permute.xlu0 %11
    %vm13 = vcmask 1048320
    %14 = vst.msk [vmem:[#allocation0] sm:$0x1] %vm13, %v12
    %s15 = scalar_lea.vmem [#allocation1], 2
    %v16 = vld [vmem:[%s15] sm:$0x1]
    %17 = vrot.lane.b32.xlu0 %v16, 64
    %v18 = vpop.permute.xlu0 %17
    %vm19 = vcmask 785920
    %20 = vst.msk [vmem:[#allocation0] sm:$0x1] %vm19, %v18
    %s21 = scalar_lea.vmem [#allocation1], 1
    %v22 = vld [vmem:[%s21] sm:$0x1]
    %23 = vrot.lane.b32.xlu0 %v22, 32
    %v24 = vpop.permute.xlu0 %23
    %vm25 = vcmask 523520
    %26 = vst.msk [vmem:[#allocation0] sm:$0x1] %vm25, %v24
    %s28 = ssub.s32 2, 1
    %v29 = vld [vmem:[#allocation0] sm:%s28]
    %s31 = ssub.s32 2, 1
    %32 = vst [vmem:[%s1] sm:%s31] %v29

// kernel: eisa_forward.1
$region0: #{eisa_forward.1}
  #allocation0 [shape = 'u32[]', space=smem, size = 0x4, offset = 0x4, fixed_abs, tag = 'smem constant byte address 0x4 - core index']
  #allocation1 [shape = 'u32[72,128]{1,0:T(1,128)}', space=vmem, size = 0x9000, scoped, tag = 'internal scratch']
  %s0 = inlined_call_operand.vmem [shape: f32[2,98,128], index: 0, kind: input, shape index: {}]
  %s1 = inlined_call_operand.vmem [shape: f32[128,384], index: 1, kind: input, shape index: {}]
  %s2 = inlined_call_operand.vmem [shape: f32[1,384], index: 2, kind: input, shape index: {}]
  %s3 = inlined_call_operand.vmem [shape: f32[384,128], index: 3, kind: input, shape index: {}]
  %s4 = inlined_call_operand.vmem [shape: f32[4,128], index: 4, kind: input, shape index: {}]
  %s5 = inlined_call_operand.vmem [shape: f32[2,14,98], index: 5, kind: input, shape index: {}]
  %s6 = inlined_call_operand.vmem [shape: f32[2,98,14], index: 6, kind: input, shape index: {}]
  %s7 = inlined_call_operand.vmem [shape: f32[128,4], index: 7, kind: input, shape index: {}]
  %s8 = inlined_call_operand.vmem [shape: f32[4,128], index: 8, kind: input, shape index: {}]
  %s9 = inlined_call_operand.vmem [shape: f32[98,2], index: 9, kind: input, shape index: {}]
  %s10 = inlined_call_operand.vmem [shape: f32[2,14], index: 10, kind: input, shape index: {}]
  %s11 = inlined_call_operand.vmem [shape: f32[2,98], index: 11, kind: input, shape index: {}]
  %s12 = inlined_call_operand.vmem [shape: f32[2,14,128], index: 12, kind: input, shape index: {}]
  %s13 = inlined_call_operand.vmem [shape: f32[2,14,1], index: 13, kind: input, shape index: {}]
  %s14 = inlined_call_operand.vmem [shape: f32[19], index: 14, kind: input, shape index: {}]
  %s15 = inlined_call_operand.vmem [shape: f32[2,98,128], index: 15, kind: output, shape index: {}]
  %s16 = sld [smem:[#allocation0]]
  $region97: #{eisa_forward.1} parent=0
    _
  %s18 = ssub.s32 1, %s16
  %s19 = scalar_select 0, %s18, %s16
  $region1: #{eisa_forward.1} parent=0
    #allocation2 [shape = 'u8[512]{0}', space=smem, size = 0x200, scoped, tag = 'input window, operand 14, single buffered']
    #allocation3 [shape = 's32[2]{0}', space=sflag, size = 0x8, scoped, tag = 'scoped memory for eisa_forward.1']
    %20 = vsyncpa [#allocation3], 0
    loop: start=0, step=1, limit=4
    $region2: #{eisa_forward.1} parent=1 // loop_pre_header
      _
    $region3: #{eisa_forward.1} parent=1 // loop_header
      %s22 = sphi 0, %s26
      %p23 = scmp.ge.s32.totalorder %s22, 4
      %s32 = sphi 0, %s34
      %s35 = sphi 0, %s32
      %s36 = sphi 0, %s35
      %s52 = sphi 0, %s36
      %s56 = sphi 0, %s56
      %s58 = sphi 0, %s56
      %s59 = sphi 0, %s58
      %s73 = sphi 0, %s59
      %s77 = sphi 0, %s77
      %s79 = sphi 0, %s77
      %s80 = sphi 0, %s79
      %s94 = sphi 0, %s80
      %s98 = sphi 0, %s98
      %s100 = sphi 0, %s98
      %s101 = sphi 0, %s100
      %s115 = sphi 0, %s101
      %s119 = sphi 0, %s119
      %s121 = sphi 0, %s119
      %s122 = sphi 0, %s121
      %s136 = sphi 0, %s122
      %s140 = sphi 0, %s140
      %s142 = sphi 0, %s140
      %s143 = sphi 0, %s142
      %s157 = sphi 0, %s143
      %s161 = sphi 0, %s161
      %s163 = sphi 0, %s161
      %s164 = sphi 0, %s163
      %s178 = sphi 0, %s164
      %s182 = sphi 0, %s182
      %s184 = sphi 0, %s182
      %s185 = sphi 0, %s184
      %s199 = sphi 0, %s185
      %s203 = sphi 0, %s203
      %s205 = sphi 0, %s203
      %s206 = sphi 0, %s205
      %s220 = sphi 0, %s206
      %s224 = sphi 0, %s224
      %s226 = sphi 0, %s224
      %s227 = sphi 0, %s226
      %s241 = sphi 0, %s227
      %s245 = sphi 0, %s245
      %s247 = sphi 0, %s245
      %s248 = sphi 0, %s247
      %s262 = sphi 0, %s248
      %s266 = sphi 0, %s266
      %s268 = sphi 0, %s266
      %s269 = sphi 0, %s268
      %s283 = sphi 0, %s269
      %s287 = sphi 0, %s287
      %s289 = sphi 0, %s287
      %s290 = sphi 0, %s289
      %s304 = sphi 0, %s290
      %s308 = sphi 0, %s308
      %s310 = sphi 0, %s308
      %s311 = sphi 0, %s310
      %s325 = sphi 0, %s311
      %s329 = sphi 0, %s329
      %s331 = sphi 0, %s329
      %s332 = sphi 0, %s331
      %s346 = sphi 0, %s332
      %s352 = sphi 0, %s354
      %s355 = sphi 0, %s352
      %s356 = sphi 0, %s355
      %s372 = sphi 0, %s356
    $region4: #{eisa_forward.1} parent=1 // loop_header_branch
      %25 = sbr.rel (%p23) target = $region8
    $region5: #{eisa_forward.1} parent=1 // loop_body
      %s27 = ssub.s32 %s22, 1
      %s28 = ssub.s32 %s22, 2
      %s29 = sadd.s32 %s22, 1
      %s30 = ssub.s32 %s22, %s29
      %p31 = scmp.eq.s32.totalorder %s30, 0
      %s33 = sadd.s32 %s32, 1
      %s34 = scalar_select %p31, %s32, %s33
      %p37 = pneg %p31
      %p38 = scmp.eq.s32.totalorder %s22, 1
      %p39 = por %p37, %p38
      %p40 = scmp.ne.s32.totalorder %s32, %s35
      %p41 = scmp.eq.s32.totalorder %s22, 0
      %p42 = por %p40, %p41
      %p43 = scmp.ne.s32.totalorder %s32, %s35
      %p44 = scmp.eq.s32.totalorder %s27, 1
      %p45 = por %p43, %p44
      %p46 = scmp.ne.s32.totalorder %s35, %s36
      %p47 = scmp.eq.s32.totalorder %s27, 0
      %p48 = por %p46, %p47
      %p49 = scmp.ne.s32.totalorder %s35, %s36
      %p50 = scmp.eq.s32.totalorder %s28, 1
      %p51 = por %p49, %p50
      %p53 = scmp.ne.s32.totalorder %s36, %s52
      %p54 = scmp.eq.s32.totalorder %s28, 0
      %p55 = por %p53, %p54
      %s57 = sadd.s32 %s56, 1
      %p60 = scmp.eq.s32.totalorder %s22, 1
      %p61 = scmp.ne.s32.totalorder %s56, %s58
      %p62 = scmp.eq.s32.totalorder %s22, 0
      %p63 = por %p61, %p62
      %p64 = scmp.ne.s32.totalorder %s56, %s58
      %p65 = scmp.eq.s32.totalorder %s27, 1
      %p66 = por %p64, %p65
      %p67 = scmp.ne.s32.totalorder %s58, %s59
      %p68 = scmp.eq.s32.totalorder %s27, 0
      %p69 = por %p67, %p68
      %p70 = scmp.ne.s32.totalorder %s58, %s59
      %p71 = scmp.eq.s32.totalorder %s28, 1
      %p72 = por %p70, %p71
      %p74 = scmp.ne.s32.totalorder %s59, %s73
      %p75 = scmp.eq.s32.totalorder %s28, 0
      %p76 = por %p74, %p75
      %s78 = sadd.s32 %s77, 1
      %p81 = scmp.eq.s32.totalorder %s22, 1
      %p82 = scmp.ne.s32.totalorder %s77, %s79
      %p83 = scmp.eq.s32.totalorder %s22, 0
      %p84 = por %p82, %p83
      %p85 = scmp.ne.s32.totalorder %s77, %s79
      %p86 = scmp.eq.s32.totalorder %s27, 1
      %p87 = por %p85, %p86
      %p88 = scmp.ne.s32.totalorder %s79, %s80
      %p89 = scmp.eq.s32.totalorder %s27, 0
      %p90 = por %p88, %p89
      %p91 = scmp.ne.s32.totalorder %s79, %s80
      %p92 = scmp.eq.s32.totalorder %s28, 1
      %p93 = por %p91, %p92
      %p95 = scmp.ne.s32.totalorder %s80, %s94
      %p96 = scmp.eq.s32.totalorder %s28, 0
      %p97 = por %p95, %p96
      %s99 = sadd.s32 %s98, 1
      %p102 = scmp.eq.s32.totalorder %s22, 1
      %p103 = scmp.ne.s32.totalorder %s98, %s100
      %p104 = scmp.eq.s32.totalorder %s22, 0
      %p105 = por %p103, %p104
      %p106 = scmp.ne.s32.totalorder %s98, %s100
      %p107 = scmp.eq.s32.totalorder %s27, 1
      %p108 = por %p106, %p107
      %p109 = scmp.ne.s32.totalorder %s100, %s101
      %p110 = scmp.eq.s32.totalorder %s27, 0
      %p111 = por %p109, %p110
      %p112 = scmp.ne.s32.totalorder %s100, %s101
      %p113 = scmp.eq.s32.totalorder %s28, 1
      %p114 = por %p112, %p113
      %p116 = scmp.ne.s32.totalorder %s101, %s115
      %p117 = scmp.eq.s32.totalorder %s28, 0
      %p118 = por %p116, %p117
      %s120 = sadd.s32 %s119, 1
      %p123 = scmp.eq.s32.totalorder %s22, 1
      %p124 = scmp.ne.s32.totalorder %s119, %s121
      %p125 = scmp.eq.s32.totalorder %s22, 0
      %p126 = por %p124, %p125
      %p127 = scmp.ne.s32.totalorder %s119, %s121
      %p128 = scmp.eq.s32.totalorder %s27, 1
      %p129 = por %p127, %p128
      %p130 = scmp.ne.s32.totalorder %s121, %s122
      %p131 = scmp.eq.s32.totalorder %s27, 0
      %p132 = por %p130, %p131
      %p133 = scmp.ne.s32.totalorder %s121, %s122
      %p134 = scmp.eq.s32.totalorder %s28, 1
      %p135 = por %p133, %p134
      %p137 = scmp.ne.s32.totalorder %s122, %s136
      %p138 = scmp.eq.s32.totalorder %s28, 0
      %p139 = por %p137, %p138
      %s141 = sadd.s32 %s140, 1
      %p144 = scmp.eq.s32.totalorder %s22, 1
      %p145 = scmp.ne.s32.totalorder %s140, %s142
      %p146 = scmp.eq.s32.totalorder %s22, 0
      %p147 = por %p145, %p146
      %p148 = scmp.ne.s32.totalorder %s140, %s142
      %p149 = scmp.eq.s32.totalorder %s27, 1
      %p150 = por %p148, %p149
      %p151 = scmp.ne.s32.totalorder %s142, %s143
      %p152 = scmp.eq.s32.totalorder %s27, 0
      %p153 = por %p151, %p152
      %p154 = scmp.ne.s32.totalorder %s142, %s143
      %p155 = scmp.eq.s32.totalorder %s28, 1
      %p156 = por %p154, %p155
      %p158 = scmp.ne.s32.totalorder %s143, %s157
      %p159 = scmp.eq.s32.totalorder %s28, 0
      %p160 = por %p158, %p159
      %s162 = sadd.s32 %s161, 1
      %p165 = scmp.eq.s32.totalorder %s22, 1
      %p166 = scmp.ne.s32.totalorder %s161, %s163
      %p167 = scmp.eq.s32.totalorder %s22, 0
      %p168 = por %p166, %p167
      %p169 = scmp.ne.s32.totalorder %s161, %s163
      %p170 = scmp.eq.s32.totalorder %s27, 1
      %p171 = por %p169, %p170
      %p172 = scmp.ne.s32.totalorder %s163, %s164
      %p173 = scmp.eq.s32.totalorder %s27, 0
      %p174 = por %p172, %p173
      %p175 = scmp.ne.s32.totalorder %s163, %s164
      %p176 = scmp.eq.s32.totalorder %s28, 1
      %p177 = por %p175, %p176
      %p179 = scmp.ne.s32.totalorder %s164, %s178
      %p180 = scmp.eq.s32.totalorder %s28, 0
      %p181 = por %p179, %p180
      %s183 = sadd.s32 %s182, 1
      %p186 = scmp.eq.s32.totalorder %s22, 1
      %p187 = scmp.ne.s32.totalorder %s182, %s184
      %p188 = scmp.eq.s32.totalorder %s22, 0
      %p189 = por %p187, %p188
      %p190 = scmp.ne.s32.totalorder %s182, %s184
      %p191 = scmp.eq.s32.totalorder %s27, 1
      %p192 = por %p190, %p191
      %p193 = scmp.ne.s32.totalorder %s184, %s185
      %p194 = scmp.eq.s32.totalorder %s27, 0
      %p195 = por %p193, %p194
      %p196 = scmp.ne.s32.totalorder %s184, %s185
      %p197 = scmp.eq.s32.totalorder %s28, 1
      %p198 = por %p196, %p197
      %p200 = scmp.ne.s32.totalorder %s185, %s199
      %p201 = scmp.eq.s32.totalorder %s28, 0
      %p202 = por %p200, %p201
      %s204 = sadd.s32 %s203, 1
      %p207 = scmp.eq.s32.totalorder %s22, 1
      %p208 = scmp.ne.s32.totalorder %s203, %s205
      %p209 = scmp.eq.s32.totalorder %s22, 0
      %p210 = por %p208, %p209
      %p211 = scmp.ne.s32.totalorder %s203, %s205
      %p212 = scmp.eq.s32.totalorder %s27, 1
      %p213 = por %p211, %p212
      %p214 = scmp.ne.s32.totalorder %s205, %s206
      %p215 = scmp.eq.s32.totalorder %s27, 0
      %p216 = por %p214, %p215
      %p217 = scmp.ne.s32.totalorder %s205, %s206
      %p218 = scmp.eq.s32.totalorder %s28, 1
      %p219 = por %p217, %p218
      %p221 = scmp.ne.s32.totalorder %s206, %s220
      %p222 = scmp.eq.s32.totalorder %s28, 0
      %p223 = por %p221, %p222
      %s225 = sadd.s32 %s224, 1
      %p228 = scmp.eq.s32.totalorder %s22, 1
      %p229 = scmp.ne.s32.totalorder %s224, %s226
      %p230 = scmp.eq.s32.totalorder %s22, 0
      %p231 = por %p229, %p230
      %p232 = scmp.ne.s32.totalorder %s224, %s226
      %p233 = scmp.eq.s32.totalorder %s27, 1
      %p234 = por %p232, %p233
      %p235 = scmp.ne.s32.totalorder %s226, %s227
      %p236 = scmp.eq.s32.totalorder %s27, 0
      %p237 = por %p235, %p236
      %p238 = scmp.ne.s32.totalorder %s226, %s227
      %p239 = scmp.eq.s32.totalorder %s28, 1
      %p240 = por %p238, %p239
      %p242 = scmp.ne.s32.totalorder %s227, %s241
      %p243 = scmp.eq.s32.totalorder %s28, 0
      %p244 = por %p242, %p243
      %s246 = sadd.s32 %s245, 1
      %p249 = scmp.eq.s32.totalorder %s22, 1
      %p250 = scmp.ne.s32.totalorder %s245, %s247
      %p251 = scmp.eq.s32.totalorder %s22, 0
      %p252 = por %p250, %p251
      %p253 = scmp.ne.s32.totalorder %s245, %s247
      %p254 = scmp.eq.s32.totalorder %s27, 1
      %p255 = por %p253, %p254
      %p256 = scmp.ne.s32.totalorder %s247, %s248
      %p257 = scmp.eq.s32.totalorder %s27, 0
      %p258 = por %p256, %p257
      %p259 = scmp.ne.s32.totalorder %s247, %s248
      %p260 = scmp.eq.s32.totalorder %s28, 1
      %p261 = por %p259, %p260
      %p263 = scmp.ne.s32.totalorder %s248, %s262
      %p264 = scmp.eq.s32.totalorder %s28, 0
      %p265 = por %p263, %p264
      %s267 = sadd.s32 %s266, 1
      %p270 = scmp.eq.s32.totalorder %s22, 1
      %p271 = scmp.ne.s32.totalorder %s266, %s268
      %p272 = scmp.eq.s32.totalorder %s22, 0
      %p273 = por %p271, %p272
      %p274 = scmp.ne.s32.totalorder %s266, %s268
      %p275 = scmp.eq.s32.totalorder %s27, 1
      %p276 = por %p274, %p275
      %p277 = scmp.ne.s32.totalorder %s268, %s269
      %p278 = scmp.eq.s32.totalorder %s27, 0
      %p279 = por %p277, %p278
      %p280 = scmp.ne.s32.totalorder %s268, %s269
      %p281 = scmp.eq.s32.totalorder %s28, 1
      %p282 = por %p280, %p281
      %p284 = scmp.ne.s32.totalorder %s269, %s283
      %p285 = scmp.eq.s32.totalorder %s28, 0
      %p286 = por %p284, %p285
      %s288 = sadd.s32 %s287, 1
      %p291 = scmp.eq.s32.totalorder %s22, 1
      %p292 = scmp.ne.s32.totalorder %s287, %s289
      %p293 = scmp.eq.s32.totalorder %s22, 0
      %p294 = por %p292, %p293
      %p295 = scmp.ne.s32.totalorder %s287, %s289
      %p296 = scmp.eq.s32.totalorder %s27, 1
      %p297 = por %p295, %p296
      %p298 = scmp.ne.s32.totalorder %s289, %s290
      %p299 = scmp.eq.s32.totalorder %s27, 0
      %p300 = por %p298, %p299
      %p301 = scmp.ne.s32.totalorder %s289, %s290
      %p302 = scmp.eq.s32.totalorder %s28, 1
      %p303 = por %p301, %p302
      %p305 = scmp.ne.s32.totalorder %s290, %s304
      %p306 = scmp.eq.s32.totalorder %s28, 0
      %p307 = por %p305, %p306
      %s309 = sadd.s32 %s308, 1
      %p312 = scmp.eq.s32.totalorder %s22, 1
      %p313 = scmp.ne.s32.totalorder %s308, %s310
      %p314 = scmp.eq.s32.totalorder %s22, 0
      %p315 = por %p313, %p314
      %p316 = scmp.ne.s32.totalorder %s308, %s310
      %p317 = scmp.eq.s32.totalorder %s27, 1
      %p318 = por %p316, %p317
      %p319 = scmp.ne.s32.totalorder %s310, %s311
      %p320 = scmp.eq.s32.totalorder %s27, 0
      %p321 = por %p319, %p320
      %p322 = scmp.ne.s32.totalorder %s310, %s311
      %p323 = scmp.eq.s32.totalorder %s28, 1
      %p324 = por %p322, %p323
      %p326 = scmp.ne.s32.totalorder %s311, %s325
      %p327 = scmp.eq.s32.totalorder %s28, 0
      %p328 = por %p326, %p327
      %s330 = sadd.s32 %s329, 1
      %p333 = scmp.eq.s32.totalorder %s22, 1
      %p334 = scmp.ne.s32.totalorder %s329, %s331
      %p335 = scmp.eq.s32.totalorder %s22, 0
      %p336 = por %p334, %p335
      %p337 = scmp.ne.s32.totalorder %s329, %s331
      %p338 = scmp.eq.s32.totalorder %s27, 1
      %p339 = por %p337, %p338
      %p340 = scmp.ne.s32.totalorder %s331, %s332
      %p341 = scmp.eq.s32.totalorder %s27, 0
      %p342 = por %p340, %p341
      %p343 = scmp.ne.s32.totalorder %s331, %s332
      %p344 = scmp.eq.s32.totalorder %s28, 1
      %p345 = por %p343, %p344
      %p347 = scmp.ne.s32.totalorder %s332, %s346
      %p348 = scmp.eq.s32.totalorder %s28, 0
      %p349 = por %p347, %p348
      %s350 = ssub.s32 %s22, %s29
      %p351 = scmp.eq.s32.totalorder %s350, 0
      %s353 = sadd.s32 %s352, 1
      %s354 = scalar_select %p351, %s352, %s353
      %p357 = pneg %p351
      %p358 = scmp.eq.s32.totalorder %s22, 1
      %p359 = por %p357, %p358
      %p360 = scmp.ne.s32.totalorder %s352, %s355
      %p361 = scmp.eq.s32.totalorder %s22, 0
      %p362 = por %p360, %p361
      %p363 = scmp.ne.s32.totalorder %s352, %s355
      %p364 = scmp.eq.s32.totalorder %s27, 1
      %p365 = por %p363, %p364
      %p366 = scmp.ne.s32.totalorder %s355, %s356
      %p367 = scmp.eq.s32.totalorder %s27, 0
      %p368 = por %p366, %p367
      %p369 = scmp.ne.s32.totalorder %s355, %s356
      %p370 = scmp.eq.s32.totalorder %s28, 1
      %p371 = por %p369, %p370
      %p373 = scmp.ne.s32.totalorder %s356, %s372
      %p374 = scmp.eq.s32.totalorder %s28, 0
      %p375 = por %p373, %p374
      %p376 = scmp.le.s32.totalorder 1, %s22
      %p377 = scmp.lt.s32.totalorder %s22, 3
      %p378 = pnand %p376, %p377
      %p379 = pneg %p378
      // Predicated region
      $region9: #{eisa_forward.1} parent=5 // pred_check
        _
      $region10: #{eisa_forward.1} parent=5 // pred_check_branch
        %381 = sbr.rel (%p378) target = $region12
      $region11: #{eisa_forward.1} parent=5 // pred_region
        %s382 = ssub.s32 %s22, 1
        // Predicated region
        $region13: #{eisa_forward.1} parent=11 // pred_check
          %p383 = pneg %p69
        $region14: #{eisa_forward.1} parent=11 // pred_check_branch
          %385 = sbr.rel (%p383) target = $region16
        $region15: #{eisa_forward.1} parent=11 // pred_region
          _
        $region16: #{eisa_forward.1} parent=11 // pred_fallthru
          _
        // Predicated region
        $region17: #{eisa_forward.1} parent=11 // pred_check
          %p386 = pneg %p90
        $region18: #{eisa_forward.1} parent=11 // pred_check_branch
          %388 = sbr.rel (%p386) target = $region20
        $region19: #{eisa_forward.1} parent=11 // pred_region
          _
        $region20: #{eisa_forward.1} parent=11 // pred_fallthru
          _
        // Predicated region
        $region21: #{eisa_forward.1} parent=11 // pred_check
          %p389 = pneg %p111
        $region22: #{eisa_forward.1} parent=11 // pred_check_branch
          %391 = sbr.rel (%p389) target = $region24
        $region23: #{eisa_forward.1} parent=11 // pred_region
          _
        $region24: #{eisa_forward.1} parent=11 // pred_fallthru
          _
        // Predicated region
        $region25: #{eisa_forward.1} parent=11 // pred_check
          %p392 = pneg %p132
        $region26: #{eisa_forward.1} parent=11 // pred_check_branch
          %394 = sbr.rel (%p392) target = $region28
        $region27: #{eisa_forward.1} parent=11 // pred_region
          _
        $region28: #{eisa_forward.1} parent=11 // pred_fallthru
          _
        // Predicated region
        $region29: #{eisa_forward.1} parent=11 // pred_check
          %p395 = pneg %p153
        $region30: #{eisa_forward.1} parent=11 // pred_check_branch
          %397 = sbr.rel (%p395) target = $region32
        $region31: #{eisa_forward.1} parent=11 // pred_region
          _
        $region32: #{eisa_forward.1} parent=11 // pred_fallthru
          _
        // Predicated region
        $region33: #{eisa_forward.1} parent=11 // pred_check
          %p398 = pneg %p174
        $region34: #{eisa_forward.1} parent=11 // pred_check_branch
          %400 = sbr.rel (%p398) target = $region36
        $region35: #{eisa_forward.1} parent=11 // pred_region
          _
        $region36: #{eisa_forward.1} parent=11 // pred_fallthru
          _
        // Predicated region
        $region37: #{eisa_forward.1} parent=11 // pred_check
          %p401 = pneg %p195
        $region38: #{eisa_forward.1} parent=11 // pred_check_branch
          %403 = sbr.rel (%p401) target = $region40
        $region39: #{eisa_forward.1} parent=11 // pred_region
          _
        $region40: #{eisa_forward.1} parent=11 // pred_fallthru
          _
        // Predicated region
        $region41: #{eisa_forward.1} parent=11 // pred_check
          %p404 = pneg %p216
        $region42: #{eisa_forward.1} parent=11 // pred_check_branch
          %406 = sbr.rel (%p404) target = $region44
        $region43: #{eisa_forward.1} parent=11 // pred_region
          _
        $region44: #{eisa_forward.1} parent=11 // pred_fallthru
          _
        // Predicated region
        $region45: #{eisa_forward.1} parent=11 // pred_check
          %p407 = pneg %p237
        $region46: #{eisa_forward.1} parent=11 // pred_check_branch
          %409 = sbr.rel (%p407) target = $region48
        $region47: #{eisa_forward.1} parent=11 // pred_region
          _
        $region48: #{eisa_forward.1} parent=11 // pred_fallthru
          _
        // Predicated region
        $region49: #{eisa_forward.1} parent=11 // pred_check
          %p410 = pneg %p258
        $region50: #{eisa_forward.1} parent=11 // pred_check_branch
          %412 = sbr.rel (%p410) target = $region52
        $region51: #{eisa_forward.1} parent=11 // pred_region
          _
        $region52: #{eisa_forward.1} parent=11 // pred_fallthru
          _
        // Predicated region
        $region53: #{eisa_forward.1} parent=11 // pred_check
          %p413 = pneg %p279
        $region54: #{eisa_forward.1} parent=11 // pred_check_branch
          %415 = sbr.rel (%p413) target = $region56
        $region55: #{eisa_forward.1} parent=11 // pred_region
          _
        $region56: #{eisa_forward.1} parent=11 // pred_fallthru
          _
        // Predicated region
        $region57: #{eisa_forward.1} parent=11 // pred_check
          %p416 = pneg %p300
        $region58: #{eisa_forward.1} parent=11 // pred_check_branch
          %418 = sbr.rel (%p416) target = $region60
        $region59: #{eisa_forward.1} parent=11 // pred_region
          _
        $region60: #{eisa_forward.1} parent=11 // pred_fallthru
          _
        // Predicated region
        $region61: #{eisa_forward.1} parent=11 // pred_check
          %p419 = pneg %p321
        $region62: #{eisa_forward.1} parent=11 // pred_check_branch
          %421 = sbr.rel (%p419) target = $region64
        $region63: #{eisa_forward.1} parent=11 // pred_region
          _
        $region64: #{eisa_forward.1} parent=11 // pred_fallthru
          _
        // Predicated region
        $region65: #{eisa_forward.1} parent=11 // pred_check
          %p422 = pneg %p342
        $region66: #{eisa_forward.1} parent=11 // pred_check_branch
          %424 = sbr.rel (%p422) target = $region68
        $region67: #{eisa_forward.1} parent=11 // pred_region
          %426 = vsyncadd [#allocation3], 0
          %s428 = sshll.u32 %s14, 4
          %s429 = int_to_ptr.vmem [resolvable:$true] %s428
          %431 = dma.vmem_to_smem %s429, 16, [#allocation2], [#allocation3]
        $region68: #{eisa_forward.1} parent=11 // pred_fallthru
          _
      $region12: #{eisa_forward.1} parent=5 // pred_fallthru
        _
      %p432 = scmp.lt.s32.totalorder %s22, 2
      // Predicated region
      $region69: #{eisa_forward.1} parent=5 // pred_check
        %p433 = pneg %p432
      $region70: #{eisa_forward.1} parent=5 // pred_check_branch
        %435 = sbr.rel (%p433) target = $region72
      $region71: #{eisa_forward.1} parent=5 // pred_region
        // Predicated region
        $region73: #{eisa_forward.1} parent=71 // pred_check
          %p436 = pneg %p42
        $region74: #{eisa_forward.1} parent=71 // pred_check_branch
          %438 = sbr.rel (%p436) target = $region76
        $region75: #{eisa_forward.1} parent=71 // pred_region
          %p439 = scmp.lt.s32.totalorder %s22, 1
          %s440 = scalar_select %p439, %s22, 1
          %s441 = smul.addr %s440, 13
          %s442 = smul.addr %s441, 8
          %s443 = scalar_lea.vmem %s0, %s442
        $region76: #{eisa_forward.1} parent=71 // pred_fallthru
          _
      $region72: #{eisa_forward.1} parent=5 // pred_fallthru
        _
      %p444 = scmp.le.s32.totalorder 1, %s22
      %p445 = scmp.lt.s32.totalorder %s22, 3
      %p446 = pnand %p444, %p445
      %p447 = pneg %p446
      // Predicated region
      $region77: #{eisa_forward.1} parent=5 // pred_check
        _
      $region78: #{eisa_forward.1} parent=5 // pred_check_branch
        %449 = sbr.rel (%p446) target = $region80
      $region79: #{eisa_forward.1} parent=5 // pred_region
        %s450 = ssub.s32 %s22, 1
        // Predicated region
        $region81: #{eisa_forward.1} parent=79 // pred_check
          %p451 = pneg %p342
        $region82: #{eisa_forward.1} parent=79 // pred_check_branch
          %453 = sbr.rel (%p451) target = $region84
        $region83: #{eisa_forward.1} parent=79 // pred_region
          %455 = dma.done [#allocation3], 16
        $region84: #{eisa_forward.1} parent=79 // pred_fallthru
          _
        %456 = sfence
        %p457 = scmp.lt.s32.totalorder %s27, 1
        %s458 = scalar_select %p457, %s27, 1
        %s459 = smul.addr %s458, 13
        %s460 = smul.addr %s459, 8
        %s461 = scalar_lea.vmem %s0, %s460
        %p462 = pneg %p48
        %p463 = pneg %p45
        %p464 = pneg %p69
        %p465 = pneg %p66
        %p466 = pneg %p90
        %p467 = pneg %p87
        %p468 = pneg %p111
        %p469 = pneg %p108
        %p470 = pneg %p132
        %p471 = pneg %p129
        %p472 = pneg %p153
        %p473 = pneg %p150
        %p474 = pneg %p174
        %p475 = pneg %p171
        %p476 = pneg %p195
        %p477 = pneg %p192
        %p478 = pneg %p216
        %p479 = pneg %p213
        %p480 = pneg %p237
        %p481 = pneg %p234
        %p482 = pneg %p258
        %p483 = pneg %p255
        %p484 = pneg %p279
        %p485 = pneg %p276
        %p486 = pneg %p300
        %p487 = pneg %p297
        %p488 = pneg %p321
        %p489 = pneg %p318
        %p490 = pneg %p342
        %p491 = pneg %p339
        %p492 = pneg %p368
        %p493 = pneg %p365
        %p494 = scmp.lt.s32.totalorder %s27, 1
        %s495 = scalar_select %p494, %s27, 1
        %s496 = smul.addr %s495, 13
        %s497 = smul.addr %s496, 8
        %s498 = scalar_lea.vmem %s15, %s497
        %p499 = scmp.lt.s32.totalorder %s27, 1
        %s500 = scalar_select %p499, %s27, 1
        %s501 = smul.addr %s500, 13
        %s502 = smul.addr %s501, 8
        %s503 = scalar_lea.vmem %s0, %s502
        %p504 = scmp.lt.s32.totalorder %s27, 1
        %s505 = scalar_select %p504, %s27, 1
        %s506 = smul.addr %s505, 13
        %s507 = smul.addr %s506, 8
        %s508 = scalar_lea.vmem %s15, %s507
        %v509 = vld [vmem:[%s503] sm:$0xff]
        %v510 = vld [vmem:[%s503 + $0x8] sm:$0xff]
        %v511 = vld [vmem:[%s503 + $0x10] sm:$0xff]
        %v512 = vld [vmem:[%s503 + $0x18] sm:$0xff]
        %v513 = vld [vmem:[%s503 + $0x20] sm:$0xff]
        %v514 = vld [vmem:[%s503 + $0x28] sm:$0xff]
        %v515 = vld [vmem:[%s503 + $0x30] sm:$0xff]
        %v516 = vld [vmem:[%s503 + $0x38] sm:$0xff]
        %v517 = vld [vmem:[%s503 + $0x40] sm:$0xff]
        %v518 = vld [vmem:[%s503 + $0x48] sm:$0xff]
        %v519 = vld [vmem:[%s503 + $0x50] sm:$0xff]
        %v520 = vld [vmem:[%s503 + $0x58] sm:$0xff]
        %v521 = vld [vmem:[%s503 + $0x60] sm:$0x3]
        %v522 = vld [vmem:[%s4] sm:$0xf]
        %v523 = vld [vmem:[%s13] sm:$0xff]
        %v524 = vld [vmem:[%s13 + $0x8] sm:$0x3f]
        %s525 = scalar_lea.vmem %s13, 16
        %v526 = vld [vmem:[%s525] sm:$0xff]
        %v527 = vld [vmem:[%s525 + $0x8] sm:$0x3f]
        %v528 = vld [vmem:[%s1] sm:$0xff]
        %v529 = vld [vmem:[%s1 + $0x8] sm:$0xff]
        %v530 = vld [vmem:[%s1 + $0x10] sm:$0xff]
        %v531 = vld [vmem:[%s1 + $0x18] sm:$0xff]
        %v532 = vld [vmem:[%s1 + $0x20] sm:$0xff]
        %v533 = vld [vmem:[%s1 + $0x28] sm:$0xff]
        %v534 = vld [vmem:[%s1 + $0x30] sm:$0xff]
        %v535 = vld [vmem:[%s1 + $0x38] sm:$0xff]
        %v536 = vld [vmem:[%s1 + $0x40] sm:$0xff]
        %v537 = vld [vmem:[%s1 + $0x48] sm:$0xff]
        %v538 = vld [vmem:[%s1 + $0x50] sm:$0xff]
        %v539 = vld [vmem:[%s1 + $0x58] sm:$0xff]
        %v540 = vld [vmem:[%s1 + $0x60] sm:$0xff]
        %v541 = vld [vmem:[%s1 + $0x68] sm:$0xff]
        %v542 = vld [vmem:[%s1 + $0x70] sm:$0xff]
        %v543 = vld [vmem:[%s1 + $0x78] sm:$0xff]
        %v544 = vld [vmem:[%s1 + $0x80] sm:$0xff]
        %v545 = vld [vmem:[%s1 + $0x88] sm:$0xff]
        %v546 = vld [vmem:[%s1 + $0x90] sm:$0xff]
        %v547 = vld [vmem:[%s1 + $0x98] sm:$0xff]
        %v548 = vld [vmem:[%s1 + $0xa0] sm:$0xff]
        %v549 = vld [vmem:[%s1 + $0xa8] sm:$0xff]
        %v550 = vld [vmem:[%s1 + $0xb0] sm:$0xff]
        %v551 = vld [vmem:[%s1 + $0xb8] sm:$0xff]
        %v552 = vld [vmem:[%s1 + $0xc0] sm:$0xff]
        %v553 = vld [vmem:[%s1 + $0xc8] sm:$0xff]
        %v554 = vld [vmem:[%s1 + $0xd0] sm:$0xff]
        %v555 = vld [vmem:[%s1 + $0xd8] sm:$0xff]
        %v556 = vld [vmem:[%s1 + $0xe0] sm:$0xff]
        %v557 = vld [vmem:[%s1 + $0xe8] sm:$0xff]
        %v558 = vld [vmem:[%s1 + $0xf0] sm:$0xff]
        %v559 = vld [vmem:[%s1 + $0xf8] sm:$0xff]
        %v560 = vld [vmem:[%s1 + $0x100] sm:$0xff]
        %v561 = vld [vmem:[%s1 + $0x108] sm:$0xff]
        %v562 = vld [vmem:[%s1 + $0x110] sm:$0xff]
        %v563 = vld [vmem:[%s1 + $0x118] sm:$0xff]
        %v564 = vld [vmem:[%s1 + $0x120] sm:$0xff]
        %v565 = vld [vmem:[%s1 + $0x128] sm:$0xff]
        %v566 = vld [vmem:[%s1 + $0x130] sm:$0xff]
        %v567 = vld [vmem:[%s1 + $0x138] sm:$0xff]
        %v568 = vld [vmem:[%s1 + $0x140] sm:$0xff]
        %v569 = vld [vmem:[%s1 + $0x148] sm:$0xff]
        %v570 = vld [vmem:[%s1 + $0x150] sm:$0xff]
        %v571 = vld [vmem:[%s1 + $0x158] sm:$0xff]
        %v572 = vld [vmem:[%s1 + $0x160] sm:$0xff]
        %v573 = vld [vmem:[%s1 + $0x168] sm:$0xff]
        %v574 = vld [vmem:[%s1 + $0x170] sm:$0xff]
        %v575 = vld [vmem:[%s1 + $0x178] sm:$0xff]
        %v576 = vld [vmem:[%s2] sm:$0x7]
        %v578 = vperm.slane %v576, 0
        %v579 = vperm.slane %v576, 1
        %v580 = vperm.slane %v576, 2
        %584 = vmatpush.msra.mxu0 %v573
        %585 = vmatpush.msra.mxu0 %v570
        %586 = vmatpush.msra.mxu0 %v567
        %587 = vmatpush.msra.mxu0 %v564
        %588 = vmatpush.msra.mxu0 %v561
        %589 = vmatpush.msra.mxu0 %v558
        %590 = vmatpush.msra.mxu0 %v555
        %591 = vmatpush.msra.mxu0 %v552
        %592 = vmatpush.msra.mxu0 %v549
        %593 = vmatpush.msra.mxu0 %v546
        %594 = vmatpush.msra.mxu0 %v543
        %595 = vmatpush.msra.mxu0 %v540
        %596 = vmatpush.msra.mxu0 %v537
        %597 = vmatpush.msra.mxu0 %v534
        %598 = vmatpush.msra.mxu0 %v531
        %599 = vmatpush.msra.mxu0 %v528
        %600 = vmatmul.f32.gmra.mxu0 %v509
        %v601 = vpop.f32.mrf.mxu0
        %v602 = vadd.f32 %v578, %v601
        %603 = vmatmul.f32.gmra.mxu0 %v510
        %v604 = vpop.f32.mrf.mxu0
        %v605 = vadd.f32 %v578, %v604
        %606 = vmatmul.f32.gmra.mxu0 %v511
        %v607 = vpop.f32.mrf.mxu0
        %v608 = vadd.f32 %v578, %v607
        %609 = vmatmul.f32.gmra.mxu0 %v512
        %v610 = vpop.f32.mrf.mxu0
        %v611 = vadd.f32 %v578, %v610
        %612 = vmatmul.f32.gmra.mxu0 %v513
        %v613 = vpop.f32.mrf.mxu0
        %v614 = vadd.f32 %v578, %v613
        %615 = vmatmul.f32.gmra.mxu0 %v514
        %v616 = vpop.f32.mrf.mxu0
        %v617 = vadd.f32 %v578, %v616
        %618 = vmatmul.f32.gmra.mxu0 %v515
        %v619 = vpop.f32.mrf.mxu0
        %v620 = vadd.f32 %v578, %v619
        %621 = vmatmul.f32.gmra.mxu0 %v516
        %v622 = vpop.f32.mrf.mxu0
        %v623 = vadd.f32 %v578, %v622
        %624 = vmatmul.f32.gmra.mxu0 %v517
        %v625 = vpop.f32.mrf.mxu0
        %v626 = vadd.f32 %v578, %v625
        %627 = vmatmul.f32.gmra.mxu0 %v518
        %v628 = vpop.f32.mrf.mxu0
        %v629 = vadd.f32 %v578, %v628
        %630 = vmatmul.f32.gmra.mxu0 %v519
        %v631 = vpop.f32.mrf.mxu0
        %v632 = vadd.f32 %v578, %v631
        %633 = vmatmul.f32.gmra.mxu0 %v520
        %v634 = vpop.f32.mrf.mxu0
        %v635 = vadd.f32 %v578, %v634
        %636 = vmatmul.f32.gmra.mxu0 %v521
        %v637 = vpop.f32.mrf.mxu0
        %v638 = vadd.f32 %v578, %v637
        %639 = vdwg.mxu0
        %640 = vmatpush.msra.mxu0 %v574
        %641 = vmatpush.msra.mxu0 %v571
        %642 = vmatpush.msra.mxu0 %v568
        %643 = vmatpush.msra.mxu0 %v565
        %644 = vmatpush.msra.mxu0 %v562
        %645 = vmatpush.msra.mxu0 %v559
        %646 = vmatpush.msra.mxu0 %v556
        %647 = vmatpush.msra.mxu0 %v553
        %648 = vmatpush.msra.mxu0 %v550
        %649 = vmatpush.msra.mxu0 %v547
        %650 = vmatpush.msra.mxu0 %v544
        %651 = vmatpush.msra.mxu0 %v541
        %652 = vmatpush.msra.mxu0 %v538
        %653 = vmatpush.msra.mxu0 %v535
        %654 = vmatpush.msra.mxu0 %v532
        %655 = vmatpush.msra.mxu0 %v529
        %656 = vmatmul.f32.gmra.mxu0 %v509
        %v657 = vpop.f32.mrf.mxu0
        %v658 = vadd.f32 %v579, %v657
        %659 = vmatmul.f32.gmra.mxu0 %v510
        %v660 = vpop.f32.mrf.mxu0
        %v661 = vadd.f32 %v579, %v660
        %662 = vmatmul.f32.gmra.mxu0 %v511
        %v663 = vpop.f32.mrf.mxu0
        %v664 = vadd.f32 %v579, %v663
        %665 = vmatmul.f32.gmra.mxu0 %v512
        %v666 = vpop.f32.mrf.mxu0
        %v667 = vadd.f32 %v579, %v666
        %668 = vmatmul.f32.gmra.mxu0 %v513
        %v669 = vpop.f32.mrf.mxu0
        %v670 = vadd.f32 %v579, %v669
        %671 = vmatmul.f32.gmra.mxu0 %v514
        %v672 = vpop.f32.mrf.mxu0
        %v673 = vadd.f32 %v579, %v672
        %674 = vmatmul.f32.gmra.mxu0 %v515
        %v675 = vpop.f32.mrf.mxu0
        %v676 = vadd.f32 %v579, %v675
        %677 = vmatmul.f32.gmra.mxu0 %v516
        %v678 = vpop.f32.mrf.mxu0
        %v679 = vadd.f32 %v579, %v678
        %680 = vmatmul.f32.gmra.mxu0 %v517
        %v681 = vpop.f32.mrf.mxu0
        %v682 = vadd.f32 %v579, %v681
        %683 = vmatmul.f32.gmra.mxu0 %v518
        %v684 = vpop.f32.mrf.mxu0
        %v685 = vadd.f32 %v579, %v684
        %686 = vmatmul.f32.gmra.mxu0 %v519
        %v687 = vpop.f32.mrf.mxu0
        %v688 = vadd.f32 %v579, %v687
        %689 = vmatmul.f32.gmra.mxu0 %v520
        %v690 = vpop.f32.mrf.mxu0
        %v691 = vadd.f32 %v579, %v690
        %692 = vmatmul.f32.gmra.mxu0 %v521
        %v693 = vpop.f32.mrf.mxu0
        %v694 = vadd.f32 %v579, %v693
        %695 = vdwg.mxu0
        %696 = vmatpush.msra.mxu0 %v575
        %697 = vmatpush.msra.mxu0 %v572
        %698 = vmatpush.msra.mxu0 %v569
        %699 = vmatpush.msra.mxu0 %v566
        %700 = vmatpush.msra.mxu0 %v563
        %701 = vmatpush.msra.mxu0 %v560
        %702 = vmatpush.msra.mxu0 %v557
        %703 = vmatpush.msra.mxu0 %v554
        %704 = vmatpush.msra.mxu0 %v551
        %705 = vmatpush.msra.mxu0 %v548
        %706 = vmatpush.msra.mxu0 %v545
        %707 = vmatpush.msra.mxu0 %v542
        %708 = vmatpush.msra.mxu0 %v539
        %709 = vmatpush.msra.mxu0 %v536
        %710 = vmatpush.msra.mxu0 %v533
        %711 = vmatpush.msra.mxu0 %v530
        %712 = vmatmul.f32.gmra.mxu0 %v509
        %v713 = vpop.f32.mrf.mxu0
        %v714 = vadd.f32 %v580, %v713
        %715 = vmatmul.f32.gmra.mxu0 %v510
        %v716 = vpop.f32.mrf.mxu0
        %v717 = vadd.f32 %v580, %v716
        %718 = vmatmul.f32.gmra.mxu0 %v511
        %v719 = vpop.f32.mrf.mxu0
        %v720 = vadd.f32 %v580, %v719
        %721 = vmatmul.f32.gmra.mxu0 %v512
        %v722 = vpop.f32.mrf.mxu0
        %v723 = vadd.f32 %v580, %v722
        %724 = vmatmul.f32.gmra.mxu0 %v513
        %v725 = vpop.f32.mrf.mxu0
        %v726 = vadd.f32 %v580, %v725
        %727 = vmatmul.f32.gmra.mxu0 %v514
        %v728 = vpop.f32.mrf.mxu0
        %v729 = vadd.f32 %v580, %v728
        %730 = vmatmul.f32.gmra.mxu0 %v515
        %v731 = vpop.f32.mrf.mxu0
        %v732 = vadd.f32 %v580, %v731
        %733 = vmatmul.f32.gmra.mxu0 %v516
        %v734 = vpop.f32.mrf.mxu0
        %v735 = vadd.f32 %v580, %v734
        %736 = vmatmul.f32.gmra.mxu0 %v517
        %v737 = vpop.f32.mrf.mxu0
        %v738 = vadd.f32 %v580, %v737
        %739 = vmatmul.f32.gmra.mxu0 %v518
        %v740 = vpop.f32.mrf.mxu0
        %v741 = vadd.f32 %v580, %v740
        %742 = vmatmul.f32.gmra.mxu0 %v519
        %v743 = vpop.f32.mrf.mxu0
        %v744 = vadd.f32 %v580, %v743
        %745 = vmatmul.f32.gmra.mxu0 %v520
        %v746 = vpop.f32.mrf.mxu0
        %v747 = vadd.f32 %v580, %v746
        %748 = vmatmul.f32.gmra.mxu0 %v521
        %v749 = vpop.f32.mrf.mxu0
        %v750 = vadd.f32 %v580, %v749
        %751 = vdwg.mxu0
        %v752 = vand.u32 2147483647, %v602
        %v753 = vand.u32 2147483647, %v658
        %v754 = vand.u32 2147483647, %v714
        %v755 = vand.u32 2147483647, %v605
        %v756 = vand.u32 2147483647, %v661
        %v757 = vand.u32 2147483647, %v717
        %v758 = vand.u32 2147483647, %v608
        %v759 = vand.u32 2147483647, %v664
        %v760 = vand.u32 2147483647, %v720
        %v761 = vand.u32 2147483647, %v611
        %v762 = vand.u32 2147483647, %v667
        %v763 = vand.u32 2147483647, %v723
        %v764 = vand.u32 2147483647, %v614
        %v765 = vand.u32 2147483647, %v670
        %v766 = vand.u32 2147483647, %v726
        %v767 = vand.u32 2147483647, %v617
        %v768 = vand.u32 2147483647, %v673
        %v769 = vand.u32 2147483647, %v729
        %v770 = vand.u32 2147483647, %v620
        %v771 = vand.u32 2147483647, %v676
        %v772 = vand.u32 2147483647, %v732
        %v773 = vand.u32 2147483647, %v623
        %v774 = vand.u32 2147483647, %v679
        %v775 = vand.u32 2147483647, %v735
        %v776 = vand.u32 2147483647, %v626
        %v777 = vand.u32 2147483647, %v682
        %v778 = vand.u32 2147483647, %v738
        %v779 = vand.u32 2147483647, %v629
        %v780 = vand.u32 2147483647, %v685
        %v781 = vand.u32 2147483647, %v741
        %v782 = vand.u32 2147483647, %v632
        %v783 = vand.u32 2147483647, %v688
        %v784 = vand.u32 2147483647, %v744
        %v785 = vand.u32 2147483647, %v635
        %v786 = vand.u32 2147483647, %v691
        %v787 = vand.u32 2147483647, %v747
        %v788 = vand.u32 2147483647, %v638
        %v789 = vand.u32 2147483647, %v694
        %v790 = vand.u32 2147483647, %v750
        %v791 = vmul.f32 %v752, 0.70710677
        %v792 = vmul.f32 %v753, 0.70710677
        %v793 = vmul.f32 %v754, 0.70710677
        %v794 = vmul.f32 %v755, 0.70710677
        %v795 = vmul.f32 %v756, 0.70710677
        %v796 = vmul.f32 %v757, 0.70710677
        %v797 = vmul.f32 %v758, 0.70710677
        %v798 = vmul.f32 %v759, 0.70710677
        %v799 = vmul.f32 %v760, 0.70710677
        %v800 = vmul.f32 %v761, 0.70710677
        %v801 = vmul.f32 %v762, 0.70710677
        %v802 = vmul.f32 %v763, 0.70710677
        %v803 = vmul.f32 %v764, 0.70710677
        %v804 = vmul.f32 %v765, 0.70710677
        %v805 = vmul.f32 %v766, 0.70710677
        %v806 = vmul.f32 %v767, 0.70710677
        %v807 = vmul.f32 %v768, 0.70710677
        %v808 = vmul.f32 %v769, 0.70710677
        %v809 = vmul.f32 %v770, 0.70710677
        %v810 = vmul.f32 %v771, 0.70710677
        %v811 = vmul.f32 %v772, 0.70710677
        %v812 = vmul.f32 %v773, 0.70710677
        %v813 = vmul.f32 %v774, 0.70710677
        %v814 = vmul.f32 %v775, 0.70710677
        %v815 = vmul.f32 %v776, 0.70710677
        %v816 = vmul.f32 %v777, 0.70710677
        %v817 = vmul.f32 %v778, 0.70710677
        %v818 = vmul.f32 %v779, 0.70710677
        %v819 = vmul.f32 %v780, 0.70710677
        %v820 = vmul.f32 %v781, 0.70710677
        %v821 = vmul.f32 %v782, 0.70710677
        %v822 = vmul.f32 %v783, 0.70710677
        %v823 = vmul.f32 %v784, 0.70710677
        %v824 = vmul.f32 %v785, 0.70710677
        %v825 = vmul.f32 %v786, 0.70710677
        %v826 = vmul.f32 %v787, 0.70710677
        %v827 = vmul.f32 %v788, 0.70710677
        %v828 = vmul.f32 %v789, 0.70710677
        %v829 = vmul.f32 %v790, 0.70710677
        %v830 = vmul.f32 %v791, 0.5
        %v831 = vmul.f32 %v792, 0.5
        %v832 = vmul.f32 %v793, 0.5
        %v833 = vmul.f32 %v794, 0.5
        %v834 = vmul.f32 %v795, 0.5
        %v835 = vmul.f32 %v796, 0.5
        %v836 = vmul.f32 %v797, 0.5
        %v837 = vmul.f32 %v798, 0.5
        %v838 = vmul.f32 %v799, 0.5
        %v839 = vmul.f32 %v800, 0.5
        %v840 = vmul.f32 %v801, 0.5
        %v841 = vmul.f32 %v802, 0.5
        %v842 = vmul.f32 %v803, 0.5
        %v843 = vmul.f32 %v804, 0.5
        %v844 = vmul.f32 %v805, 0.5
        %v845 = vmul.f32 %v806, 0.5
        %v846 = vmul.f32 %v807, 0.5
        %v847 = vmul.f32 %v808, 0.5
        %v848 = vmul.f32 %v809, 0.5
        %v849 = vmul.f32 %v810, 0.5
        %v850 = vmul.f32 %v811, 0.5
        %v851 = vmul.f32 %v812, 0.5
        %v852 = vmul.f32 %v813, 0.5
        %v853 = vmul.f32 %v814, 0.5
        %v854 = vmul.f32 %v815, 0.5
        %v855 = vmul.f32 %v816, 0.5
        %v856 = vmul.f32 %v817, 0.5
        %v857 = vmul.f32 %v818, 0.5
        %v858 = vmul.f32 %v819, 0.5
        %v859 = vmul.f32 %v820, 0.5
        %v860 = vmul.f32 %v821, 0.5
        %v861 = vmul.f32 %v822, 0.5
        %v862 = vmul.f32 %v823, 0.5
        %v863 = vmul.f32 %v824, 0.5
        %v864 = vmul.f32 %v825, 0.5
        %v865 = vmul.f32 %v826, 0.5
        %v866 = vmul.f32 %v827, 0.5
        %v867 = vmul.f32 %v828, 0.5
        %v868 = vmul.f32 %v829, 0.5
        %v869 = vadd.f32 %v830, 1.0
        %v870 = vadd.f32 %v831, 1.0
        %v871 = vadd.f32 %v832, 1.0
        %v872 = vadd.f32 %v833, 1.0
        %v873 = vadd.f32 %v834, 1.0
        %v874 = vadd.f32 %v835, 1.0
        %v875 = vadd.f32 %v836, 1.0
        %v876 = vadd.f32 %v837, 1.0
        %v877 = vadd.f32 %v838, 1.0
        %v878 = vadd.f32 %v839, 1.0
        %v879 = vadd.f32 %v840, 1.0
        %v880 = vadd.f32 %v841, 1.0
        %v881 = vadd.f32 %v842, 1.0
        %v882 = vadd.f32 %v843, 1.0
        %v883 = vadd.f32 %v844, 1.0
        %v884 = vadd.f32 %v845, 1.0
        %v885 = vadd.f32 %v846, 1.0
        %v886 = vadd.f32 %v847, 1.0
        %v887 = vadd.f32 %v848, 1.0
        %v888 = vadd.f32 %v849, 1.0
        %v889 = vadd.f32 %v850, 1.0
        %v890 = vadd.f32 %v851, 1.0
        %v891 = vadd.f32 %v852, 1.0
        %v892 = vadd.f32 %v853, 1.0
        %v893 = vadd.f32 %v854, 1.0
        %v894 = vadd.f32 %v855, 1.0
        %v895 = vadd.f32 %v856, 1.0
        %v896 = vadd.f32 %v857, 1.0
        %v897 = vadd.f32 %v858, 1.0
        %v898 = vadd.f32 %v859, 1.0
        %v899 = vadd.f32 %v860, 1.0
        %v900 = vadd.f32 %v861, 1.0
        %v901 = vadd.f32 %v862, 1.0
        %v902 = vadd.f32 %v863, 1.0
        %v903 = vadd.f32 %v864, 1.0
        %v904 = vadd.f32 %v865, 1.0
        %v905 = vadd.f32 %v866, 1.0
        %v906 = vadd.f32 %v867, 1.0
        %v907 = vadd.f32 %v868, 1.0
        %v908 = vrcp.pop %v869
        %v909 = vmul.f32 %v869, %v908
        %v910 = vsub.f32 1.0, %v909
        %v911 = vmul.f32 %v908, %v910
        %v912 = vadd.f32 %v908, %v911
        %vm913 = vweird.f32 %v869
        %vm914 = vweird.f32 %v908
        %vm915 = vmor %vm913, %vm914
        %v916 = vsel %vm915, %v908, %v912
        %v917 = vand.u32 2147483647, %v869
        %vm918 = vcmp.eq.f32.partialorder %v917, 8.507059e+37
        %v919 = vand.u32 %v869, 2147483648
        %v920 = vor.u32 1.1754944e-38, %v919
        %v921 = vsel %vm918, %v920, %v916
        %v922 = vmul.f32 1.0, %v921
        %v923 = vrcp.pop %v870
        %v924 = vmul.f32 %v870, %v923
        %v925 = vsub.f32 1.0, %v924
        %v926 = vmul.f32 %v923, %v925
        %v927 = vadd.f32 %v923, %v926
        %vm928 = vweird.f32 %v870
        %vm929 = vweird.f32 %v923
        %vm930 = vmor %vm928, %vm929
        %v931 = vsel %vm930, %v923, %v927
        %v932 = vand.u32 2147483647, %v870
        %vm933 = vcmp.eq.f32.partialorder %v932, 8.507059e+37
        %v934 = vand.u32 %v870, 2147483648
        %v935 = vor.u32 1.1754944e-38, %v934
        %v936 = vsel %vm933, %v935, %v931
        %v937 = vmul.f32 1.0, %v936
        %v938 = vrcp.pop %v871
        %v939 = vmul.f32 %v871, %v938
        %v940 = vsub.f32 1.0, %v939
        %v941 = vmul.f32 %v938, %v940
        %v942 = vadd.f32 %v938, %v941
        %vm943 = vweird.f32 %v871
        %vm944 = vweird.f32 %v938
        %vm945 = vmor %vm943, %vm944
        %v946 = vsel %vm945, %v938, %v942
        %v947 = vand.u32 2147483647, %v871
        %vm948 = vcmp.eq.f32.partialorder %v947, 8.507059e+37
        %v949 = vand.u32 %v871, 2147483648
        %v950 = vor.u32 1.1754944e-38, %v949
        %v951 = vsel %vm948, %v950, %v946
        %v952 = vmul.f32 1.0, %v951
        %v953 = vrcp.pop %v872
        %v954 = vmul.f32 %v872, %v953
        %v955 = vsub.f32 1.0, %v954
        %v956 = vmul.f32 %v953, %v955
        %v957 = vadd.f32 %v953, %v956
        %vm958 = vweird.f32 %v872
        %vm959 = vweird.f32 %v953
        %vm960 = vmor %vm958, %vm959
        %v961 = vsel %vm960, %v953, %v957
        %v962 = vand.u32 2147483647, %v872
        %vm963 = vcmp.eq.f32.partialorder %v962, 8.507059e+37
        %v964 = vand.u32 %v872, 2147483648
        %v965 = vor.u32 1.1754944e-38, %v964
        %v966 = vsel %vm963, %v965, %v961
        %v967 = vmul.f32 1.0, %v966
        %v968 = vrcp.pop %v873
        %v969 = vmul.f32 %v873, %v968
        %v970 = vsub.f32 1.0, %v969
        %v971 = vmul.f32 %v968, %v970
        %v972 = vadd.f32 %v968, %v971
        %vm973 = vweird.f32 %v873
        %vm974 = vweird.f32 %v968
        %vm975 = vmor %vm973, %vm974
        %v976 = vsel %vm975, %v968, %v972
        %v977 = vand.u32 2147483647, %v873
        %vm978 = vcmp.eq.f32.partialorder %v977, 8.507059e+37
        %v979 = vand.u32 %v873, 2147483648
        %v980 = vor.u32 1.1754944e-38, %v979
        %v981 = vsel %vm978, %v980, %v976
        %v982 = vmul.f32 1.0, %v981
        %v983 = vrcp.pop %v874
        %v984 = vmul.f32 %v874, %v983
        %v985 = vsub.f32 1.0, %v984
        %v986 = vmul.f32 %v983, %v985
        %v987 = vadd.f32 %v983, %v986
        %vm988 = vweird.f32 %v874
        %vm989 = vweird.f32 %v983
        %vm990 = vmor %vm988, %vm989
        %v991 = vsel %vm990, %v983, %v987
        %v992 = vand.u32 2147483647, %v874
        %vm993 = vcmp.eq.f32.partialorder %v992, 8.507059e+37
        %v994 = vand.u32 %v874, 2147483648
        %v995 = vor.u32 1.1754944e-38, %v994
        %v996 = vsel %vm993, %v995, %v991
        %v997 = vmul.f32 1.0, %v996
        %v998 = vrcp.pop %v875
        %v999 = vmul.f32 %v875, %v998
        %v1000 = vsub.f32 1.0, %v999
        %v1001 = vmul.f32 %v998, %v1000
        %v1002 = vadd.f32 %v998, %v1001
        %vm1003 = vweird.f32 %v875
        %vm1004 = vweird.f32 %v998
        %vm1005 = vmor %vm1003, %vm1004
        %v1006 = vsel %vm1005, %v998, %v1002
        %v1007 = vand.u32 2147483647, %v875
        %vm1008 = vcmp.eq.f32.partialorder %v1007, 8.507059e+37
        %v1009 = vand.u32 %v875, 2147483648
        %v1010 = vor.u32 1.1754944e-38, %v1009
        %v1011 = vsel %vm1008, %v1010, %v1006
        %v1012 = vmul.f32 1.0, %v1011
        %v1013 = vrcp.pop %v876
        %v1014 = vmul.f32 %v876, %v1013
        %v1015 = vsub.f32 1.0, %v1014
        %v1016 = vmul.f32 %v1013, %v1015
        %v1017 = vadd.f32 %v1013, %v1016
        %vm1018 = vweird.f32 %v876
        %vm1019 = vweird.f32 %v1013
        %vm1020 = vmor %vm1018, %vm1019
        %v1021 = vsel %vm1020, %v1013, %v1017
        %v1022 = vand.u32 2147483647, %v876
        %vm1023 = vcmp.eq.f32.partialorder %v1022, 8.507059e+37
        %v1024 = vand.u32 %v876, 2147483648
        %v1025 = vor.u32 1.1754944e-38, %v1024
        %v1026 = vsel %vm1023, %v1025, %v1021
        %v1027 = vmul.f32 1.0, %v1026
        %v1028 = vrcp.pop %v877
        %v1029 = vmul.f32 %v877, %v1028
        %v1030 = vsub.f32 1.0, %v1029
        %v1031 = vmul.f32 %v1028, %v1030
        %v1032 = vadd.f32 %v1028, %v1031
        %vm1033 = vweird.f32 %v877
        %vm1034 = vweird.f32 %v1028
        %vm1035 = vmor %vm1033, %vm1034
        %v1036 = vsel %vm1035, %v1028, %v1032
        %v1037 = vand.u32 2147483647, %v877
        %vm1038 = vcmp.eq.f32.partialorder %v1037, 8.507059e+37
        %v1039 = vand.u32 %v877, 2147483648
        %v1040 = vor.u32 1.1754944e-38, %v1039
        %v1041 = vsel %vm1038, %v1040, %v1036
        %v1042 = vmul.f32 1.0, %v1041
        %v1043 = vrcp.pop %v878
        %v1044 = vmul.f32 %v878, %v1043
        %v1045 = vsub.f32 1.0, %v1044
        %v1046 = vmul.f32 %v1043, %v1045
        %v1047 = vadd.f32 %v1043, %v1046
        %vm1048 = vweird.f32 %v878
        %vm1049 = vweird.f32 %v1043
        %vm1050 = vmor %vm1048, %vm1049
        %v1051 = vsel %vm1050, %v1043, %v1047
        %v1052 = vand.u32 2147483647, %v878
        %vm1053 = vcmp.eq.f32.partialorder %v1052, 8.507059e+37
        %v1054 = vand.u32 %v878, 2147483648
        %v1055 = vor.u32 1.1754944e-38, %v1054
        %v1056 = vsel %vm1053, %v1055, %v1051
        %v1057 = vmul.f32 1.0, %v1056
        %v1058 = vrcp.pop %v879
        %v1059 = vmul.f32 %v879, %v1058
        %v1060 = vsub.f32 1.0, %v1059
        %v1061 = vmul.f32 %v1058, %v1060
        %v1062 = vadd.f32 %v1058, %v1061
        %vm1063 = vweird.f32 %v879
        %vm1064 = vweird.f32 %v1058
        %vm1065 = vmor %vm1063, %vm1064
        %v1066 = vsel %vm1065, %v1058, %v1062
        %v1067 = vand.u32 2147483647, %v879
        %vm1068 = vcmp.eq.f32.partialorder %v1067, 8.507059e+37
        %v1069 = vand.u32 %v879, 2147483648
        %v1070 = vor.u32 1.1754944e-38, %v1069
        %v1071 = vsel %vm1068, %v1070, %v1066
        %v1072 = vmul.f32 1.0, %v1071
        %v1073 = vrcp.pop %v880
        %v1074 = vmul.f32 %v880, %v1073
        %v1075 = vsub.f32 1.0, %v1074
        %v1076 = vmul.f32 %v1073, %v1075
        %v1077 = vadd.f32 %v1073, %v1076
        %vm1078 = vweird.f32 %v880
        %vm1079 = vweird.f32 %v1073
        %vm1080 = vmor %vm1078, %vm1079
        %v1081 = vsel %vm1080, %v1073, %v1077
        %v1082 = vand.u32 2147483647, %v880
        %vm1083 = vcmp.eq.f32.partialorder %v1082, 8.507059e+37
        %v1084 = vand.u32 %v880, 2147483648
        %v1085 = vor.u32 1.1754944e-38, %v1084
        %v1086 = vsel %vm1083, %v1085, %v1081
        %v1087 = vmul.f32 1.0, %v1086
        %v1088 = vrcp.pop %v881
        %v1089 = vmul.f32 %v881, %v1088
        %v1090 = vsub.f32 1.0, %v1089
        %v1091 = vmul.f32 %v1088, %v1090
        %v1092 = vadd.f32 %v1088, %v1091
        %vm1093 = vweird.f32 %v881
        %vm1094 = vweird.f32 %v1088
        %vm1095 = vmor %vm1093, %vm1094
        %v1096 = vsel %vm1095, %v1088, %v1092
        %v1097 = vand.u32 2147483647, %v881
        %vm1098 = vcmp.eq.f32.partialorder %v1097, 8.507059e+37
        %v1099 = vand.u32 %v881, 2147483648
        %v1100 = vor.u32 1.1754944e-38, %v1099
        %v1101 = vsel %vm1098, %v1100, %v1096
        %v1102 = vmul.f32 1.0, %v1101
        %v1103 = vrcp.pop %v882
        %v1104 = vmul.f32 %v882, %v1103
        %v1105 = vsub.f32 1.0, %v1104
        %v1106 = vmul.f32 %v1103, %v1105
        %v1107 = vadd.f32 %v1103, %v1106
        %vm1108 = vweird.f32 %v882
        %vm1109 = vweird.f32 %v1103
        %vm1110 = vmor %vm1108, %vm1109
        %v1111 = vsel %vm1110, %v1103, %v1107
        %v1112 = vand.u32 2147483647, %v882
        %vm1113 = vcmp.eq.f32.partialorder %v1112, 8.507059e+37
        %v1114 = vand.u32 %v882, 2147483648
        %v1115 = vor.u32 1.1754944e-38, %v1114
        %v1116 = vsel %vm1113, %v1115, %v1111
        %v1117 = vmul.f32 1.0, %v1116
        %v1118 = vrcp.pop %v883
        %v1119 = vmul.f32 %v883, %v1118
        %v1120 = vsub.f32 1.0, %v1119
        %v1121 = vmul.f32 %v1118, %v1120
        %v1122 = vadd.f32 %v1118, %v1121
        %vm1123 = vweird.f32 %v883
        %vm1124 = vweird.f32 %v1118
        %vm1125 = vmor %vm1123, %vm1124
        %v1126 = vsel %vm1125, %v1118, %v1122
        %v1127 = vand.u32 2147483647, %v883
        %vm1128 = vcmp.eq.f32.partialorder %v1127, 8.507059e+37
        %v1129 = vand.u32 %v883, 2147483648
        %v1130 = vor.u32 1.1754944e-38, %v1129
        %v1131 = vsel %vm1128, %v1130, %v1126
        %v1132 = vmul.f32 1.0, %v1131
        %v1133 = vrcp.pop %v884
        %v1134 = vmul.f32 %v884, %v1133
        %v1135 = vsub.f32 1.0, %v1134
        %v1136 = vmul.f32 %v1133, %v1135
        %v1137 = vadd.f32 %v1133, %v1136
        %vm1138 = vweird.f32 %v884
        %vm1139 = vweird.f32 %v1133
        %vm1140 = vmor %vm1138, %vm1139
        %v1141 = vsel %vm1140, %v1133, %v1137
        %v1142 = vand.u32 2147483647, %v884
        %vm1143 = vcmp.eq.f32.partialorder %v1142, 8.507059e+37
        %v1144 = vand.u32 %v884, 2147483648
        %v1145 = vor.u32 1.1754944e-38, %v1144
        %v1146 = vsel %vm1143, %v1145, %v1141
        %v1147 = vmul.f32 1.0, %v1146
        %v1148 = vrcp.pop %v885
        %v1149 = vmul.f32 %v885, %v1148
        %v1150 = vsub.f32 1.0, %v1149
        %v1151 = vmul.f32 %v1148, %v1150
        %v1152 = vadd.f32 %v1148, %v1151
        %vm1153 = vweird.f32 %v885
        %vm1154 = vweird.f32 %v1148
        %vm1155 = vmor %vm1153, %vm1154
        %v1156 = vsel %vm1155, %v1148, %v1152
        %v1157 = vand.u32 2147483647, %v885
        %vm1158 = vcmp.eq.f32.partialorder %v1157, 8.507059e+37
        %v1159 = vand.u32 %v885, 2147483648
        %v1160 = vor.u32 1.1754944e-38, %v1159
        %v1161 = vsel %vm1158, %v1160, %v1156
        %v1162 = vmul.f32 1.0, %v1161
        %v1163 = vrcp.pop %v886
        %v1164 = vmul.f32 %v886, %v1163
        %v1165 = vsub.f32 1.0, %v1164
        %v1166 = vmul.f32 %v1163, %v1165
        %v1167 = vadd.f32 %v1163, %v1166
        %vm1168 = vweird.f32 %v886
        %vm1169 = vweird.f32 %v1163
        %vm1170 = vmor %vm1168, %vm1169
        %v1171 = vsel %vm1170, %v1163, %v1167
        %v1172 = vand.u32 2147483647, %v886
        %vm1173 = vcmp.eq.f32.partialorder %v1172, 8.507059e+37
        %v1174 = vand.u32 %v886, 2147483648
        %v1175 = vor.u32 1.1754944e-38, %v1174
        %v1176 = vsel %vm1173, %v1175, %v1171
        %v1177 = vmul.f32 1.0, %v1176
        %v1178 = vrcp.pop %v887
        %v1179 = vmul.f32 %v887, %v1178
        %v1180 = vsub.f32 1.0, %v1179
        %v1181 = vmul.f32 %v1178, %v1180
        %v1182 = vadd.f32 %v1178, %v1181
        %vm1183 = vweird.f32 %v887
        %vm1184 = vweird.f32 %v1178
        %vm1185 = vmor %vm1183, %vm1184
        %v1186 = vsel %vm1185, %v1178, %v1182
        %v1187 = vand.u32 2147483647, %v887
        %vm1188 = vcmp.eq.f32.partialorder %v1187, 8.507059e+37
        %v1189 = vand.u32 %v887, 2147483648
        %v1190 = vor.u32 1.1754944e-38, %v1189
        %v1191 = vsel %vm1188, %v1190, %v1186
        %v1192 = vmul.f32 1.0, %v1191
        %v1193 = vrcp.pop %v888
        %v1194 = vmul.f32 %v888, %v1193
        %v1195 = vsub.f32 1.0, %v1194
        %v1196 = vmul.f32 %v1193, %v1195
        %v1197 = vadd.f32 %v1193, %v1196
        %vm1198 = vweird.f32 %v888
        %vm1199 = vweird.f32 %v1193
        %vm1200 = vmor %vm1198, %vm1199
        %v1201 = vsel %vm1200, %v1193, %v1197
        %v1202 = vand.u32 2147483647, %v888
        %vm1203 = vcmp.eq.f32.partialorder %v1202, 8.507059e+37
        %v1204 = vand.u32 %v888, 2147483648
        %v1205 = vor.u32 1.1754944e-38, %v1204
        %v1206 = vsel %vm1203, %v1205, %v1201
        %v1207 = vmul.f32 1.0, %v1206
        %v1208 = vrcp.pop %v889
        %v1209 = vmul.f32 %v889, %v1208
        %v1210 = vsub.f32 1.0, %v1209
        %v1211 = vmul.f32 %v1208, %v1210
        %v1212 = vadd.f32 %v1208, %v1211
        %vm1213 = vweird.f32 %v889
        %vm1214 = vweird.f32 %v1208
        %vm1215 = vmor %vm1213, %vm1214
        %v1216 = vsel %vm1215, %v1208, %v1212
        %v1217 = vand.u32 2147483647, %v889
        %vm1218 = vcmp.eq.f32.partialorder %v1217, 8.507059e+37
        %v1219 = vand.u32 %v889, 2147483648
        %v1220 = vor.u32 1.1754944e-38, %v1219
        %v1221 = vsel %vm1218, %v1220, %v1216
        %v1222 = vmul.f32 1.0, %v1221
        %v1223 = vrcp.pop %v890
        %v1224 = vmul.f32 %v890, %v1223
        %v1225 = vsub.f32 1.0, %v1224
        %v1226 = vmul.f32 %v1223, %v1225
        %v1227 = vadd.f32 %v1223, %v1226
        %vm1228 = vweird.f32 %v890
        %vm1229 = vweird.f32 %v1223
        %vm1230 = vmor %vm1228, %vm1229
        %v1231 = vsel %vm1230, %v1223, %v1227
        %v1232 = vand.u32 2147483647, %v890
        %vm1233 = vcmp.eq.f32.partialorder %v1232, 8.507059e+37
        %v1234 = vand.u32 %v890, 2147483648
        %v1235 = vor.u32 1.1754944e-38, %v1234
        %v1236 = vsel %vm1233, %v1235, %v1231
        %v1237 = vmul.f32 1.0, %v1236
        %v1238 = vrcp.pop %v891
        %v1239 = vmul.f32 %v891, %v1238
        %v1240 = vsub.f32 1.0, %v1239
        %v1241 = vmul.f32 %v1238, %v1240
        %v1242 = vadd.f32 %v1238, %v1241
        %vm1243 = vweird.f32 %v891
        %vm1244 = vweird.f32 %v1238
        %vm1245 = vmor %vm1243, %vm1244
        %v1246 = vsel %vm1245, %v1238, %v1242
        %v1247 = vand.u32 2147483647, %v891
        %vm1248 = vcmp.eq.f32.partialorder %v1247, 8.507059e+37
        %v1249 = vand.u32 %v891, 2147483648
        %v1250 = vor.u32 1.1754944e-38, %v1249
        %v1251 = vsel %vm1248, %v1250, %v1246
        %v1252 = vmul.f32 1.0, %v1251
        %v1253 = vrcp.pop %v892
        %v1254 = vmul.f32 %v892, %v1253
        %v1255 = vsub.f32 1.0, %v1254
        %v1256 = vmul.f32 %v1253, %v1255
        %v1257 = vadd.f32 %v1253, %v1256
        %vm1258 = vweird.f32 %v892
        %vm1259 = vweird.f32 %v1253
        %vm1260 = vmor %vm1258, %vm1259
        %v1261 = vsel %vm1260, %v1253, %v1257
        %v1262 = vand.u32 2147483647, %v892
        %vm1263 = vcmp.eq.f32.partialorder %v1262, 8.507059e+37
        %v1264 = vand.u32 %v892, 2147483648
        %v1265 = vor.u32 1.1754944e-38, %v1264
        %v1266 = vsel %vm1263, %v1265, %v1261
        %v1267 = vmul.f32 1.0, %v1266
        %v1268 = vrcp.pop %v893
        %v1269 = vmul.f32 %v893, %v1268
        %v1270 = vsub.f32 1.0, %v1269
        %v1271 = vmul.f32 %v1268, %v1270
        %v1272 = vadd.f32 %v1268, %v1271
        %vm1273 = vweird.f32 %v893
        %vm1274 = vweird.f32 %v1268
        %vm1275 = vmor %vm1273, %vm1274
        %v1276 = vsel %vm1275, %v1268, %v1272
        %v1277 = vand.u32 2147483647, %v893
        %vm1278 = vcmp.eq.f32.partialorder %v1277, 8.507059e+37
        %v1279 = vand.u32 %v893, 2147483648
        %v1280 = vor.u32 1.1754944e-38, %v1279
        %v1281 = vsel %vm1278, %v1280, %v1276
        %v1282 = vmul.f32 1.0, %v1281
        %v1283 = vrcp.pop %v894
        %v1284 = vmul.f32 %v894, %v1283
        %v1285 = vsub.f32 1.0, %v1284
        %v1286 = vmul.f32 %v1283, %v1285
        %v1287 = vadd.f32 %v1283, %v1286
        %vm1288 = vweird.f32 %v894
        %vm1289 = vweird.f32 %v1283
        %vm1290 = vmor %vm1288, %vm1289
        %v1291 = vsel %vm1290, %v1283, %v1287
        %v1292 = vand.u32 2147483647, %v894
        %vm1293 = vcmp.eq.f32.partialorder %v1292, 8.507059e+37
        %v1294 = vand.u32 %v894, 2147483648
        %v1295 = vor.u32 1.1754944e-38, %v1294
        %v1296 = vsel %vm1293, %v1295, %v1291
        %v1297 = vmul.f32 1.0, %v1296
        %v1298 = vrcp.pop %v895
        %v1299 = vmul.f32 %v895, %v1298
        %v1300 = vsub.f32 1.0, %v1299
        %v1301 = vmul.f32 %v1298, %v1300
        %v1302 = vadd.f32 %v1298, %v1301
        %vm1303 = vweird.f32 %v895
        %vm1304 = vweird.f32 %v1298
        %vm1305 = vmor %vm1303, %vm1304
        %v1306 = vsel %vm1305, %v1298, %v1302
        %v1307 = vand.u32 2147483647, %v895
        %vm1308 = vcmp.eq.f32.partialorder %v1307, 8.507059e+37
        %v1309 = vand.u32 %v895, 2147483648
        %v1310 = vor.u32 1.1754944e-38, %v1309
        %v1311 = vsel %vm1308, %v1310, %v1306
        %v1312 = vmul.f32 1.0, %v1311
        %v1313 = vrcp.pop %v896
        %v1314 = vmul.f32 %v896, %v1313
        %v1315 = vsub.f32 1.0, %v1314
        %v1316 = vmul.f32 %v1313, %v1315
        %v1317 = vadd.f32 %v1313, %v1316
        %vm1318 = vweird.f32 %v896
        %vm1319 = vweird.f32 %v1313
        %vm1320 = vmor %vm1318, %vm1319
        %v1321 = vsel %vm1320, %v1313, %v1317
        %v1322 = vand.u32 2147483647, %v896
        %vm1323 = vcmp.eq.f32.partialorder %v1322, 8.507059e+37
        %v1324 = vand.u32 %v896, 2147483648
        %v1325 = vor.u32 1.1754944e-38, %v1324
        %v1326 = vsel %vm1323, %v1325, %v1321
        %v1327 = vmul.f32 1.0, %v1326
        %v1328 = vrcp.pop %v897
        %v1329 = vmul.f32 %v897, %v1328
        %v1330 = vsub.f32 1.0, %v1329
        %v1331 = vmul.f32 %v1328, %v1330
        %v1332 = vadd.f32 %v1328, %v1331
        %vm1333 = vweird.f32 %v897
        %vm1334 = vweird.f32 %v1328
        %vm1335 = vmor %vm1333, %vm1334
        %v1336 = vsel %vm1335, %v1328, %v1332
        %v1337 = vand.u32 2147483647, %v897
        %vm1338 = vcmp.eq.f32.partialorder %v1337, 8.507059e+37
        %v1339 = vand.u32 %v897, 2147483648
        %v1340 = vor.u32 1.1754944e-38, %v1339
        %v1341 = vsel %vm1338, %v1340, %v1336
        %v1342 = vmul.f32 1.0, %v1341
        %v1343 = vrcp.pop %v898
        %v1344 = vmul.f32 %v898, %v1343
        %v1345 = vsub.f32 1.0, %v1344
        %v1346 = vmul.f32 %v1343, %v1345
        %v1347 = vadd.f32 %v1343, %v1346
        %vm1348 = vweird.f32 %v898
        %vm1349 = vweird.f32 %v1343
        %vm1350 = vmor %vm1348, %vm1349
        %v1351 = vsel %vm1350, %v1343, %v1347
        %v1352 = vand.u32 2147483647, %v898
        %vm1353 = vcmp.eq.f32.partialorder %v1352, 8.507059e+37
        %v1354 = vand.u32 %v898, 2147483648
        %v1355 = vor.u32 1.1754944e-38, %v1354
        %v1356 = vsel %vm1353, %v1355, %v1351
        %v1357 = vmul.f32 1.0, %v1356
        %v1358 = vrcp.pop %v899
        %v1359 = vmul.f32 %v899, %v1358
        %v1360 = vsub.f32 1.0, %v1359
        %v1361 = vmul.f32 %v1358, %v1360
        %v1362 = vadd.f32 %v1358, %v1361
        %vm1363 = vweird.f32 %v899
        %vm1364 = vweird.f32 %v1358
        %vm1365 = vmor %vm1363, %vm1364
        %v1366 = vsel %vm1365, %v1358, %v1362
        %v1367 = vand.u32 2147483647, %v899
        %vm1368 = vcmp.eq.f32.partialorder %v1367, 8.507059e+37
        %v1369 = vand.u32 %v899, 2147483648
        %v1370 = vor.u32 1.1754944e-38, %v1369
        %v1371 = vsel %vm1368, %v1370, %v1366
        %v1372 = vmul.f32 1.0, %v1371
        %v1373 = vrcp.pop %v900
        %v1374 = vmul.f32 %v900, %v1373
        %v1375 = vsub.f32 1.0, %v1374
        %v1376 = vmul.f32 %v1373, %v1375
        %v1377 = vadd.f32 %v1373, %v1376
        %vm1378 = vweird.f32 %v900
        %vm1379 = vweird.f32 %v1373
        %vm1380 = vmor %vm1378, %vm1379
        %v1381 = vsel %vm1380, %v1373, %v1377
        %v1382 = vand.u32 2147483647, %v900
        %vm1383 = vcmp.eq.f32.partialorder %v1382, 8.507059e+37
        %v1384 = vand.u32 %v900, 2147483648
        %v1385 = vor.u32 1.1754944e-38, %v1384
        %v1386 = vsel %vm1383, %v1385, %v1381
        %v1387 = vmul.f32 1.0, %v1386
        %v1388 = vrcp.pop %v901
        %v1389 = vmul.f32 %v901, %v1388
        %v1390 = vsub.f32 1.0, %v1389
        %v1391 = vmul.f32 %v1388, %v1390
        %v1392 = vadd.f32 %v1388, %v1391
        %vm1393 = vweird.f32 %v901
        %vm1394 = vweird.f32 %v1388
        %vm1395 = vmor %vm1393, %vm1394
        %v1396 = vsel %vm1395, %v1388, %v1392
        %v1397 = vand.u32 2147483647, %v901
        %vm1398 = vcmp.eq.f32.partialorder %v1397, 8.507059e+37
        %v1399 = vand.u32 %v901, 2147483648
        %v1400 = vor.u32 1.1754944e-38, %v1399
        %v1401 = vsel %vm1398, %v1400, %v1396
        %v1402 = vmul.f32 1.0, %v1401
        %v1403 = vrcp.pop %v902
        %v1404 = vmul.f32 %v902, %v1403
        %v1405 = vsub.f32 1.0, %v1404
        %v1406 = vmul.f32 %v1403, %v1405
        %v1407 = vadd.f32 %v1403, %v1406
        %vm1408 = vweird.f32 %v902
        %vm1409 = vweird.f32 %v1403
        %vm1410 = vmor %vm1408, %vm1409
        %v1411 = vsel %vm1410, %v1403, %v1407
        %v1412 = vand.u32 2147483647, %v902
        %vm1413 = vcmp.eq.f32.partialorder %v1412, 8.507059e+37
        %v1414 = vand.u32 %v902, 2147483648
        %v1415 = vor.u32 1.1754944e-38, %v1414
        %v1416 = vsel %vm1413, %v1415, %v1411
        %v1417 = vmul.f32 1.0, %v1416
        %v1418 = vrcp.pop %v903
        %v1419 = vmul.f32 %v903, %v1418
        %v1420 = vsub.f32 1.0, %v1419
        %v1421 = vmul.f32 %v1418, %v1420
        %v1422 = vadd.f32 %v1418, %v1421
        %vm1423 = vweird.f32 %v903
        %vm1424 = vweird.f32 %v1418
        %vm1425 = vmor %vm1423, %vm1424
        %v1426 = vsel %vm1425, %v1418, %v1422
        %v1427 = vand.u32 2147483647, %v903
        %vm1428 = vcmp.eq.f32.partialorder %v1427, 8.507059e+37
        %v1429 = vand.u32 %v903, 2147483648
        %v1430 = vor.u32 1.1754944e-38, %v1429
        %v1431 = vsel %vm1428, %v1430, %v1426
        %v1432 = vmul.f32 1.0, %v1431
        %v1433 = vrcp.pop %v904
        %v1434 = vmul.f32 %v904, %v1433
        %v1435 = vsub.f32 1.0, %v1434
        %v1436 = vmul.f32 %v1433, %v1435
        %v1437 = vadd.f32 %v1433, %v1436
        %vm1438 = vweird.f32 %v904
        %vm1439 = vweird.f32 %v1433
        %vm1440 = vmor %vm1438, %vm1439
        %v1441 = vsel %vm1440, %v1433, %v1437
        %v1442 = vand.u32 2147483647, %v904
        %vm1443 = vcmp.eq.f32.partialorder %v1442, 8.507059e+37
        %v1444 = vand.u32 %v904, 2147483648
        %v1445 = vor.u32 1.1754944e-38, %v1444
        %v1446 = vsel %vm1443, %v1445, %v1441
        %v1447 = vmul.f32 1.0, %v1446
        %v1448 = vrcp.pop %v905
        %v1449 = vmul.f32 %v905, %v1448
        %v1450 = vsub.f32 1.0, %v1449
        %v1451 = vmul.f32 %v1448, %v1450
        %v1452 = vadd.f32 %v1448, %v1451
        %vm1453 = vweird.f32 %v905
        %vm1454 = vweird.f32 %v1448
        %vm1455 = vmor %vm1453, %vm1454
        %v1456 = vsel %vm1455, %v1448, %v1452
        %v1457 = vand.u32 2147483647, %v905
        %vm1458 = vcmp.eq.f32.partialorder %v1457, 8.507059e+37
        %v1459 = vand.u32 %v905, 2147483648
        %v1460 = vor.u32 1.1754944e-38, %v1459
        %v1461 = vsel %vm1458, %v1460, %v1456
        %v1462 = vmul.f32 1.0, %v1461
        %v1463 = vrcp.pop %v906
        %v1464 = vmul.f32 %v906, %v1463
        %v1465 = vsub.f32 1.0, %v1464
        %v1466 = vmul.f32 %v1463, %v1465
        %v1467 = vadd.f32 %v1463, %v1466
        %vm1468 = vweird.f32 %v906
        %vm1469 = vweird.f32 %v1463
        %vm1470 = vmor %vm1468, %vm1469
        %v1471 = vsel %vm1470, %v1463, %v1467
        %v1472 = vand.u32 2147483647, %v906
        %vm1473 = vcmp.eq.f32.partialorder %v1472, 8.507059e+37
        %v1474 = vand.u32 %v906, 2147483648
        %v1475 = vor.u32 1.1754944e-38, %v1474
        %v1476 = vsel %vm1473, %v1475, %v1471
        %v1477 = vmul.f32 1.0, %v1476
        %v1478 = vrcp.pop %v907
        %v1479 = vmul.f32 %v907, %v1478
        %v1480 = vsub.f32 1.0, %v1479
        %v1481 = vmul.f32 %v1478, %v1480
        %v1482 = vadd.f32 %v1478, %v1481
        %vm1483 = vweird.f32 %v907
        %vm1484 = vweird.f32 %v1478
        %vm1485 = vmor %vm1483, %vm1484
        %v1486 = vsel %vm1485, %v1478, %v1482
        %v1487 = vand.u32 2147483647, %v907
        %vm1488 = vcmp.eq.f32.partialorder %v1487, 8.507059e+37
        %v1489 = vand.u32 %v907, 2147483648
        %v1490 = vor.u32 1.1754944e-38, %v1489
        %v1491 = vsel %vm1488, %v1490, %v1486
        %v1492 = vmul.f32 1.0, %v1491
        %v1493 = vmul.f32 %v922, 0.17087276
        %v1494 = vmul.f32 %v937, 0.17087276
        %v1495 = vmul.f32 %v952, 0.17087276
        %v1496 = vmul.f32 %v967, 0.17087276
        %v1497 = vmul.f32 %v982, 0.17087276
        %v1498 = vmul.f32 %v997, 0.17087276
        %v1499 = vmul.f32 %v1012, 0.17087276
        %v1500 = vmul.f32 %v1027, 0.17087276
        %v1501 = vmul.f32 %v1042, 0.17087276
        %v1502 = vmul.f32 %v1057, 0.17087276
        %v1503 = vmul.f32 %v1072, 0.17087276
        %v1504 = vmul.f32 %v1087, 0.17087276
        %v1505 = vmul.f32 %v1102, 0.17087276
        %v1506 = vmul.f32 %v1117, 0.17087276
        %v1507 = vmul.f32 %v1132, 0.17087276
        %v1508 = vmul.f32 %v1147, 0.17087276
        %v1509 = vmul.f32 %v1162, 0.17087276
        %v1510 = vmul.f32 %v1177, 0.17087276
        %v1511 = vmul.f32 %v1192, 0.17087276
        %v1512 = vmul.f32 %v1207, 0.17087276
        %v1513 = vmul.f32 %v1222, 0.17087276
        %v1514 = vmul.f32 %v1237, 0.17087276
        %v1515 = vmul.f32 %v1252, 0.17087276
        %v1516 = vmul.f32 %v1267, 0.17087276
        %v1517 = vmul.f32 %v1282, 0.17087276
        %v1518 = vmul.f32 %v1297, 0.17087276
        %v1519 = vmul.f32 %v1312, 0.17087276
        %v1520 = vmul.f32 %v1327, 0.17087276
        %v1521 = vmul.f32 %v1342, 0.17087276
        %v1522 = vmul.f32 %v1357, 0.17087276
        %v1523 = vmul.f32 %v1372, 0.17087276
        %v1524 = vmul.f32 %v1387, 0.17087276
        %v1525 = vmul.f32 %v1402, 0.17087276
        %v1526 = vmul.f32 %v1417, 0.17087276
        %v1527 = vmul.f32 %v1432, 0.17087276
        %v1528 = vmul.f32 %v1447, 0.17087276
        %v1529 = vmul.f32 %v1462, 0.17087276
        %v1530 = vmul.f32 %v1477, 0.17087276
        %v1531 = vmul.f32 %v1492, 0.17087276
        %v1532 = vadd.f32 %v1493, -0.82215226
        %v1533 = vadd.f32 %v1494, -0.82215226
        %v1534 = vadd.f32 %v1495, -0.82215226
        %v1535 = vadd.f32 %v1496, -0.82215226
        %v1536 = vadd.f32 %v1497, -0.82215226
        %v1537 = vadd.f32 %v1498, -0.82215226
        %v1538 = vadd.f32 %v1499, -0.82215226
        %v1539 = vadd.f32 %v1500, -0.82215226
        %v1540 = vadd.f32 %v1501, -0.82215226
        %v1541 = vadd.f32 %v1502, -0.82215226
        %v1542 = vadd.f32 %v1503, -0.82215226
        %v1543 = vadd.f32 %v1504, -0.82215226
        %v1544 = vadd.f32 %v1505, -0.82215226
        %v1545 = vadd.f32 %v1506, -0.82215226
        %v1546 = vadd.f32 %v1507, -0.82215226
        %v1547 = vadd.f32 %v1508, -0.82215226
        %v1548 = vadd.f32 %v1509, -0.82215226
        %v1549 = vadd.f32 %v1510, -0.82215226
        %v1550 = vadd.f32 %v1511, -0.82215226
        %v1551 = vadd.f32 %v1512, -0.82215226
        %v1552 = vadd.f32 %v1513, -0.82215226
        %v1553 = vadd.f32 %v1514, -0.82215226
        %v1554 = vadd.f32 %v1515, -0.82215226
        %v1555 = vadd.f32 %v1516, -0.82215226
        %v1556 = vadd.f32 %v1517, -0.82215226
        %v1557 = vadd.f32 %v1518, -0.82215226
        %v1558 = vadd.f32 %v1519, -0.82215226
        %v1559 = vadd.f32 %v1520, -0.82215226
        %v1560 = vadd.f32 %v1521, -0.82215226
        %v1561 = vadd.f32 %v1522, -0.82215226
        %v1562 = vadd.f32 %v1523, -0.82215226
        %v1563 = vadd.f32 %v1524, -0.82215226
        %v1564 = vadd.f32 %v1525, -0.82215226
        %v1565 = vadd.f32 %v1526, -0.82215226
        %v1566 = vadd.f32 %v1527, -0.82215226
        %v1567 = vadd.f32 %v1528, -0.82215226
        %v1568 = vadd.f32 %v1529, -0.82215226
        %v1569 = vadd.f32 %v1530, -0.82215226
        %v1570 = vadd.f32 %v1531, -0.82215226
        %v1571 = vmul.f32 %v922, %v1532
        %v1572 = vmul.f32 %v937, %v1533
        %v1573 = vmul.f32 %v952, %v1534
        %v1574 = vmul.f32 %v967, %v1535
        %v1575 = vmul.f32 %v982, %v1536
        %v1576 = vmul.f32 %v997, %v1537
        %v1577 = vmul.f32 %v1012, %v1538
        %v1578 = vmul.f32 %v1027, %v1539
        %v1579 = vmul.f32 %v1042, %v1540
        %v1580 = vmul.f32 %v1057, %v1541
        %v1581 = vmul.f32 %v1072, %v1542
        %v1582 = vmul.f32 %v1087, %v1543
        %v1583 = vmul.f32 %v1102, %v1544
        %v1584 = vmul.f32 %v1117, %v1545
        %v1585 = vmul.f32 %v1132, %v1546
        %v1586 = vmul.f32 %v1147, %v1547
        %v1587 = vmul.f32 %v1162, %v1548
        %v1588 = vmul.f32 %v1177, %v1549
        %v1589 = vmul.f32 %v1192, %v1550
        %v1590 = vmul.f32 %v1207, %v1551
        %v1591 = vmul.f32 %v1222, %v1552
        %v1592 = vmul.f32 %v1237, %v1553
        %v1593 = vmul.f32 %v1252, %v1554
        %v1594 = vmul.f32 %v1267, %v1555
        %v1595 = vmul.f32 %v1282, %v1556
        %v1596 = vmul.f32 %v1297, %v1557
        %v1597 = vmul.f32 %v1312, %v1558
        %v1598 = vmul.f32 %v1327, %v1559
        %v1599 = vmul.f32 %v1342, %v1560
        %v1600 = vmul.f32 %v1357, %v1561
        %v1601 = vmul.f32 %v1372, %v1562
        %v1602 = vmul.f32 %v1387, %v1563
        %v1603 = vmul.f32 %v1402, %v1564
        %v1604 = vmul.f32 %v1417, %v1565
        %v1605 = vmul.f32 %v1432, %v1566
        %v1606 = vmul.f32 %v1447, %v1567
        %v1607 = vmul.f32 %v1462, %v1568
        %v1608 = vmul.f32 %v1477, %v1569
        %v1609 = vmul.f32 %v1492, %v1570
        %v1610 = vadd.f32 %v1571, 1.4885159
        %v1611 = vadd.f32 %v1572, 1.4885159
        %v1612 = vadd.f32 %v1573, 1.4885159
        %v1613 = vadd.f32 %v1574, 1.4885159
        %v1614 = vadd.f32 %v1575, 1.4885159
        %v1615 = vadd.f32 %v1576, 1.4885159
        %v1616 = vadd.f32 %v1577, 1.4885159
        %v1617 = vadd.f32 %v1578, 1.4885159
        %v1618 = vadd.f32 %v1579, 1.4885159
        %v1619 = vadd.f32 %v1580, 1.4885159
        %v1620 = vadd.f32 %v1581, 1.4885159
        %v1621 = vadd.f32 %v1582, 1.4885159
        %v1622 = vadd.f32 %v1583, 1.4885159
        %v1623 = vadd.f32 %v1584, 1.4885159
        %v1624 = vadd.f32 %v1585, 1.4885159
        %v1625 = vadd.f32 %v1586, 1.4885159
        %v1626 = vadd.f32 %v1587, 1.4885159
        %v1627 = vadd.f32 %v1588, 1.4885159
        %v1628 = vadd.f32 %v1589, 1.4885159
        %v1629 = vadd.f32 %v1590, 1.4885159
        %v1630 = vadd.f32 %v1591, 1.4885159
        %v1631 = vadd.f32 %v1592, 1.4885159
        %v1632 = vadd.f32 %v1593, 1.4885159
        %v1633 = vadd.f32 %v1594, 1.4885159
        %v1634 = vadd.f32 %v1595, 1.4885159
        %v1635 = vadd.f32 %v1596, 1.4885159
        %v1636 = vadd.f32 %v1597, 1.4885159
        %v1637 = vadd.f32 %v1598, 1.4885159
        %v1638 = vadd.f32 %v1599, 1.4885159
        %v1639 = vadd.f32 %v1600, 1.4885159
        %v1640 = vadd.f32 %v1601, 1.4885159
        %v1641 = vadd.f32 %v1602, 1.4885159
        %v1642 = vadd.f32 %v1603, 1.4885159
        %v1643 = vadd.f32 %v1604, 1.4885159
        %v1644 = vadd.f32 %v1605, 1.4885159
        %v1645 = vadd.f32 %v1606, 1.4885159
        %v1646 = vadd.f32 %v1607, 1.4885159
        %v1647 = vadd.f32 %v1608, 1.4885159
        %v1648 = vadd.f32 %v1609, 1.4885159
        %v1649 = vmul.f32 %v922, %v1610
        %v1650 = vmul.f32 %v937, %v1611
        %v1651 = vmul.f32 %v952, %v1612
        %v1652 = vmul.f32 %v967, %v1613
        %v1653 = vmul.f32 %v982, %v1614
        %v1654 = vmul.f32 %v997, %v1615
        %v1655 = vmul.f32 %v1012, %v1616
        %v1656 = vmul.f32 %v1027, %v1617
        %v1657 = vmul.f32 %v1042, %v1618
        %v1658 = vmul.f32 %v1057, %v1619
        %v1659 = vmul.f32 %v1072, %v1620
        %v1660 = vmul.f32 %v1087, %v1621
        %v1661 = vmul.f32 %v1102, %v1622
        %v1662 = vmul.f32 %v1117, %v1623
        %v1663 = vmul.f32 %v1132, %v1624
        %v1664 = vmul.f32 %v1147, %v1625
        %v1665 = vmul.f32 %v1162, %v1626
        %v1666 = vmul.f32 %v1177, %v1627
        %v1667 = vmul.f32 %v1192, %v1628
        %v1668 = vmul.f32 %v1207, %v1629
        %v1669 = vmul.f32 %v1222, %v1630
        %v1670 = vmul.f32 %v1237, %v1631
        %v1671 = vmul.f32 %v1252, %v1632
        %v1672 = vmul.f32 %v1267, %v1633
        %v1673 = vmul.f32 %v1282, %v1634
        %v1674 = vmul.f32 %v1297, %v1635
        %v1675 = vmul.f32 %v1312, %v1636
        %v1676 = vmul.f32 %v1327, %v1637
        %v1677 = vmul.f32 %v1342, %v1638
        %v1678 = vmul.f32 %v1357, %v1639
        %v1679 = vmul.f32 %v1372, %v1640
        %v1680 = vmul.f32 %v1387, %v1641
        %v1681 = vmul.f32 %v1402, %v1642
        %v1682 = vmul.f32 %v1417, %v1643
        %v1683 = vmul.f32 %v1432, %v1644
        %v1684 = vmul.f32 %v1447, %v1645
        %v1685 = vmul.f32 %v1462, %v1646
        %v1686 = vmul.f32 %v1477, %v1647
        %v1687 = vmul.f32 %v1492, %v1648
        %v1688 = vadd.f32 %v1649, -1.135204
        %v1689 = vadd.f32 %v1650, -1.135204
        %v1690 = vadd.f32 %v1651, -1.135204
        %v1691 = vadd.f32 %v1652, -1.135204
        %v1692 = vadd.f32 %v1653, -1.135204
        %v1693 = vadd.f32 %v1654, -1.135204
        %v1694 = vadd.f32 %v1655, -1.135204
        %v1695 = vadd.f32 %v1656, -1.135204
        %v1696 = vadd.f32 %v1657, -1.135204
        %v1697 = vadd.f32 %v1658, -1.135204
        %v1698 = vadd.f32 %v1659, -1.135204
        %v1699 = vadd.f32 %v1660, -1.135204
        %v1700 = vadd.f32 %v1661, -1.135204
        %v1701 = vadd.f32 %v1662, -1.135204
        %v1702 = vadd.f32 %v1663, -1.135204
        %v1703 = vadd.f32 %v1664, -1.135204
        %v1704 = vadd.f32 %v1665, -1.135204
        %v1705 = vadd.f32 %v1666, -1.135204
        %v1706 = vadd.f32 %v1667, -1.135204
        %v1707 = vadd.f32 %v1668, -1.135204
        %v1708 = vadd.f32 %v1669, -1.135204
        %v1709 = vadd.f32 %v1670, -1.135204
        %v1710 = vadd.f32 %v1671, -1.135204
        %v1711 = vadd.f32 %v1672, -1.135204
        %v1712 = vadd.f32 %v1673, -1.135204
        %v1713 = vadd.f32 %v1674, -1.135204
        %v1714 = vadd.f32 %v1675, -1.135204
        %v1715 = vadd.f32 %v1676, -1.135204
        %v1716 = vadd.f32 %v1677, -1.135204
        %v1717 = vadd.f32 %v1678, -1.135204
        %v1718 = vadd.f32 %v1679, -1.135204
        %v1719 = vadd.f32 %v1680, -1.135204
        %v1720 = vadd.f32 %v1681, -1.135204
        %v1721 = vadd.f32 %v1682, -1.135204
        %v1722 = vadd.f32 %v1683, -1.135204
        %v1723 = vadd.f32 %v1684, -1.135204
        %v1724 = vadd.f32 %v1685, -1.135204
        %v1725 = vadd.f32 %v1686, -1.135204
        %v1726 = vadd.f32 %v1687, -1.135204
        %v1727 = vmul.f32 %v922, %v1688
        %v1728 = vmul.f32 %v937, %v1689
        %v1729 = vmul.f32 %v952, %v1690
        %v1730 = vmul.f32 %v967, %v1691
        %v1731 = vmul.f32 %v982, %v1692
        %v1732 = vmul.f32 %v997, %v1693
        %v1733 = vmul.f32 %v1012, %v1694
        %v1734 = vmul.f32 %v1027, %v1695
        %v1735 = vmul.f32 %v1042, %v1696
        %v1736 = vmul.f32 %v1057, %v1697
        %v1737 = vmul.f32 %v1072, %v1698
        %v1738 = vmul.f32 %v1087, %v1699
        %v1739 = vmul.f32 %v1102, %v1700
        %v1740 = vmul.f32 %v1117, %v1701
        %v1741 = vmul.f32 %v1132, %v1702
        %v1742 = vmul.f32 %v1147, %v1703
        %v1743 = vmul.f32 %v1162, %v1704
        %v1744 = vmul.f32 %v1177, %v1705
        %v1745 = vmul.f32 %v1192, %v1706
        %v1746 = vmul.f32 %v1207, %v1707
        %v1747 = vmul.f32 %v1222, %v1708
        %v1748 = vmul.f32 %v1237, %v1709
        %v1749 = vmul.f32 %v1252, %v1710
        %v1750 = vmul.f32 %v1267, %v1711
        %v1751 = vmul.f32 %v1282, %v1712
        %v1752 = vmul.f32 %v1297, %v1713
        %v1753 = vmul.f32 %v1312, %v1714
        %v1754 = vmul.f32 %v1327, %v1715
        %v1755 = vmul.f32 %v1342, %v1716
        %v1756 = vmul.f32 %v1357, %v1717
        %v1757 = vmul.f32 %v1372, %v1718
        %v1758 = vmul.f32 %v1387, %v1719
        %v1759 = vmul.f32 %v1402, %v1720
        %v1760 = vmul.f32 %v1417, %v1721
        %v1761 = vmul.f32 %v1432, %v1722
        %v1762 = vmul.f32 %v1447, %v1723
        %v1763 = vmul.f32 %v1462, %v1724
        %v1764 = vmul.f32 %v1477, %v1725
        %v1765 = vmul.f32 %v1492, %v1726
        %v1766 = vadd.f32 %v1727, 0.27886808
        %v1767 = vadd.f32 %v1728, 0.27886808
        %v1768 = vadd.f32 %v1729, 0.27886808
        %v1769 = vadd.f32 %v1730, 0.27886808
        %v1770 = vadd.f32 %v1731, 0.27886808
        %v1771 = vadd.f32 %v1732, 0.27886808
        %v1772 = vadd.f32 %v1733, 0.27886808
        %v1773 = vadd.f32 %v1734, 0.27886808
        %v1774 = vadd.f32 %v1735, 0.27886808
        %v1775 = vadd.f32 %v1736, 0.27886808
        %v1776 = vadd.f32 %v1737, 0.27886808
        %v1777 = vadd.f32 %v1738, 0.27886808
        %v1778 = vadd.f32 %v1739, 0.27886808
        %v1779 = vadd.f32 %v1740, 0.27886808
        %v1780 = vadd.f32 %v1741, 0.27886808
        %v1781 = vadd.f32 %v1742, 0.27886808
        %v1782 = vadd.f32 %v1743, 0.27886808
        %v1783 = vadd.f32 %v1744, 0.27886808
        %v1784 = vadd.f32 %v1745, 0.27886808
        %v1785 = vadd.f32 %v1746, 0.27886808
        %v1786 = vadd.f32 %v1747, 0.27886808
        %v1787 = vadd.f32 %v1748, 0.27886808
        %v1788 = vadd.f32 %v1749, 0.27886808
        %v1789 = vadd.f32 %v1750, 0.27886808
        %v1790 = vadd.f32 %v1751, 0.27886808
        %v1791 = vadd.f32 %v1752, 0.27886808
        %v1792 = vadd.f32 %v1753, 0.27886808
        %v1793 = vadd.f32 %v1754, 0.27886808
        %v1794 = vadd.f32 %v1755, 0.27886808
        %v1795 = vadd.f32 %v1756, 0.27886808
        %v1796 = vadd.f32 %v1757, 0.27886808
        %v1797 = vadd.f32 %v1758, 0.27886808
        %v1798 = vadd.f32 %v1759, 0.27886808
        %v1799 = vadd.f32 %v1760, 0.27886808
        %v1800 = vadd.f32 %v1761, 0.27886808
        %v1801 = vadd.f32 %v1762, 0.27886808
        %v1802 = vadd.f32 %v1763, 0.27886808
        %v1803 = vadd.f32 %v1764, 0.27886808
        %v1804 = vadd.f32 %v1765, 0.27886808
        %v1805 = vmul.f32 %v922, %v1766
        %v1806 = vmul.f32 %v937, %v1767
        %v1807 = vmul.f32 %v952, %v1768
        %v1808 = vmul.f32 %v967, %v1769
        %v1809 = vmul.f32 %v982, %v1770
        %v1810 = vmul.f32 %v997, %v1771
        %v1811 = vmul.f32 %v1012, %v1772
        %v1812 = vmul.f32 %v1027, %v1773
        %v1813 = vmul.f32 %v1042, %v1774
        %v1814 = vmul.f32 %v1057, %v1775
        %v1815 = vmul.f32 %v1072, %v1776
        %v1816 = vmul.f32 %v1087, %v1777
        %v1817 = vmul.f32 %v1102, %v1778
        %v1818 = vmul.f32 %v1117, %v1779
        %v1819 = vmul.f32 %v1132, %v1780
        %v1820 = vmul.f32 %v1147, %v1781
        %v1821 = vmul.f32 %v1162, %v1782
        %v1822 = vmul.f32 %v1177, %v1783
        %v1823 = vmul.f32 %v1192, %v1784
        %v1824 = vmul.f32 %v1207, %v1785
        %v1825 = vmul.f32 %v1222, %v1786
        %v1826 = vmul.f32 %v1237, %v1787
        %v1827 = vmul.f32 %v1252, %v1788
        %v1828 = vmul.f32 %v1267, %v1789
        %v1829 = vmul.f32 %v1282, %v1790
        %v1830 = vmul.f32 %v1297, %v1791
        %v1831 = vmul.f32 %v1312, %v1792
        %v1832 = vmul.f32 %v1327, %v1793
        %v1833 = vmul.f32 %v1342, %v1794
        %v1834 = vmul.f32 %v1357, %v1795
        %v1835 = vmul.f32 %v1372, %v1796
        %v1836 = vmul.f32 %v1387, %v1797
        %v1837 = vmul.f32 %v1402, %v1798
        %v1838 = vmul.f32 %v1417, %v1799
        %v1839 = vmul.f32 %v1432, %v1800
        %v1840 = vmul.f32 %v1447, %v1801
        %v1841 = vmul.f32 %v1462, %v1802
        %v1842 = vmul.f32 %v1477, %v1803
        %v1843 = vmul.f32 %v1492, %v1804
        %v1844 = vadd.f32 %v1805, -0.18628806
        %v1845 = vadd.f32 %v1806, -0.18628806
        %v1846 = vadd.f32 %v1807, -0.18628806
        %v1847 = vadd.f32 %v1808, -0.18628806
        %v1848 = vadd.f32 %v1809, -0.18628806
        %v1849 = vadd.f32 %v1810, -0.18628806
        %v1850 = vadd.f32 %v1811, -0.18628806
        %v1851 = vadd.f32 %v1812, -0.18628806
        %v1852 = vadd.f32 %v1813, -0.18628806
        %v1853 = vadd.f32 %v1814, -0.18628806
        %v1854 = vadd.f32 %v1815, -0.18628806
        %v1855 = vadd.f32 %v1816, -0.18628806
        %v1856 = vadd.f32 %v1817, -0.18628806
        %v1857 = vadd.f32 %v1818, -0.18628806
        %v1858 = vadd.f32 %v1819, -0.18628806
        %v1859 = vadd.f32 %v1820, -0.18628806
        %v1860 = vadd.f32 %v1821, -0.18628806
        %v1861 = vadd.f32 %v1822, -0.18628806
        %v1862 = vadd.f32 %v1823, -0.18628806
        %v1863 = vadd.f32 %v1824, -0.18628806
        %v1864 = vadd.f32 %v1825, -0.18628806
        %v1865 = vadd.f32 %v1826, -0.18628806
        %v1866 = vadd.f32 %v1827, -0.18628806
        %v1867 = vadd.f32 %v1828, -0.18628806
        %v1868 = vadd.f32 %v1829, -0.18628806
        %v1869 = vadd.f32 %v1830, -0.18628806
        %v1870 = vadd.f32 %v1831, -0.18628806
        %v1871 = vadd.f32 %v1832, -0.18628806
        %v1872 = vadd.f32 %v1833, -0.18628806
        %v1873 = vadd.f32 %v1834, -0.18628806
        %v1874 = vadd.f32 %v1835, -0.18628806
        %v1875 = vadd.f32 %v1836, -0.18628806
        %v1876 = vadd.f32 %v1837, -0.18628806
        %v1877 = vadd.f32 %v1838, -0.18628806
        %v1878 = vadd.f32 %v1839, -0.18628806
        %v1879 = vadd.f32 %v1840, -0.18628806
        %v1880 = vadd.f32 %v1841, -0.18628806
        %v1881 = vadd.f32 %v1842, -0.18628806
        %v1882 = vadd.f32 %v1843, -0.18628806
        %v1883 = vmul.f32 %v922, %v1844
        %v1884 = vmul.f32 %v937, %v1845
        %v1885 = vmul.f32 %v952, %v1846
        %v1886 = vmul.f32 %v967, %v1847
        %v1887 = vmul.f32 %v982, %v1848
        %v1888 = vmul.f32 %v997, %v1849
        %v1889 = vmul.f32 %v1012, %v1850
        %v1890 = vmul.f32 %v1027, %v1851
        %v1891 = vmul.f32 %v1042, %v1852
        %v1892 = vmul.f32 %v1057, %v1853
        %v1893 = vmul.f32 %v1072, %v1854
        %v1894 = vmul.f32 %v1087, %v1855
        %v1895 = vmul.f32 %v1102, %v1856
        %v1896 = vmul.f32 %v1117, %v1857
        %v1897 = vmul.f32 %v1132, %v1858
        %v1898 = vmul.f32 %v1147, %v1859
        %v1899 = vmul.f32 %v1162, %v1860
        %v1900 = vmul.f32 %v1177, %v1861
        %v1901 = vmul.f32 %v1192, %v1862
        %v1902 = vmul.f32 %v1207, %v1863
        %v1903 = vmul.f32 %v1222, %v1864
        %v1904 = vmul.f32 %v1237, %v1865
        %v1905 = vmul.f32 %v1252, %v1866
        %v1906 = vmul.f32 %v1267, %v1867
        %v1907 = vmul.f32 %v1282, %v1868
        %v1908 = vmul.f32 %v1297, %v1869
        %v1909 = vmul.f32 %v1312, %v1870
        %v1910 = vmul.f32 %v1327, %v1871
        %v1911 = vmul.f32 %v1342, %v1872
        %v1912 = vmul.f32 %v1357, %v1873
        %v1913 = vmul.f32 %v1372, %v1874
        %v1914 = vmul.f32 %v1387, %v1875
        %v1915 = vmul.f32 %v1402, %v1876
        %v1916 = vmul.f32 %v1417, %v1877
        %v1917 = vmul.f32 %v1432, %v1878
        %v1918 = vmul.f32 %v1447, %v1879
        %v1919 = vmul.f32 %v1462, %v1880
        %v1920 = vmul.f32 %v1477, %v1881
        %v1921 = vmul.f32 %v1492, %v1882
        %v1922 = vadd.f32 %v1883, 0.09678418
        %v1923 = vadd.f32 %v1884, 0.09678418
        %v1924 = vadd.f32 %v1885, 0.09678418
        %v1925 = vadd.f32 %v1886, 0.09678418
        %v1926 = vadd.f32 %v1887, 0.09678418
        %v1927 = vadd.f32 %v1888, 0.09678418
        %v1928 = vadd.f32 %v1889, 0.09678418
        %v1929 = vadd.f32 %v1890, 0.09678418
        %v1930 = vadd.f32 %v1891, 0.09678418
        %v1931 = vadd.f32 %v1892, 0.09678418
        %v1932 = vadd.f32 %v1893, 0.09678418
        %v1933 = vadd.f32 %v1894, 0.09678418
        %v1934 = vadd.f32 %v1895, 0.09678418
        %v1935 = vadd.f32 %v1896, 0.09678418
        %v1936 = vadd.f32 %v1897, 0.09678418
        %v1937 = vadd.f32 %v1898, 0.09678418
        %v1938 = vadd.f32 %v1899, 0.09678418
        %v1939 = vadd.f32 %v1900, 0.09678418
        %v1940 = vadd.f32 %v1901, 0.09678418
        %v1941 = vadd.f32 %v1902, 0.09678418
        %v1942 = vadd.f32 %v1903, 0.09678418
        %v1943 = vadd.f32 %v1904, 0.09678418
        %v1944 = vadd.f32 %v1905, 0.09678418
        %v1945 = vadd.f32 %v1906, 0.09678418
        %v1946 = vadd.f32 %v1907, 0.09678418
        %v1947 = vadd.f32 %v1908, 0.09678418
        %v1948 = vadd.f32 %v1909, 0.09678418
        %v1949 = vadd.f32 %v1910, 0.09678418
        %v1950 = vadd.f32 %v1911, 0.09678418
        %v1951 = vadd.f32 %v1912, 0.09678418
        %v1952 = vadd.f32 %v1913, 0.09678418
        %v1953 = vadd.f32 %v1914, 0.09678418
        %v1954 = vadd.f32 %v1915, 0.09678418
        %v1955 = vadd.f32 %v1916, 0.09678418
        %v1956 = vadd.f32 %v1917, 0.09678418
        %v1957 = vadd.f32 %v1918, 0.09678418
        %v1958 = vadd.f32 %v1919, 0.09678418
        %v1959 = vadd.f32 %v1920, 0.09678418
        %v1960 = vadd.f32 %v1921, 0.09678418
        %v1961 = vmul.f32 %v922, %v1922
        %v1962 = vmul.f32 %v937, %v1923
        %v1963 = vmul.f32 %v952, %v1924
        %v1964 = vmul.f32 %v967, %v1925
        %v1965 = vmul.f32 %v982, %v1926
        %v1966 = vmul.f32 %v997, %v1927
        %v1967 = vmul.f32 %v1012, %v1928
        %v1968 = vmul.f32 %v1027, %v1929
        %v1969 = vmul.f32 %v1042, %v1930
        %v1970 = vmul.f32 %v1057, %v1931
        %v1971 = vmul.f32 %v1072, %v1932
        %v1972 = vmul.f32 %v1087, %v1933
        %v1973 = vmul.f32 %v1102, %v1934
        %v1974 = vmul.f32 %v1117, %v1935
        %v1975 = vmul.f32 %v1132, %v1936
        %v1976 = vmul.f32 %v1147, %v1937
        %v1977 = vmul.f32 %v1162, %v1938
        %v1978 = vmul.f32 %v1177, %v1939
        %v1979 = vmul.f32 %v1192, %v1940
        %v1980 = vmul.f32 %v1207, %v1941
        %v1981 = vmul.f32 %v1222, %v1942
        %v1982 = vmul.f32 %v1237, %v1943
        %v1983 = vmul.f32 %v1252, %v1944
        %v1984 = vmul.f32 %v1267, %v1945
        %v1985 = vmul.f32 %v1282, %v1946
        %v1986 = vmul.f32 %v1297, %v1947
        %v1987 = vmul.f32 %v1312, %v1948
        %v1988 = vmul.f32 %v1327, %v1949
        %v1989 = vmul.f32 %v1342, %v1950
        %v1990 = vmul.f32 %v1357, %v1951
        %v1991 = vmul.f32 %v1372, %v1952
        %v1992 = vmul.f32 %v1387, %v1953
        %v1993 = vmul.f32 %v1402, %v1954
        %v1994 = vmul.f32 %v1417, %v1955
        %v1995 = vmul.f32 %v1432, %v1956
        %v1996 = vmul.f32 %v1447, %v1957
        %v1997 = vmul.f32 %v1462, %v1958
        %v1998 = vmul.f32 %v1477, %v1959
        %v1999 = vmul.f32 %v1492, %v1960
        %v2000 = vadd.f32 %v1961, 0.37409195
        %v2001 = vadd.f32 %v1962, 0.37409195
        %v2002 = vadd.f32 %v1963, 0.37409195
        %v2003 = vadd.f32 %v1964, 0.37409195
        %v2004 = vadd.f32 %v1965, 0.37409195
        %v2005 = vadd.f32 %v1966, 0.37409195
        %v2006 = vadd.f32 %v1967, 0.37409195
        %v2007 = vadd.f32 %v1968, 0.37409195
        %v2008 = vadd.f32 %v1969, 0.37409195
        %v2009 = vadd.f32 %v1970, 0.37409195
        %v2010 = vadd.f32 %v1971, 0.37409195
        %v2011 = vadd.f32 %v1972, 0.37409195
        %v2012 = vadd.f32 %v1973, 0.37409195
        %v2013 = vadd.f32 %v1974, 0.37409195
        %v2014 = vadd.f32 %v1975, 0.37409195
        %v2015 = vadd.f32 %v1976, 0.37409195
        %v2016 = vadd.f32 %v1977, 0.37409195
        %v2017 = vadd.f32 %v1978, 0.37409195
        %v2018 = vadd.f32 %v1979, 0.37409195
        %v2019 = vadd.f32 %v1980, 0.37409195
        %v2020 = vadd.f32 %v1981, 0.37409195
        %v2021 = vadd.f32 %v1982, 0.37409195
        %v2022 = vadd.f32 %v1983, 0.37409195
        %v2023 = vadd.f32 %v1984, 0.37409195
        %v2024 = vadd.f32 %v1985, 0.37409195
        %v2025 = vadd.f32 %v1986, 0.37409195
        %v2026 = vadd.f32 %v1987, 0.37409195
        %v2027 = vadd.f32 %v1988, 0.37409195
        %v2028 = vadd.f32 %v1989, 0.37409195
        %v2029 = vadd.f32 %v1990, 0.37409195
        %v2030 = vadd.f32 %v1991, 0.37409195
        %v2031 = vadd.f32 %v1992, 0.37409195
        %v2032 = vadd.f32 %v1993, 0.37409195
        %v2033 = vadd.f32 %v1994, 0.37409195
        %v2034 = vadd.f32 %v1995, 0.37409195
        %v2035 = vadd.f32 %v1996, 0.37409195
        %v2036 = vadd.f32 %v1997, 0.37409195
        %v2037 = vadd.f32 %v1998, 0.37409195
        %v2038 = vadd.f32 %v1999, 0.37409195
        %v2039 = vmul.f32 %v922, %v2000
        %v2040 = vmul.f32 %v937, %v2001
        %v2041 = vmul.f32 %v952, %v2002
        %v2042 = vmul.f32 %v967, %v2003
        %v2043 = vmul.f32 %v982, %v2004
        %v2044 = vmul.f32 %v997, %v2005
        %v2045 = vmul.f32 %v1012, %v2006
        %v2046 = vmul.f32 %v1027, %v2007
        %v2047 = vmul.f32 %v1042, %v2008
        %v2048 = vmul.f32 %v1057, %v2009
        %v2049 = vmul.f32 %v1072, %v2010
        %v2050 = vmul.f32 %v1087, %v2011
        %v2051 = vmul.f32 %v1102, %v2012
        %v2052 = vmul.f32 %v1117, %v2013
        %v2053 = vmul.f32 %v1132, %v2014
        %v2054 = vmul.f32 %v1147, %v2015
        %v2055 = vmul.f32 %v1162, %v2016
        %v2056 = vmul.f32 %v1177, %v2017
        %v2057 = vmul.f32 %v1192, %v2018
        %v2058 = vmul.f32 %v1207, %v2019
        %v2059 = vmul.f32 %v1222, %v2020
        %v2060 = vmul.f32 %v1237, %v2021
        %v2061 = vmul.f32 %v1252, %v2022
        %v2062 = vmul.f32 %v1267, %v2023
        %v2063 = vmul.f32 %v1282, %v2024
        %v2064 = vmul.f32 %v1297, %v2025
        %v2065 = vmul.f32 %v1312, %v2026
        %v2066 = vmul.f32 %v1327, %v2027
        %v2067 = vmul.f32 %v1342, %v2028
        %v2068 = vmul.f32 %v1357, %v2029
        %v2069 = vmul.f32 %v1372, %v2030
        %v2070 = vmul.f32 %v1387, %v2031
        %v2071 = vmul.f32 %v1402, %v2032
        %v2072 = vmul.f32 %v1417, %v2033
        %v2073 = vmul.f32 %v1432, %v2034
        %v2074 = vmul.f32 %v1447, %v2035
        %v2075 = vmul.f32 %v1462, %v2036
        %v2076 = vmul.f32 %v1477, %v2037
        %v2077 = vmul.f32 %v1492, %v2038
        %v2078 = vadd.f32 %v2039, 1.0000237
        %v2079 = vadd.f32 %v2040, 1.0000237
        %v2080 = vadd.f32 %v2041, 1.0000237
        %v2081 = vadd.f32 %v2042, 1.0000237
        %v2082 = vadd.f32 %v2043, 1.0000237
        %v2083 = vadd.f32 %v2044, 1.0000237
        %v2084 = vadd.f32 %v2045, 1.0000237
        %v2085 = vadd.f32 %v2046, 1.0000237
        %v2086 = vadd.f32 %v2047, 1.0000237
        %v2087 = vadd.f32 %v2048, 1.0000237
        %v2088 = vadd.f32 %v2049, 1.0000237
        %v2089 = vadd.f32 %v2050, 1.0000237
        %v2090 = vadd.f32 %v2051, 1.0000237
        %v2091 = vadd.f32 %v2052, 1.0000237
        %v2092 = vadd.f32 %v2053, 1.0000237
        %v2093 = vadd.f32 %v2054, 1.0000237
        %v2094 = vadd.f32 %v2055, 1.0000237
        %v2095 = vadd.f32 %v2056, 1.0000237
        %v2096 = vadd.f32 %v2057, 1.0000237
        %v2097 = vadd.f32 %v2058, 1.0000237
        %v2098 = vadd.f32 %v2059, 1.0000237
        %v2099 = vadd.f32 %v2060, 1.0000237
        %v2100 = vadd.f32 %v2061, 1.0000237
        %v2101 = vadd.f32 %v2062, 1.0000237
        %v2102 = vadd.f32 %v2063, 1.0000237
        %v2103 = vadd.f32 %v2064, 1.0000237
        %v2104 = vadd.f32 %v2065, 1.0000237
        %v2105 = vadd.f32 %v2066, 1.0000237
        %v2106 = vadd.f32 %v2067, 1.0000237
        %v2107 = vadd.f32 %v2068, 1.0000237
        %v2108 = vadd.f32 %v2069, 1.0000237
        %v2109 = vadd.f32 %v2070, 1.0000237
        %v2110 = vadd.f32 %v2071, 1.0000237
        %v2111 = vadd.f32 %v2072, 1.0000237
        %v2112 = vadd.f32 %v2073, 1.0000237
        %v2113 = vadd.f32 %v2074, 1.0000237
        %v2114 = vadd.f32 %v2075, 1.0000237
        %v2115 = vadd.f32 %v2076, 1.0000237
        %v2116 = vadd.f32 %v2077, 1.0000237
        %v2117 = vmul.f32 %v922, %v2078
        %v2118 = vmul.f32 %v937, %v2079
        %v2119 = vmul.f32 %v952, %v2080
        %v2120 = vmul.f32 %v967, %v2081
        %v2121 = vmul.f32 %v982, %v2082
        %v2122 = vmul.f32 %v997, %v2083
        %v2123 = vmul.f32 %v1012, %v2084
        %v2124 = vmul.f32 %v1027, %v2085
        %v2125 = vmul.f32 %v1042, %v2086
        %v2126 = vmul.f32 %v1057, %v2087
        %v2127 = vmul.f32 %v1072, %v2088
        %v2128 = vmul.f32 %v1087, %v2089
        %v2129 = vmul.f32 %v1102, %v2090
        %v2130 = vmul.f32 %v1117, %v2091
        %v2131 = vmul.f32 %v1132, %v2092
        %v2132 = vmul.f32 %v1147, %v2093
        %v2133 = vmul.f32 %v1162, %v2094
        %v2134 = vmul.f32 %v1177, %v2095
        %v2135 = vmul.f32 %v1192, %v2096
        %v2136 = vmul.f32 %v1207, %v2097
        %v2137 = vmul.f32 %v1222, %v2098
        %v2138 = vmul.f32 %v1237, %v2099
        %v2139 = vmul.f32 %v1252, %v2100
        %v2140 = vmul.f32 %v1267, %v2101
        %v2141 = vmul.f32 %v1282, %v2102
        %v2142 = vmul.f32 %v1297, %v2103
        %v2143 = vmul.f32 %v1312, %v2104
        %v2144 = vmul.f32 %v1327, %v2105
        %v2145 = vmul.f32 %v1342, %v2106
        %v2146 = vmul.f32 %v1357, %v2107
        %v2147 = vmul.f32 %v1372, %v2108
        %v2148 = vmul.f32 %v1387, %v2109
        %v2149 = vmul.f32 %v1402, %v2110
        %v2150 = vmul.f32 %v1417, %v2111
        %v2151 = vmul.f32 %v1432, %v2112
        %v2152 = vmul.f32 %v1447, %v2113
        %v2153 = vmul.f32 %v1462, %v2114
        %v2154 = vmul.f32 %v1477, %v2115
        %v2155 = vmul.f32 %v1492, %v2116
        %v2156 = vadd.f32 %v2117, -1.2655122
        %v2157 = vadd.f32 %v2118, -1.2655122
        %v2158 = vadd.f32 %v2119, -1.2655122
        %v2159 = vadd.f32 %v2120, -1.2655122
        %v2160 = vadd.f32 %v2121, -1.2655122
        %v2161 = vadd.f32 %v2122, -1.2655122
        %v2162 = vadd.f32 %v2123, -1.2655122
        %v2163 = vadd.f32 %v2124, -1.2655122
        %v2164 = vadd.f32 %v2125, -1.2655122
        %v2165 = vadd.f32 %v2126, -1.2655122
        %v2166 = vadd.f32 %v2127, -1.2655122
        %v2167 = vadd.f32 %v2128, -1.2655122
        %v2168 = vadd.f32 %v2129, -1.2655122
        %v2169 = vadd.f32 %v2130, -1.2655122
        %v2170 = vadd.f32 %v2131, -1.2655122
        %v2171 = vadd.f32 %v2132, -1.2655122
        %v2172 = vadd.f32 %v2133, -1.2655122
        %v2173 = vadd.f32 %v2134, -1.2655122
        %v2174 = vadd.f32 %v2135, -1.2655122
        %v2175 = vadd.f32 %v2136, -1.2655122
        %v2176 = vadd.f32 %v2137, -1.2655122
        %v2177 = vadd.f32 %v2138, -1.2655122
        %v2178 = vadd.f32 %v2139, -1.2655122
        %v2179 = vadd.f32 %v2140, -1.2655122
        %v2180 = vadd.f32 %v2141, -1.2655122
        %v2181 = vadd.f32 %v2142, -1.2655122
        %v2182 = vadd.f32 %v2143, -1.2655122
        %v2183 = vadd.f32 %v2144, -1.2655122
        %v2184 = vadd.f32 %v2145, -1.2655122
        %v2185 = vadd.f32 %v2146, -1.2655122
        %v2186 = vadd.f32 %v2147, -1.2655122
        %v2187 = vadd.f32 %v2148, -1.2655122
        %v2188 = vadd.f32 %v2149, -1.2655122
        %v2189 = vadd.f32 %v2150, -1.2655122
        %v2190 = vadd.f32 %v2151, -1.2655122
        %v2191 = vadd.f32 %v2152, -1.2655122
        %v2192 = vadd.f32 %v2153, -1.2655122
        %v2193 = vadd.f32 %v2154, -1.2655122
        %v2194 = vadd.f32 %v2155, -1.2655122
        %v2195 = vsub.f32 0.0, %v791
        %v2196 = vsub.f32 0.0, %v792
        %v2197 = vsub.f32 0.0, %v793
        %v2198 = vsub.f32 0.0, %v794
        %v2199 = vsub.f32 0.0, %v795
        %v2200 = vsub.f32 0.0, %v796
        %v2201 = vsub.f32 0.0, %v797
        %v2202 = vsub.f32 0.0, %v798
        %v2203 = vsub.f32 0.0, %v799
        %v2204 = vsub.f32 0.0, %v800
        %v2205 = vsub.f32 0.0, %v801
        %v2206 = vsub.f32 0.0, %v802
        %v2207 = vsub.f32 0.0, %v803
        %v2208 = vsub.f32 0.0, %v804
        %v2209 = vsub.f32 0.0, %v805
        %v2210 = vsub.f32 0.0, %v806
        %v2211 = vsub.f32 0.0, %v807
        %v2212 = vsub.f32 0.0, %v808
        %v2213 = vsub.f32 0.0, %v809
        %v2214 = vsub.f32 0.0, %v810
        %v2215 = vsub.f32 0.0, %v811
        %v2216 = vsub.f32 0.0, %v812
        %v2217 = vsub.f32 0.0, %v813
        %v2218 = vsub.f32 0.0, %v814
        %v2219 = vsub.f32 0.0, %v815
        %v2220 = vsub.f32 0.0, %v816
        %v2221 = vsub.f32 0.0, %v817
        %v2222 = vsub.f32 0.0, %v818
        %v2223 = vsub.f32 0.0, %v819
        %v2224 = vsub.f32 0.0, %v820
        %v2225 = vsub.f32 0.0, %v821
        %v2226 = vsub.f32 0.0, %v822
        %v2227 = vsub.f32 0.0, %v823
        %v2228 = vsub.f32 0.0, %v824
        %v2229 = vsub.f32 0.0, %v825
        %v2230 = vsub.f32 0.0, %v826
        %v2231 = vsub.f32 0.0, %v827
        %v2232 = vsub.f32 0.0, %v828
        %v2233 = vsub.f32 0.0, %v829
        %v2234 = vmul.f32 %v2195, %v791
        %v2235 = vmul.f32 %v2196, %v792
        %v2236 = vmul.f32 %v2197, %v793
        %v2237 = vmul.f32 %v2198, %v794
        %v2238 = vmul.f32 %v2199, %v795
        %v2239 = vmul.f32 %v2200, %v796
        %v2240 = vmul.f32 %v2201, %v797
        %v2241 = vmul.f32 %v2202, %v798
        %v2242 = vmul.f32 %v2203, %v799
        %v2243 = vmul.f32 %v2204, %v800
        %v2244 = vmul.f32 %v2205, %v801
        %v2245 = vmul.f32 %v2206, %v802
        %v2246 = vmul.f32 %v2207, %v803
        %v2247 = vmul.f32 %v2208, %v804
        %v2248 = vmul.f32 %v2209, %v805
        %v2249 = vmul.f32 %v2210, %v806
        %v2250 = vmul.f32 %v2211, %v807
        %v2251 = vmul.f32 %v2212, %v808
        %v2252 = vmul.f32 %v2213, %v809
        %v2253 = vmul.f32 %v2214, %v810
        %v2254 = vmul.f32 %v2215, %v811
        %v2255 = vmul.f32 %v2216, %v812
        %v2256 = vmul.f32 %v2217, %v813
        %v2257 = vmul.f32 %v2218, %v814
        %v2258 = vmul.f32 %v2219, %v815
        %v2259 = vmul.f32 %v2220, %v816
        %v2260 = vmul.f32 %v2221, %v817
        %v2261 = vmul.f32 %v2222, %v818
        %v2262 = vmul.f32 %v2223, %v819
        %v2263 = vmul.f32 %v2224, %v820
        %v2264 = vmul.f32 %v2225, %v821
        %v2265 = vmul.f32 %v2226, %v822
        %v2266 = vmul.f32 %v2227, %v823
        %v2267 = vmul.f32 %v2228, %v824
        %v2268 = vmul.f32 %v2229, %v825
        %v2269 = vmul.f32 %v2230, %v826
        %v2270 = vmul.f32 %v2231, %v827
        %v2271 = vmul.f32 %v2232, %v828
        %v2272 = vmul.f32 %v2233, %v829
        %v2273 = vadd.f32 %v2234, %v2156
        %v2274 = vadd.f32 %v2235, %v2157
        %v2275 = vadd.f32 %v2236, %v2158
        %v2276 = vadd.f32 %v2237, %v2159
        %v2277 = vadd.f32 %v2238, %v2160
        %v2278 = vadd.f32 %v2239, %v2161
        %v2279 = vadd.f32 %v2240, %v2162
        %v2280 = vadd.f32 %v2241, %v2163
        %v2281 = vadd.f32 %v2242, %v2164
        %v2282 = vadd.f32 %v2243, %v2165
        %v2283 = vadd.f32 %v2244, %v2166
        %v2284 = vadd.f32 %v2245, %v2167
        %v2285 = vadd.f32 %v2246, %v2168
        %v2286 = vadd.f32 %v2247, %v2169
        %v2287 = vadd.f32 %v2248, %v2170
        %v2288 = vadd.f32 %v2249, %v2171
        %v2289 = vadd.f32 %v2250, %v2172
        %v2290 = vadd.f32 %v2251, %v2173
        %v2291 = vadd.f32 %v2252, %v2174
        %v2292 = vadd.f32 %v2253, %v2175
        %v2293 = vadd.f32 %v2254, %v2176
        %v2294 = vadd.f32 %v2255, %v2177
        %v2295 = vadd.f32 %v2256, %v2178
        %v2296 = vadd.f32 %v2257, %v2179
        %v2297 = vadd.f32 %v2258, %v2180
        %v2298 = vadd.f32 %v2259, %v2181
        %v2299 = vadd.f32 %v2260, %v2182
        %v2300 = vadd.f32 %v2261, %v2183
        %v2301 = vadd.f32 %v2262, %v2184
        %v2302 = vadd.f32 %v2263, %v2185
        %v2303 = vadd.f32 %v2264, %v2186
        %v2304 = vadd.f32 %v2265, %v2187
        %v2305 = vadd.f32 %v2266, %v2188
        %v2306 = vadd.f32 %v2267, %v2189
        %v2307 = vadd.f32 %v2268, %v2190
        %v2308 = vadd.f32 %v2269, %v2191
        %v2309 = vadd.f32 %v2270, %v2192
        %v2310 = vadd.f32 %v2271, %v2193
        %v2311 = vadd.f32 %v2272, %v2194
        %v2312 = vmul.f32 %v2273, 1.442695
        %v2313 = vpow.pop %v2312
        %v2314 = vmul.f32 %v2274, 1.442695
        %v2315 = vpow.pop %v2314
        %v2316 = vmul.f32 %v2275, 1.442695
        %v2317 = vpow.pop %v2316
        %v2318 = vmul.f32 %v2276, 1.442695
        %v2319 = vpow.pop %v2318
        %v2320 = vmul.f32 %v2277, 1.442695
        %v2321 = vpow.pop %v2320
        %v2322 = vmul.f32 %v2278, 1.442695
        %v2323 = vpow.pop %v2322
        %v2324 = vmul.f32 %v2279, 1.442695
        %v2325 = vpow.pop %v2324
        %v2326 = vmul.f32 %v2280, 1.442695
        %v2327 = vpow.pop %v2326
        %v2328 = vmul.f32 %v2281, 1.442695
        %v2329 = vpow.pop %v2328
        %v2330 = vmul.f32 %v2282, 1.442695
        %v2331 = vpow.pop %v2330
        %v2332 = vmul.f32 %v2283, 1.442695
        %v2333 = vpow.pop %v2332
        %v2334 = vmul.f32 %v2284, 1.442695
        %v2335 = vpow.pop %v2334
        %v2336 = vmul.f32 %v2285, 1.442695
        %v2337 = vpow.pop %v2336
        %v2338 = vmul.f32 %v2286, 1.442695
        %v2339 = vpow.pop %v2338
        %v2340 = vmul.f32 %v2287, 1.442695
        %v2341 = vpow.pop %v2340
        %v2342 = vmul.f32 %v2288, 1.442695
        %v2343 = vpow.pop %v2342
        %v2344 = vmul.f32 %v2289, 1.442695
        %v2345 = vpow.pop %v2344
        %v2346 = vmul.f32 %v2290, 1.442695
        %v2347 = vpow.pop %v2346
        %v2348 = vmul.f32 %v2291, 1.442695
        %v2349 = vpow.pop %v2348
        %v2350 = vmul.f32 %v2292, 1.442695
        %v2351 = vpow.pop %v2350
        %v2352 = vmul.f32 %v2293, 1.442695
        %v2353 = vpow.pop %v2352
        %v2354 = vmul.f32 %v2294, 1.442695
        %v2355 = vpow.pop %v2354
        %v2356 = vmul.f32 %v2295, 1.442695
        %v2357 = vpow.pop %v2356
        %v2358 = vmul.f32 %v2296, 1.442695
        %v2359 = vpow.pop %v2358
        %v2360 = vmul.f32 %v2297, 1.442695
        %v2361 = vpow.pop %v2360
        %v2362 = vmul.f32 %v2298, 1.442695
        %v2363 = vpow.pop %v2362
        %v2364 = vmul.f32 %v2299, 1.442695
        %v2365 = vpow.pop %v2364
        %v2366 = vmul.f32 %v2300, 1.442695
        %v2367 = vpow.pop %v2366
        %v2368 = vmul.f32 %v2301, 1.442695
        %v2369 = vpow.pop %v2368
        %v2370 = vmul.f32 %v2302, 1.442695
        %v2371 = vpow.pop %v2370
        %v2372 = vmul.f32 %v2303, 1.442695
        %v2373 = vpow.pop %v2372
        %v2374 = vmul.f32 %v2304, 1.442695
        %v2375 = vpow.pop %v2374
        %v2376 = vmul.f32 %v2305, 1.442695
        %v2377 = vpow.pop %v2376
        %v2378 = vmul.f32 %v2306, 1.442695
        %v2379 = vpow.pop %v2378
        %v2380 = vmul.f32 %v2307, 1.442695
        %v2381 = vpow.pop %v2380
        %v2382 = vmul.f32 %v2308, 1.442695
        %v2383 = vpow.pop %v2382
        %v2384 = vmul.f32 %v2309, 1.442695
        %v2385 = vpow.pop %v2384
        %v2386 = vmul.f32 %v2310, 1.442695
        %v2387 = vpow.pop %v2386
        %v2388 = vmul.f32 %v2311, 1.442695
        %v2389 = vpow.pop %v2388
        %v2390 = vmul.f32 %v922, %v2313
        %v2391 = vmul.f32 %v937, %v2315
        %v2392 = vmul.f32 %v952, %v2317
        %v2393 = vmul.f32 %v967, %v2319
        %v2394 = vmul.f32 %v982, %v2321
        %v2395 = vmul.f32 %v997, %v2323
        %v2396 = vmul.f32 %v1012, %v2325
        %v2397 = vmul.f32 %v1027, %v2327
        %v2398 = vmul.f32 %v1042, %v2329
        %v2399 = vmul.f32 %v1057, %v2331
        %v2400 = vmul.f32 %v1072, %v2333
        %v2401 = vmul.f32 %v1087, %v2335
        %v2402 = vmul.f32 %v1102, %v2337
        %v2403 = vmul.f32 %v1117, %v2339
        %v2404 = vmul.f32 %v1132, %v2341
        %v2405 = vmul.f32 %v1147, %v2343
        %v2406 = vmul.f32 %v1162, %v2345
        %v2407 = vmul.f32 %v1177, %v2347
        %v2408 = vmul.f32 %v1192, %v2349
        %v2409 = vmul.f32 %v1207, %v2351
        %v2410 = vmul.f32 %v1222, %v2353
        %v2411 = vmul.f32 %v1237, %v2355
        %v2412 = vmul.f32 %v1252, %v2357
        %v2413 = vmul.f32 %v1267, %v2359
        %v2414 = vmul.f32 %v1282, %v2361
        %v2415 = vmul.f32 %v1297, %v2363
        %v2416 = vmul.f32 %v1312, %v2365
        %v2417 = vmul.f32 %v1327, %v2367
        %v2418 = vmul.f32 %v1342, %v2369
        %v2419 = vmul.f32 %v1357, %v2371
        %v2420 = vmul.f32 %v1372, %v2373
        %v2421 = vmul.f32 %v1387, %v2375
        %v2422 = vmul.f32 %v1402, %v2377
        %v2423 = vmul.f32 %v1417, %v2379
        %v2424 = vmul.f32 %v1432, %v2381
        %v2425 = vmul.f32 %v1447, %v2383
        %v2426 = vmul.f32 %v1462, %v2385
        %v2427 = vmul.f32 %v1477, %v2387
        %v2428 = vmul.f32 %v1492, %v2389
        %vm2429 = vcmp.ge.f32.partialorder %v602, 0.0
        %vm2430 = vcmp.ge.f32.partialorder %v658, 0.0
        %vm2431 = vcmp.ge.f32.partialorder %v714, 0.0
        %vm2432 = vcmp.ge.f32.partialorder %v605, 0.0
        %vm2433 = vcmp.ge.f32.partialorder %v661, 0.0
        %vm2434 = vcmp.ge.f32.partialorder %v717, 0.0
        %vm2435 = vcmp.ge.f32.partialorder %v608, 0.0
        %vm2436 = vcmp.ge.f32.partialorder %v664, 0.0
        %vm2437 = vcmp.ge.f32.partialorder %v720, 0.0
        %vm2438 = vcmp.ge.f32.partialorder %v611, 0.0
        %vm2439 = vcmp.ge.f32.partialorder %v667, 0.0
        %vm2440 = vcmp.ge.f32.partialorder %v723, 0.0
        %vm2441 = vcmp.ge.f32.partialorder %v614, 0.0
        %vm2442 = vcmp.ge.f32.partialorder %v670, 0.0
        %vm2443 = vcmp.ge.f32.partialorder %v726, 0.0
        %vm2444 = vcmp.ge.f32.partialorder %v617, 0.0
        %vm2445 = vcmp.ge.f32.partialorder %v673, 0.0
        %vm2446 = vcmp.ge.f32.partialorder %v729, 0.0
        %vm2447 = vcmp.ge.f32.partialorder %v620, 0.0
        %vm2448 = vcmp.ge.f32.partialorder %v676, 0.0
        %vm2449 = vcmp.ge.f32.partialorder %v732, 0.0
        %vm2450 = vcmp.ge.f32.partialorder %v623, 0.0
        %vm2451 = vcmp.ge.f32.partialorder %v679, 0.0
        %vm2452 = vcmp.ge.f32.partialorder %v735, 0.0
        %vm2453 = vcmp.ge.f32.partialorder %v626, 0.0
        %vm2454 = vcmp.ge.f32.partialorder %v682, 0.0
        %vm2455 = vcmp.ge.f32.partialorder %v738, 0.0
        %vm2456 = vcmp.ge.f32.partialorder %v629, 0.0
        %vm2457 = vcmp.ge.f32.partialorder %v685, 0.0
        %vm2458 = vcmp.ge.f32.partialorder %v741, 0.0
        %vm2459 = vcmp.ge.f32.partialorder %v632, 0.0
        %vm2460 = vcmp.ge.f32.partialorder %v688, 0.0
        %vm2461 = vcmp.ge.f32.partialorder %v744, 0.0
        %vm2462 = vcmp.ge.f32.partialorder %v635, 0.0
        %vm2463 = vcmp.ge.f32.partialorder %v691, 0.0
        %vm2464 = vcmp.ge.f32.partialorder %v747, 0.0
        %vm2465 = vcmp.ge.f32.partialorder %v638, 0.0
        %vm2466 = vcmp.ge.f32.partialorder %v694, 0.0
        %vm2467 = vcmp.ge.f32.partialorder %v750, 0.0
        %v2468 = vsub.f32 1.0, %v2390
        %v2469 = vsub.f32 1.0, %v2391
        %v2470 = vsub.f32 1.0, %v2392
        %v2471 = vsub.f32 1.0, %v2393
        %v2472 = vsub.f32 1.0, %v2394
        %v2473 = vsub.f32 1.0, %v2395
        %v2474 = vsub.f32 1.0, %v2396
        %v2475 = vsub.f32 1.0, %v2397
        %v2476 = vsub.f32 1.0, %v2398
        %v2477 = vsub.f32 1.0, %v2399
        %v2478 = vsub.f32 1.0, %v2400
        %v2479 = vsub.f32 1.0, %v2401
        %v2480 = vsub.f32 1.0, %v2402
        %v2481 = vsub.f32 1.0, %v2403
        %v2482 = vsub.f32 1.0, %v2404
        %v2483 = vsub.f32 1.0, %v2405
        %v2484 = vsub.f32 1.0, %v2406
        %v2485 = vsub.f32 1.0, %v2407
        %v2486 = vsub.f32 1.0, %v2408
        %v2487 = vsub.f32 1.0, %v2409
        %v2488 = vsub.f32 1.0, %v2410
        %v2489 = vsub.f32 1.0, %v2411
        %v2490 = vsub.f32 1.0, %v2412
        %v2491 = vsub.f32 1.0, %v2413
        %v2492 = vsub.f32 1.0, %v2414
        %v2493 = vsub.f32 1.0, %v2415
        %v2494 = vsub.f32 1.0, %v2416
        %v2495 = vsub.f32 1.0, %v2417
        %v2496 = vsub.f32 1.0, %v2418
        %v2497 = vsub.f32 1.0, %v2419
        %v2498 = vsub.f32 1.0, %v2420
        %v2499 = vsub.f32 1.0, %v2421
        %v2500 = vsub.f32 1.0, %v2422
        %v2501 = vsub.f32 1.0, %v2423
        %v2502 = vsub.f32 1.0, %v2424
        %v2503 = vsub.f32 1.0, %v2425
        %v2504 = vsub.f32 1.0, %v2426
        %v2505 = vsub.f32 1.0, %v2427
        %v2506 = vsub.f32 1.0, %v2428
        %v2507 = vsub.f32 %v2390, 1.0
        %v2508 = vsub.f32 %v2391, 1.0
        %v2509 = vsub.f32 %v2392, 1.0
        %v2510 = vsub.f32 %v2393, 1.0
        %v2511 = vsub.f32 %v2394, 1.0
        %v2512 = vsub.f32 %v2395, 1.0
        %v2513 = vsub.f32 %v2396, 1.0
        %v2514 = vsub.f32 %v2397, 1.0
        %v2515 = vsub.f32 %v2398, 1.0
        %v2516 = vsub.f32 %v2399, 1.0
        %v2517 = vsub.f32 %v2400, 1.0
        %v2518 = vsub.f32 %v2401, 1.0
        %v2519 = vsub.f32 %v2402, 1.0
        %v2520 = vsub.f32 %v2403, 1.0
        %v2521 = vsub.f32 %v2404, 1.0
        %v2522 = vsub.f32 %v2405, 1.0
        %v2523 = vsub.f32 %v2406, 1.0
        %v2524 = vsub.f32 %v2407, 1.0
        %v2525 = vsub.f32 %v2408, 1.0
        %v2526 = vsub.f32 %v2409, 1.0
        %v2527 = vsub.f32 %v2410, 1.0
        %v2528 = vsub.f32 %v2411, 1.0
        %v2529 = vsub.f32 %v2412, 1.0
        %v2530 = vsub.f32 %v2413, 1.0
        %v2531 = vsub.f32 %v2414, 1.0
        %v2532 = vsub.f32 %v2415, 1.0
        %v2533 = vsub.f32 %v2416, 1.0
        %v2534 = vsub.f32 %v2417, 1.0
        %v2535 = vsub.f32 %v2418, 1.0
        %v2536 = vsub.f32 %v2419, 1.0
        %v2537 = vsub.f32 %v2420, 1.0
        %v2538 = vsub.f32 %v2421, 1.0
        %v2539 = vsub.f32 %v2422, 1.0
        %v2540 = vsub.f32 %v2423, 1.0
        %v2541 = vsub.f32 %v2424, 1.0
        %v2542 = vsub.f32 %v2425, 1.0
        %v2543 = vsub.f32 %v2426, 1.0
        %v2544 = vsub.f32 %v2427, 1.0
        %v2545 = vsub.f32 %v2428, 1.0
        %v2546 = vsel %vm2429, %v2468, %v2507
        %v2547 = vsel %vm2430, %v2469, %v2508
        %v2548 = vsel %vm2431, %v2470, %v2509
        %v2549 = vsel %vm2432, %v2471, %v2510
        %v2550 = vsel %vm2433, %v2472, %v2511
        %v2551 = vsel %vm2434, %v2473, %v2512
        %v2552 = vsel %vm2435, %v2474, %v2513
        %v2553 = vsel %vm2436, %v2475, %v2514
        %v2554 = vsel %vm2437, %v2476, %v2515
        %v2555 = vsel %vm2438, %v2477, %v2516
        %v2556 = vsel %vm2439, %v2478, %v2517
        %v2557 = vsel %vm2440, %v2479, %v2518
        %v2558 = vsel %vm2441, %v2480, %v2519
        %v2559 = vsel %vm2442, %v2481, %v2520
        %v2560 = vsel %vm2443, %v2482, %v2521
        %v2561 = vsel %vm2444, %v2483, %v2522
        %v2562 = vsel %vm2445, %v2484, %v2523
        %v2563 = vsel %vm2446, %v2485, %v2524
        %v2564 = vsel %vm2447, %v2486, %v2525
        %v2565 = vsel %vm2448, %v2487, %v2526
        %v2566 = vsel %vm2449, %v2488, %v2527
        %v2567 = vsel %vm2450, %v2489, %v2528
        %v2568 = vsel %vm2451, %v2490, %v2529
        %v2569 = vsel %vm2452, %v2491, %v2530
        %v2570 = vsel %vm2453, %v2492, %v2531
        %v2571 = vsel %vm2454, %v2493, %v2532
        %v2572 = vsel %vm2455, %v2494, %v2533
        %v2573 = vsel %vm2456, %v2495, %v2534
        %v2574 = vsel %vm2457, %v2496, %v2535
        %v2575 = vsel %vm2458, %v2497, %v2536
        %v2576 = vsel %vm2459, %v2498, %v2537
        %v2577 = vsel %vm2460, %v2499, %v2538
        %v2578 = vsel %vm2461, %v2500, %v2539
        %v2579 = vsel %vm2462, %v2501, %v2540
        %v2580 = vsel %vm2463, %v2502, %v2541
        %v2581 = vsel %vm2464, %v2503, %v2542
        %v2582 = vsel %vm2465, %v2504, %v2543
        %v2583 = vsel %vm2466, %v2505, %v2544
        %v2584 = vsel %vm2467, %v2506, %v2545
        %v2585 = vmul.f32 %v602, 0.5
        %v2586 = vmul.f32 %v658, 0.5
        %v2587 = vmul.f32 %v714, 0.5
        %v2588 = vmul.f32 %v605, 0.5
        %v2589 = vmul.f32 %v661, 0.5
        %v2590 = vmul.f32 %v717, 0.5
        %v2591 = vmul.f32 %v608, 0.5
        %v2592 = vmul.f32 %v664, 0.5
        %v2593 = vmul.f32 %v720, 0.5
        %v2594 = vmul.f32 %v611, 0.5
        %v2595 = vmul.f32 %v667, 0.5
        %v2596 = vmul.f32 %v723, 0.5
        %v2597 = vmul.f32 %v614, 0.5
        %v2598 = vmul.f32 %v670, 0.5
        %v2599 = vmul.f32 %v726, 0.5
        %v2600 = vmul.f32 %v617, 0.5
        %v2601 = vmul.f32 %v673, 0.5
        %v2602 = vmul.f32 %v729, 0.5
        %v2603 = vmul.f32 %v620, 0.5
        %v2604 = vmul.f32 %v676, 0.5
        %v2605 = vmul.f32 %v732, 0.5
        %v2606 = vmul.f32 %v623, 0.5
        %v2607 = vmul.f32 %v679, 0.5
        %v2608 = vmul.f32 %v735, 0.5
        %v2609 = vmul.f32 %v626, 0.5
        %v2610 = vmul.f32 %v682, 0.5
        %v2611 = vmul.f32 %v738, 0.5
        %v2612 = vmul.f32 %v629, 0.5
        %v2613 = vmul.f32 %v685, 0.5
        %v2614 = vmul.f32 %v741, 0.5
        %v2615 = vmul.f32 %v632, 0.5
        %v2616 = vmul.f32 %v688, 0.5
        %v2617 = vmul.f32 %v744, 0.5
        %v2618 = vmul.f32 %v635, 0.5
        %v2619 = vmul.f32 %v691, 0.5
        %v2620 = vmul.f32 %v747, 0.5
        %v2621 = vmul.f32 %v638, 0.5
        %v2622 = vmul.f32 %v694, 0.5
        %v2623 = vmul.f32 %v750, 0.5
        %v2624 = vadd.f32 %v2546, 1.0
        %v2625 = vadd.f32 %v2547, 1.0
        %v2626 = vadd.f32 %v2548, 1.0
        %v2627 = vadd.f32 %v2549, 1.0
        %v2628 = vadd.f32 %v2550, 1.0
        %v2629 = vadd.f32 %v2551, 1.0
        %v2630 = vadd.f32 %v2552, 1.0
        %v2631 = vadd.f32 %v2553, 1.0
        %v2632 = vadd.f32 %v2554, 1.0
        %v2633 = vadd.f32 %v2555, 1.0
        %v2634 = vadd.f32 %v2556, 1.0
        %v2635 = vadd.f32 %v2557, 1.0
        %v2636 = vadd.f32 %v2558, 1.0
        %v2637 = vadd.f32 %v2559, 1.0
        %v2638 = vadd.f32 %v2560, 1.0
        %v2639 = vadd.f32 %v2561, 1.0
        %v2640 = vadd.f32 %v2562, 1.0
        %v2641 = vadd.f32 %v2563, 1.0
        %v2642 = vadd.f32 %v2564, 1.0
        %v2643 = vadd.f32 %v2565, 1.0
        %v2644 = vadd.f32 %v2566, 1.0
        %v2645 = vadd.f32 %v2567, 1.0
        %v2646 = vadd.f32 %v2568, 1.0
        %v2647 = vadd.f32 %v2569, 1.0
        %v2648 = vadd.f32 %v2570, 1.0
        %v2649 = vadd.f32 %v2571, 1.0
        %v2650 = vadd.f32 %v2572, 1.0
        %v2651 = vadd.f32 %v2573, 1.0
        %v2652 = vadd.f32 %v2574, 1.0
        %v2653 = vadd.f32 %v2575, 1.0
        %v2654 = vadd.f32 %v2576, 1.0
        %v2655 = vadd.f32 %v2577, 1.0
        %v2656 = vadd.f32 %v2578, 1.0
        %v2657 = vadd.f32 %v2579, 1.0
        %v2658 = vadd.f32 %v2580, 1.0
        %v2659 = vadd.f32 %v2581, 1.0
        %v2660 = vadd.f32 %v2582, 1.0
        %v2661 = vadd.f32 %v2583, 1.0
        %v2662 = vadd.f32 %v2584, 1.0
        %v2663 = vmul.f32 %v2585, %v2624
        %v2664 = vmul.f32 %v2586, %v2625
        %v2665 = vmul.f32 %v2587, %v2626
        %v2666 = vmul.f32 %v2588, %v2627
        %v2667 = vmul.f32 %v2589, %v2628
        %v2668 = vmul.f32 %v2590, %v2629
        %v2669 = vmul.f32 %v2591, %v2630
        %v2670 = vmul.f32 %v2592, %v2631
        %v2671 = vmul.f32 %v2593, %v2632
        %v2672 = vmul.f32 %v2594, %v2633
        %v2673 = vmul.f32 %v2595, %v2634
        %v2674 = vmul.f32 %v2596, %v2635
        %v2675 = vmul.f32 %v2597, %v2636
        %v2676 = vmul.f32 %v2598, %v2637
        %v2677 = vmul.f32 %v2599, %v2638
        %v2678 = vmul.f32 %v2600, %v2639
        %v2679 = vmul.f32 %v2601, %v2640
        %v2680 = vmul.f32 %v2602, %v2641
        %v2681 = vmul.f32 %v2603, %v2642
        %v2682 = vmul.f32 %v2604, %v2643
        %v2683 = vmul.f32 %v2605, %v2644
        %v2684 = vmul.f32 %v2606, %v2645
        %v2685 = vmul.f32 %v2607, %v2646
        %v2686 = vmul.f32 %v2608, %v2647
        %v2687 = vmul.f32 %v2609, %v2648
        %v2688 = vmul.f32 %v2610, %v2649
        %v2689 = vmul.f32 %v2611, %v2650
        %v2690 = vmul.f32 %v2612, %v2651
        %v2691 = vmul.f32 %v2613, %v2652
        %v2692 = vmul.f32 %v2614, %v2653
        %v2693 = vmul.f32 %v2615, %v2654
        %v2694 = vmul.f32 %v2616, %v2655
        %v2695 = vmul.f32 %v2617, %v2656
        %v2696 = vmul.f32 %v2618, %v2657
        %v2697 = vmul.f32 %v2619, %v2658
        %v2698 = vmul.f32 %v2620, %v2659
        %v2699 = vmul.f32 %v2621, %v2660
        %v2700 = vmul.f32 %v2622, %v2661
        %v2701 = vmul.f32 %v2623, %v2662
        %v2702 = vld [vmem:[%s7] sm:$0xff]
        %v2703 = vld [vmem:[%s7 + $0x8] sm:$0xff]
        %v2704 = vld [vmem:[%s7 + $0x10] sm:$0xff]
        %v2705 = vld [vmem:[%s7 + $0x18] sm:$0xff]
        %v2706 = vld [vmem:[%s7 + $0x20] sm:$0xff]
        %v2707 = vld [vmem:[%s7 + $0x28] sm:$0xff]
        %v2708 = vld [vmem:[%s7 + $0x30] sm:$0xff]
        %v2709 = vld [vmem:[%s7 + $0x38] sm:$0xff]
        %v2710 = vld [vmem:[%s7 + $0x40] sm:$0xff]
        %v2711 = vld [vmem:[%s7 + $0x48] sm:$0xff]
        %v2712 = vld [vmem:[%s7 + $0x50] sm:$0xff]
        %v2713 = vld [vmem:[%s7 + $0x58] sm:$0xff]
        %v2714 = vld [vmem:[%s7 + $0x60] sm:$0xff]
        %v2715 = vld [vmem:[%s7 + $0x68] sm:$0xff]
        %v2716 = vld [vmem:[%s7 + $0x70] sm:$0xff]
        %v2717 = vld [vmem:[%s7 + $0x78] sm:$0xff]
        %v2718 = vld [vmem:[%s5] sm:$0xff]
        %v2719 = vld [vmem:[%s5 + $0x8] sm:$0x3f]
        %vm2720 = vcmask 801792
        %v2722 = vsel %vm2720, %v2718, 0
        %v2725 = vsel %vm2720, %v2719, 0
        %vm2727 = vcmask 1041408
        %v2729 = vsel %vm2727, %v2699, 0
        %2731 = vmatpush.msra.mxu0 0.0
        %2732 = vmatpush.msra.mxu0 0.0
        %2733 = vmatpush.msra.mxu0 0.0
        %2734 = vmatpush.msra.mxu0 %v2729
        %2735 = vmatpush.msra.mxu0 %v2696
        %2736 = vmatpush.msra.mxu0 %v2693
        %2737 = vmatpush.msra.mxu0 %v2690
        %2738 = vmatpush.msra.mxu0 %v2687
        %2739 = vmatpush.msra.mxu0 %v2684
        %2740 = vmatpush.msra.mxu0 %v2681
        %2741 = vmatpush.msra.mxu0 %v2678
        %2742 = vmatpush.msra.mxu0 %v2675
        %2743 = vmatpush.msra.mxu0 %v2672
        %2744 = vmatpush.msra.mxu0 %v2669
        %2745 = vmatpush.msra.mxu0 %v2666
        %2746 = vmatpush.msra.mxu0 %v2663
        %2747 = vmatmul.f32.gmra.mxu0 %v2722
        %v2748 = vpop.f32.mrf.mxu0
        %v2749 = vadd.f32 0.0, %v2748
        %2750 = vmatmul.f32.gmra.mxu0 %v2725
        %v2751 = vpop.f32.mrf.mxu0
        %v2752 = vadd.f32 0.0, %v2751
        %2753 = vdwg.mxu0
        %2754 = vmatpush.msra.mxu0 %v2717
        %2755 = vmatpush.msra.mxu0 %v2716
        %2756 = vmatpush.msra.mxu0 %v2715
        %2757 = vmatpush.msra.mxu0 %v2714
        %2758 = vmatpush.msra.mxu0 %v2713
        %2759 = vmatpush.msra.mxu0 %v2712
        %2760 = vmatpush.msra.mxu0 %v2711
        %2761 = vmatpush.msra.mxu0 %v2710
        %2762 = vmatpush.msra.mxu0 %v2709
        %2763 = vmatpush.msra.mxu0 %v2708
        %2764 = vmatpush.msra.mxu0 %v2707
        %2765 = vmatpush.msra.mxu0 %v2706
        %2766 = vmatpush.msra.mxu0 %v2705
        %2767 = vmatpush.msra.mxu0 %v2704
        %2768 = vmatpush.msra.mxu0 %v2703
        %2769 = vmatpush.msra.mxu0 %v2702
        %2770 = vmatmul.f32.gmra.mxu0 %v2749
        %v2771 = vpop.f32.mrf.mxu0
        %v2772 = vadd.f32 0.0, %v2771
        %2773 = vmatmul.f32.gmra.mxu0 %v2752
        %v2774 = vpop.f32.mrf.mxu0
        %v2775 = vadd.f32 0.0, %v2774
        %2776 = vdwg.mxu0
        %s2777 = scalar_lea.vmem %s5, 16
        %v2778 = vld [vmem:[%s2777] sm:$0xff]
        %v2779 = vld [vmem:[%s2777 + $0x8] sm:$0x3f]
        %v2781 = vsel %vm2720, %v2778, 0
        %v2784 = vsel %vm2720, %v2779, 0
        %v2787 = vsel %vm2727, %v2700, 0
        %2789 = vmatpush.msra.mxu0 0.0
        %2790 = vmatpush.msra.mxu0 0.0
        %2791 = vmatpush.msra.mxu0 0.0
        %2792 = vmatpush.msra.mxu0 %v2787
        %2793 = vmatpush.msra.mxu0 %v2697
        %2794 = vmatpush.msra.mxu0 %v2694
        %2795 = vmatpush.msra.mxu0 %v2691
        %2796 = vmatpush.msra.mxu0 %v2688
        %2797 = vmatpush.msra.mxu0 %v2685
        %2798 = vmatpush.msra.mxu0 %v2682
        %2799 = vmatpush.msra.mxu0 %v2679
        %2800 = vmatpush.msra.mxu0 %v2676
        %2801 = vmatpush.msra.mxu0 %v2673
        %2802 = vmatpush.msra.mxu0 %v2670
        %2803 = vmatpush.msra.mxu0 %v2667
        %2804 = vmatpush.msra.mxu0 %v2664
        %2805 = vmatmul.f32.gmra.mxu0 %v2781
        %v2806 = vpop.f32.mrf.mxu0
        %v2807 = vadd.f32 0.0, %v2806
        %2808 = vmatmul.f32.gmra.mxu0 %v2784
        %v2809 = vpop.f32.mrf.mxu0
        %v2810 = vadd.f32 0.0, %v2809
        %2811 = vdwg.mxu0
        %2812 = vmatpush.msra.mxu0 %v2717
        %2813 = vmatpush.msra.mxu0 %v2716
        %2814 = vmatpush.msra.mxu0 %v2715
        %2815 = vmatpush.msra.mxu0 %v2714
        %2816 = vmatpush.msra.mxu0 %v2713
        %2817 = vmatpush.msra.mxu0 %v2712
        %2818 = vmatpush.msra.mxu0 %v2711
        %2819 = vmatpush.msra.mxu0 %v2710
        %2820 = vmatpush.msra.mxu0 %v2709
        %2821 = vmatpush.msra.mxu0 %v2708
        %2822 = vmatpush.msra.mxu0 %v2707
        %2823 = vmatpush.msra.mxu0 %v2706
        %2824 = vmatpush.msra.mxu0 %v2705
        %2825 = vmatpush.msra.mxu0 %v2704
        %2826 = vmatpush.msra.mxu0 %v2703
        %2827 = vmatpush.msra.mxu0 %v2702
        %2828 = vmatmul.f32.gmra.mxu0 %v2807
        %v2829 = vpop.f32.mrf.mxu0
        %v2830 = vadd.f32 0.0, %v2829
        %2831 = vmatmul.f32.gmra.mxu0 %v2810
        %v2832 = vpop.f32.mrf.mxu0
        %v2833 = vadd.f32 0.0, %v2832
        %2834 = vdwg.mxu0
        %v2835 = vld [vmem:[%s11] sm:$0x3]
        %v2837 = vsel %vm2720, %v2835, 0
        %v2840 = vsel %vm2727, %v2701, 0
        %2842 = vmatpush.msra.mxu0 0.0
        %2843 = vmatpush.msra.mxu0 0.0
        %2844 = vmatpush.msra.mxu0 0.0
        %2845 = vmatpush.msra.mxu0 %v2840
        %2846 = vmatpush.msra.mxu0 %v2698
        %2847 = vmatpush.msra.mxu0 %v2695
        %2848 = vmatpush.msra.mxu0 %v2692
        %2849 = vmatpush.msra.mxu0 %v2689
        %2850 = vmatpush.msra.mxu0 %v2686
        %2851 = vmatpush.msra.mxu0 %v2683
        %2852 = vmatpush.msra.mxu0 %v2680
        %2853 = vmatpush.msra.mxu0 %v2677
        %2854 = vmatpush.msra.mxu0 %v2674
        %2855 = vmatpush.msra.mxu0 %v2671
        %2856 = vmatpush.msra.mxu0 %v2668
        %2857 = vmatpush.msra.mxu0 %v2665
        %2858 = vmatmul.f32.gmra.mxu0 %v2837
        %v2859 = vpop.f32.mrf.mxu0
        %v2860 = vadd.f32 0.0, %v2859
        %2861 = vdwg.mxu0
        %s2862 = sld [smem:[#allocation2]]
        %v2863 = vstv %s2862
        %v2864 = vmul.f32 %v2863, %v2772
        %v2865 = vmul.f32 %v2863, %v2775
        %s2866 = sld [smem:[#allocation2 + $0x1]]
        %v2867 = vstv %s2866
        %v2868 = vadd.f32 %v2864, %v2867
        %v2869 = vadd.f32 %v2865, %v2867
        %v2870 = vxor.u32 %v2868, 2147483648
        %v2871 = vxor.u32 %v2869, 2147483648
        %v2872 = vmul.f32 %v2870, 1.442695
        %v2873 = vpow.pop %v2872
        %v2874 = vmul.f32 %v2871, 1.442695
        %v2875 = vpow.pop %v2874
        %v2876 = vadd.f32 %v2873, 1.0
        %v2877 = vadd.f32 %v2875, 1.0
        %v2878 = vrcp.pop %v2876
        %v2879 = vmul.f32 %v2876, %v2878
        %v2880 = vsub.f32 1.0, %v2879
        %v2881 = vmul.f32 %v2878, %v2880
        %v2882 = vadd.f32 %v2878, %v2881
        %vm2883 = vweird.f32 %v2876
        %vm2884 = vweird.f32 %v2878
        %vm2885 = vmor %vm2883, %vm2884
        %v2886 = vsel %vm2885, %v2878, %v2882
        %v2887 = vand.u32 2147483647, %v2876
        %vm2888 = vcmp.eq.f32.partialorder %v2887, 8.507059e+37
        %v2889 = vand.u32 %v2876, 2147483648
        %v2890 = vor.u32 1.1754944e-38, %v2889
        %v2891 = vsel %vm2888, %v2890, %v2886
        %v2892 = vmul.f32 1.0, %v2891
        %v2893 = vrcp.pop %v2877
        %v2894 = vmul.f32 %v2877, %v2893
        %v2895 = vsub.f32 1.0, %v2894
        %v2896 = vmul.f32 %v2893, %v2895
        %v2897 = vadd.f32 %v2893, %v2896
        %vm2898 = vweird.f32 %v2877
        %vm2899 = vweird.f32 %v2893
        %vm2900 = vmor %vm2898, %vm2899
        %v2901 = vsel %vm2900, %v2893, %v2897
        %v2902 = vand.u32 2147483647, %v2877
        %vm2903 = vcmp.eq.f32.partialorder %v2902, 8.507059e+37
        %v2904 = vand.u32 %v2877, 2147483648
        %v2905 = vor.u32 1.1754944e-38, %v2904
        %v2906 = vsel %vm2903, %v2905, %v2901
        %v2907 = vmul.f32 1.0, %v2906
        %vm2910 = vcmask 1040384
        %v2911 = vrot.slane %v2892, 7
        %v2912 = vrot.slane %v2907, 7
        %v2913 = vsel %vm2910, %v2911, %v2912
        %v2916 = vsel %vm2910, 0.0, %v2911
        %2918 = vset.pattern.permute.xlu0 0
        %2919 = vperm.xlu0 %2918, %v523
        %v2920 = vpop.permute.xlu0 %2919
        %2923 = vset.pattern.permute.xlu0 0
        %2924 = vperm.xlu0 %2923, %v524
        %v2925 = vpop.permute.xlu0 %2924
        %v2927 = vmul.f32 %v2916, %v2920
        %v2928 = vmul.f32 %v2913, %v2925
        %vm2929 = vcmask 1046528
        %v2930 = vrot.slane %v2892, 1
        %v2931 = vrot.slane %v2907, 1
        %v2932 = vsel %vm2929, %v2930, %v2931
        %vm2935 = vcmask 1044480
        %v2936 = vsel %vm2935, %v2931, 0.0
        %2938 = vset.pattern.permute.xlu0 0
        %2939 = vperm.xlu0 %2938, %v526
        %v2940 = vpop.permute.xlu0 %2939
        %2943 = vset.pattern.permute.xlu0 0
        %2944 = vperm.xlu0 %2943, %v527
        %v2945 = vpop.permute.xlu0 %2944
        %v2947 = vmul.f32 %v2932, %v2940
        %v2948 = vmul.f32 %v2936, %v2945
        %s2949 = sld [smem:[#allocation2 + $0x2]]
        %v2950 = vstv %s2949
        %v2951 = vmul.f32 %v2950, %v2927
        %v2952 = vmul.f32 %v2950, %v2928
        %s2953 = sld [smem:[#allocation2 + $0x3]]
        %v2954 = vstv %s2953
        %v2955 = vmul.f32 %v2954, %v2892
        %v2956 = vmul.f32 %v2954, %v2907
        %v2957 = vadd.f32 %v2951, %v2955
        %v2958 = vadd.f32 %v2952, %v2956
        %s2959 = sld [smem:[#allocation2 + $0x4]]
        %v2960 = vstv %s2959
        %v2961 = vmul.f32 %v2960, %v2947
        %v2962 = vmul.f32 %v2960, %v2948
        %v2963 = vadd.f32 %v2957, %v2961
        %v2964 = vadd.f32 %v2958, %v2962
        %s2965 = sld [smem:[#allocation2 + $0x5]]
        %v2966 = vstv %s2965
        %v2967 = vadd.f32 %v2963, %v2966
        %v2968 = vadd.f32 %v2964, %v2966
        %v2969 = vxor.u32 %v2967, 2147483648
        %v2970 = vxor.u32 %v2968, 2147483648
        %v2971 = vmul.f32 %v2969, 1.442695
        %v2972 = vpow.pop %v2971
        %v2973 = vmul.f32 %v2970, 1.442695
        %v2974 = vpow.pop %v2973
        %v2975 = vadd.f32 %v2972, 1.0
        %v2976 = vadd.f32 %v2974, 1.0
        %v2977 = vrcp.pop %v2975
        %v2978 = vmul.f32 %v2975, %v2977
        %v2979 = vsub.f32 1.0, %v2978
        %v2980 = vmul.f32 %v2977, %v2979
        %v2981 = vadd.f32 %v2977, %v2980
        %vm2982 = vweird.f32 %v2975
        %vm2983 = vweird.f32 %v2977
        %vm2984 = vmor %vm2982, %vm2983
        %v2985 = vsel %vm2984, %v2977, %v2981
        %v2986 = vand.u32 2147483647, %v2975
        %vm2987 = vcmp.eq.f32.partialorder %v2986, 8.507059e+37
        %v2988 = vand.u32 %v2975, 2147483648
        %v2989 = vor.u32 1.1754944e-38, %v2988
        %v2990 = vsel %vm2987, %v2989, %v2985
        %v2991 = vmul.f32 1.0, %v2990
        %v2992 = vrcp.pop %v2976
        %v2993 = vmul.f32 %v2976, %v2992
        %v2994 = vsub.f32 1.0, %v2993
        %v2995 = vmul.f32 %v2992, %v2994
        %v2996 = vadd.f32 %v2992, %v2995
        %vm2997 = vweird.f32 %v2976
        %vm2998 = vweird.f32 %v2992
        %vm2999 = vmor %vm2997, %vm2998
        %v3000 = vsel %vm2999, %v2992, %v2996
        %v3001 = vand.u32 2147483647, %v2976
        %vm3002 = vcmp.eq.f32.partialorder %v3001, 8.507059e+37
        %v3003 = vand.u32 %v2976, 2147483648
        %v3004 = vor.u32 1.1754944e-38, %v3003
        %v3005 = vsel %vm3002, %v3004, %v3000
        %v3006 = vmul.f32 1.0, %v3005
        %s3007 = sld [smem:[#allocation2 + $0x6]]
        %v3008 = vstv %s3007
        %v3009 = vmul.f32 %v3008, %v2772
        %v3010 = vmul.f32 %v3008, %v2775
        %s3011 = sld [smem:[#allocation2 + $0x7]]
        %v3012 = vstv %s3011
        %v3013 = vmul.f32 %v3012, %v2830
        %v3014 = vmul.f32 %v3012, %v2833
        %v3015 = vadd.f32 %v3009, %v3013
        %v3016 = vadd.f32 %v3010, %v3014
        %s3017 = sld [smem:[#allocation2 + $0x8]]
        %v3018 = vstv %s3017
        %v3019 = vadd.f32 %v3015, %v3018
        %v3020 = vadd.f32 %v3016, %v3018
        %v3021 = vxor.u32 %v3019, 2147483648
        %v3022 = vxor.u32 %v3020, 2147483648
        %v3023 = vmul.f32 %v3021, 1.442695
        %v3024 = vpow.pop %v3023
        %v3025 = vmul.f32 %v3022, 1.442695
        %v3026 = vpow.pop %v3025
        %v3027 = vadd.f32 %v3024, 1.0
        %v3028 = vadd.f32 %v3026, 1.0
        %v3029 = vrcp.pop %v3027
        %v3030 = vmul.f32 %v3027, %v3029
        %v3031 = vsub.f32 1.0, %v3030
        %v3032 = vmul.f32 %v3029, %v3031
        %v3033 = vadd.f32 %v3029, %v3032
        %vm3034 = vweird.f32 %v3027
        %vm3035 = vweird.f32 %v3029
        %vm3036 = vmor %vm3034, %vm3035
        %v3037 = vsel %vm3036, %v3029, %v3033
        %v3038 = vand.u32 2147483647, %v3027
        %vm3039 = vcmp.eq.f32.partialorder %v3038, 8.507059e+37
        %v3040 = vand.u32 %v3027, 2147483648
        %v3041 = vor.u32 1.1754944e-38, %v3040
        %v3042 = vsel %vm3039, %v3041, %v3037
        %v3043 = vmul.f32 1.0, %v3042
        %v3044 = vrcp.pop %v3028
        %v3045 = vmul.f32 %v3028, %v3044
        %v3046 = vsub.f32 1.0, %v3045
        %v3047 = vmul.f32 %v3044, %v3046
        %v3048 = vadd.f32 %v3044, %v3047
        %vm3049 = vweird.f32 %v3028
        %vm3050 = vweird.f32 %v3044
        %vm3051 = vmor %vm3049, %vm3050
        %v3052 = vsel %vm3051, %v3044, %v3048
        %v3053 = vand.u32 2147483647, %v3028
        %vm3054 = vcmp.eq.f32.partialorder %v3053, 8.507059e+37
        %v3055 = vand.u32 %v3028, 2147483648
        %v3056 = vor.u32 1.1754944e-38, %v3055
        %v3057 = vsel %vm3054, %v3056, %v3052
        %v3058 = vmul.f32 1.0, %v3057
        %v3061 = vrot.slane %v3043, 7
        %v3062 = vrot.slane %v3058, 7
        %v3063 = vsel %vm2910, %v3061, %v3062
        %v3066 = vsel %vm2910, 0.0, %v3061
        %v3067 = vmul.f32 %v3066, %v2920
        %v3068 = vmul.f32 %v3063, %v2925
        %v3069 = vrot.slane %v3043, 1
        %v3070 = vrot.slane %v3058, 1
        %v3071 = vsel %vm2929, %v3069, %v3070
        %v3074 = vsel %vm2935, %v3070, 0.0
        %v3075 = vmul.f32 %v3071, %v2940
        %v3076 = vmul.f32 %v3074, %v2945
        %s3077 = sld [smem:[#allocation2 + $0x9]]
        %v3078 = vstv %s3077
        %v3079 = vmul.f32 %v3078, %v3067
        %v3080 = vmul.f32 %v3078, %v3068
        %s3081 = sld [smem:[#allocation2 + $0xa]]
        %v3082 = vstv %s3081
        %v3083 = vmul.f32 %v3082, %v3043
        %v3084 = vmul.f32 %v3082, %v3058
        %v3085 = vadd.f32 %v3079, %v3083
        %v3086 = vadd.f32 %v3080, %v3084
        %s3087 = sld [smem:[#allocation2 + $0xb]]
        %v3088 = vstv %s3087
        %v3089 = vmul.f32 %v3088, %v3075
        %v3090 = vmul.f32 %v3088, %v3076
        %v3091 = vadd.f32 %v3085, %v3089
        %v3092 = vadd.f32 %v3086, %v3090
        %s3093 = sld [smem:[#allocation2 + $0xc]]
        %v3094 = vstv %s3093
        %v3095 = vadd.f32 %v3091, %v3094
        %v3096 = vadd.f32 %v3092, %v3094
        %v3097 = vxor.u32 %v3095, 2147483648
        %v3098 = vxor.u32 %v3096, 2147483648
        %v3099 = vmul.f32 %v3097, 1.442695
        %v3100 = vpow.pop %v3099
        %v3101 = vmul.f32 %v3098, 1.442695
        %v3102 = vpow.pop %v3101
        %v3103 = vadd.f32 %v3100, 1.0
        %v3104 = vadd.f32 %v3102, 1.0
        %v3105 = vrcp.pop %v3103
        %v3106 = vmul.f32 %v3103, %v3105
        %v3107 = vsub.f32 1.0, %v3106
        %v3108 = vmul.f32 %v3105, %v3107
        %v3109 = vadd.f32 %v3105, %v3108
        %vm3110 = vweird.f32 %v3103
        %vm3111 = vweird.f32 %v3105
        %vm3112 = vmor %vm3110, %vm3111
        %v3113 = vsel %vm3112, %v3105, %v3109
        %v3114 = vand.u32 2147483647, %v3103
        %vm3115 = vcmp.eq.f32.partialorder %v3114, 8.507059e+37
        %v3116 = vand.u32 %v3103, 2147483648
        %v3117 = vor.u32 1.1754944e-38, %v3116
        %v3118 = vsel %vm3115, %v3117, %v3113
        %v3119 = vmul.f32 1.0, %v3118
        %v3120 = vrcp.pop %v3104
        %v3121 = vmul.f32 %v3104, %v3120
        %v3122 = vsub.f32 1.0, %v3121
        %v3123 = vmul.f32 %v3120, %v3122
        %v3124 = vadd.f32 %v3120, %v3123
        %vm3125 = vweird.f32 %v3104
        %vm3126 = vweird.f32 %v3120
        %vm3127 = vmor %vm3125, %vm3126
        %v3128 = vsel %vm3127, %v3120, %v3124
        %v3129 = vand.u32 2147483647, %v3104
        %vm3130 = vcmp.eq.f32.partialorder %v3129, 8.507059e+37
        %v3131 = vand.u32 %v3104, 2147483648
        %v3132 = vor.u32 1.1754944e-38, %v3131
        %v3133 = vsel %vm3130, %v3132, %v3128
        %v3134 = vmul.f32 1.0, %v3133
        %v3135 = vld [vmem:[%s8] sm:$0xf]
        %v3136 = vld [vmem:[%s10] sm:$0x3]
        %vm3137 = vcmask 31744
        %v3139 = vsel %vm3137, %v2772, 0
        %v3142 = vsel %vm3137, %v2775, 0
        %vm3144 = vcmask 1043456
        %v3146 = vsel %vm3144, %v3135, 0
        %3148 = vmatpush.msra.mxu0 0.0
        %3149 = vmatpush.msra.mxu0 0.0
        %3150 = vmatpush.msra.mxu0 0.0
        %3151 = vmatpush.msra.mxu0 0.0
        %3152 = vmatpush.msra.mxu0 0.0
        %3153 = vmatpush.msra.mxu0 0.0
        %3154 = vmatpush.msra.mxu0 0.0
        %3155 = vmatpush.msra.mxu0 0.0
        %3156 = vmatpush.msra.mxu0 0.0
        %3157 = vmatpush.msra.mxu0 0.0
        %3158 = vmatpush.msra.mxu0 0.0
        %3159 = vmatpush.msra.mxu0 0.0
        %3160 = vmatpush.msra.mxu0 0.0
        %3161 = vmatpush.msra.mxu0 0.0
        %3162 = vmatpush.msra.mxu0 0.0
        %3163 = vmatpush.msra.mxu0 %v3146
        %3164 = vmatmul.f32.gmra.mxu0 %v3139
        %v3165 = vpop.f32.mrf.mxu0
        %v3166 = vadd.f32 0.0, %v3165
        %3167 = vmatmul.f32.gmra.mxu0 %v3142
        %v3168 = vpop.f32.mrf.mxu0
        %v3169 = vadd.f32 0.0, %v3168
        %3170 = vdwg.mxu0
        %v3171 = vld [vmem:[%s12] sm:$0xff]
        %v3172 = vld [vmem:[%s12 + $0x8] sm:$0x3f]
        %v3173 = vmul.f32 %v3166, %v3171
        %v3174 = vmul.f32 %v3169, %v3172
        %v3176 = vsel %vm3137, %v2830, 0
        %v3179 = vsel %vm3137, %v2833, 0
        %3181 = vmatpush.msra.mxu0 0.0
        %3182 = vmatpush.msra.mxu0 0.0
        %3183 = vmatpush.msra.mxu0 0.0
        %3184 = vmatpush.msra.mxu0 0.0
        %3185 = vmatpush.msra.mxu0 0.0
        %3186 = vmatpush.msra.mxu0 0.0
        %3187 = vmatpush.msra.mxu0 0.0
        %3188 = vmatpush.msra.mxu0 0.0
        %3189 = vmatpush.msra.mxu0 0.0
        %3190 = vmatpush.msra.mxu0 0.0
        %3191 = vmatpush.msra.mxu0 0.0
        %3192 = vmatpush.msra.mxu0 0.0
        %3193 = vmatpush.msra.mxu0 0.0
        %3194 = vmatpush.msra.mxu0 0.0
        %3195 = vmatpush.msra.mxu0 0.0
        %3196 = vmatpush.msra.mxu0 %v3146
        %3197 = vmatmul.f32.gmra.mxu0 %v3176
        %v3198 = vpop.f32.mrf.mxu0
        %v3199 = vadd.f32 0.0, %v3198
        %3200 = vmatmul.f32.gmra.mxu0 %v3179
        %v3201 = vpop.f32.mrf.mxu0
        %v3202 = vadd.f32 0.0, %v3201
        %3203 = vdwg.mxu0
        %s3204 = scalar_lea.vmem %s12, 16
        %v3205 = vld [vmem:[%s3204] sm:$0xff]
        %v3206 = vld [vmem:[%s3204 + $0x8] sm:$0x3f]
        %v3207 = vmul.f32 %v3199, %v3205
        %v3208 = vmul.f32 %v3202, %v3206
        %vm3209 = vcmask 113664
        %v3211 = vsel %vm3209, %v3136, 0
        %vm3213 = vcmask 1045504
        %v3215 = vsel %vm3213, %v3208, 0
        %3217 = vmatpush.msra.mxu0 0.0
        %3218 = vmatpush.msra.mxu0 0.0
        %3219 = vmatpush.msra.mxu0 0.0
        %3220 = vmatpush.msra.mxu0 0.0
        %3221 = vmatpush.msra.mxu0 0.0
        %3222 = vmatpush.msra.mxu0 0.0
        %3223 = vmatpush.msra.mxu0 0.0
        %3224 = vmatpush.msra.mxu0 0.0
        %3225 = vmatpush.msra.mxu0 0.0
        %3226 = vmatpush.msra.mxu0 0.0
        %3227 = vmatpush.msra.mxu0 0.0
        %3228 = vmatpush.msra.mxu0 0.0
        %3229 = vmatpush.msra.mxu0 0.0
        %3230 = vmatpush.msra.mxu0 0.0
        %3231 = vmatpush.msra.mxu0 %v3215
        %3232 = vmatpush.msra.mxu0 %v3207
        %3233 = vmatmul.f32.gmra.mxu0 %v3211
        %v3234 = vpop.f32.mrf.mxu0
        %v3235 = vadd.f32 0.0, %v3234
        %3236 = vdwg.mxu0
        %v3238 = vsel %vm3213, %v3174, 0
        %3240 = vmatpush.msra.mxu0 0.0
        %3241 = vmatpush.msra.mxu0 0.0
        %3242 = vmatpush.msra.mxu0 0.0
        %3243 = vmatpush.msra.mxu0 0.0
        %3244 = vmatpush.msra.mxu0 0.0
        %3245 = vmatpush.msra.mxu0 0.0
        %3246 = vmatpush.msra.mxu0 0.0
        %3247 = vmatpush.msra.mxu0 0.0
        %3248 = vmatpush.msra.mxu0 0.0
        %3249 = vmatpush.msra.mxu0 0.0
        %3250 = vmatpush.msra.mxu0 0.0
        %3251 = vmatpush.msra.mxu0 0.0
        %3252 = vmatpush.msra.mxu0 0.0
        %3253 = vmatpush.msra.mxu0 0.0
        %3254 = vmatpush.msra.mxu0 %v3238
        %3255 = vmatpush.msra.mxu0 %v3173
        %3256 = vmatmul.f32.gmra.mxu0 %v3211
        %v3257 = vpop.f32.mrf.mxu0
        %v3258 = vadd.f32 %v3235, %v3257
        %3259 = vdwg.mxu0
        %v3260 = vadd.f32 %v3258, %v2860
        %v3261 = vperm.slane %v522, 1
        %v3262 = vadd.f32 %v3260, %v3261
        %v3263 = vxor.u32 %v3262, 2147483648
        %v3264 = vmul.f32 %v3263, 1.442695
        %v3265 = vpow.pop %v3264
        %v3266 = vadd.f32 %v3265, 1.0
        %v3267 = vrcp.pop %v3266
        %v3268 = vmul.f32 %v3266, %v3267
        %v3269 = vsub.f32 1.0, %v3268
        %v3270 = vmul.f32 %v3267, %v3269
        %v3271 = vadd.f32 %v3267, %v3270
        %vm3272 = vweird.f32 %v3266
        %vm3273 = vweird.f32 %v3267
        %vm3274 = vmor %vm3272, %vm3273
        %v3275 = vsel %vm3274, %v3267, %v3271
        %v3276 = vand.u32 2147483647, %v3266
        %vm3277 = vcmp.eq.f32.partialorder %v3276, 8.507059e+37
        %v3278 = vand.u32 %v3266, 2147483648
        %v3279 = vor.u32 1.1754944e-38, %v3278
        %v3280 = vsel %vm3277, %v3279, %v3275
        %v3281 = vmul.f32 1.0, %v3280
        %3283 = vrot.lane.b32.xlu0 %v3281, 1
        %v3284 = vpop.permute.xlu0 %3283
        %vm3286 = vcmask 7168
        %v3287 = vsel %vm3286, 0.0, %v3284
        %v3288 = vperm.slane %v522, 2
        %v3289 = vmul.f32 %v3287, %v3288
        %3290 = vrot.lane.b32.xlu0 %v3281, 127
        %v3291 = vpop.permute.xlu0 %3290
        %vm3293 = vcmask 1039360
        %v3294 = vsel %vm3293, %v3291, 0.0
        %v3295 = vperm.slane %v522, 3
        %v3296 = vmul.f32 %v3294, %v3295
        %s3297 = sld [smem:[#allocation2 + $0xd]]
        %v3298 = vstv %s3297
        %v3299 = vmul.f32 %v3298, %v3289
        %s3300 = sld [smem:[#allocation2 + $0xe]]
        %v3301 = vstv %s3300
        %v3302 = vmul.f32 %v3301, %v3281
        %v3303 = vadd.f32 %v3299, %v3302
        %s3304 = sld [smem:[#allocation2 + $0xf]]
        %v3305 = vstv %s3304
        %v3306 = vmul.f32 %v3305, %v3296
        %v3307 = vadd.f32 %v3303, %v3306
        %s3308 = sld [smem:[#allocation2 + $0x10]]
        %v3309 = vstv %s3308
        %v3310 = vadd.f32 %v3307, %v3309
        %v3311 = vxor.u32 %v3310, 2147483648
        %v3312 = vmul.f32 %v3311, 1.442695
        %v3313 = vpow.pop %v3312
        %v3314 = vadd.f32 %v3313, 1.0
        %v3315 = vrcp.pop %v3314
        %v3316 = vmul.f32 %v3314, %v3315
        %v3317 = vsub.f32 1.0, %v3316
        %v3318 = vmul.f32 %v3315, %v3317
        %v3319 = vadd.f32 %v3315, %v3318
        %vm3320 = vweird.f32 %v3314
        %vm3321 = vweird.f32 %v3315
        %vm3322 = vmor %vm3320, %vm3321
        %v3323 = vsel %vm3322, %v3315, %v3319
        %v3324 = vand.u32 2147483647, %v3314
        %vm3325 = vcmp.eq.f32.partialorder %v3324, 8.507059e+37
        %v3326 = vand.u32 %v3314, 2147483648
        %v3327 = vor.u32 1.1754944e-38, %v3326
        %v3328 = vsel %vm3325, %v3327, %v3323
        %v3329 = vmul.f32 1.0, %v3328
        %v3330 = vld [vmem:[%s6] sm:$0xff]
        %v3331 = vld [vmem:[%s6 + $0x8] sm:$0xff]
        %v3332 = vld [vmem:[%s6 + $0x10] sm:$0xff]
        %v3333 = vld [vmem:[%s6 + $0x18] sm:$0xff]
        %v3334 = vld [vmem:[%s6 + $0x20] sm:$0xff]
        %v3335 = vld [vmem:[%s6 + $0x28] sm:$0xff]
        %v3336 = vld [vmem:[%s6 + $0x30] sm:$0xff]
        %v3337 = vld [vmem:[%s6 + $0x38] sm:$0xff]
        %v3338 = vld [vmem:[%s6 + $0x40] sm:$0xff]
        %v3339 = vld [vmem:[%s6 + $0x48] sm:$0xff]
        %v3340 = vld [vmem:[%s6 + $0x50] sm:$0xff]
        %v3341 = vld [vmem:[%s6 + $0x58] sm:$0xff]
        %v3342 = vld [vmem:[%s6 + $0x60] sm:$0x3]
        %v3344 = vsel %vm3137, %v2991, 0
        %v3347 = vsel %vm3137, %v3006, 0
        %3349 = vmatpush.msra.mxu0 0.0
        %3350 = vmatpush.msra.mxu0 0.0
        %3351 = vmatpush.msra.mxu0 0.0
        %3352 = vmatpush.msra.mxu0 0.0
        %3353 = vmatpush.msra.mxu0 0.0
        %3354 = vmatpush.msra.mxu0 0.0
        %3355 = vmatpush.msra.mxu0 0.0
        %3356 = vmatpush.msra.mxu0 0.0
        %3357 = vmatpush.msra.mxu0 0.0
        %3358 = vmatpush.msra.mxu0 0.0
        %3359 = vmatpush.msra.mxu0 0.0
        %3360 = vmatpush.msra.mxu0 0.0
        %3361 = vmatpush.msra.mxu0 0.0
        %3362 = vmatpush.msra.mxu0 0.0
        %3363 = vmatpush.msra.mxu0 0.0
        %3364 = vmatpush.msra.mxu0 %v3146
        %3365 = vmatmul.f32.gmra.mxu0 %v3344
        %v3366 = vpop.f32.mrf.mxu0
        %v3367 = vadd.f32 0.0, %v3366
        %3368 = vmatmul.f32.gmra.mxu0 %v3347
        %v3369 = vpop.f32.mrf.mxu0
        %v3370 = vadd.f32 0.0, %v3369
        %3371 = vdwg.mxu0
        %v3373 = vsel %vm3209, %v3330, 0
        %v3376 = vsel %vm3209, %v3331, 0
        %v3379 = vsel %vm3209, %v3332, 0
        %v3382 = vsel %vm3209, %v3333, 0
        %v3385 = vsel %vm3209, %v3334, 0
        %v3388 = vsel %vm3209, %v3335, 0
        %v3391 = vsel %vm3209, %v3336, 0
        %v3394 = vsel %vm3209, %v3337, 0
        %v3397 = vsel %vm3209, %v3338, 0
        %v3400 = vsel %vm3209, %v3339, 0
        %v3403 = vsel %vm3209, %v3340, 0
        %v3406 = vsel %vm3209, %v3341, 0
        %v3409 = vsel %vm3209, %v3342, 0
        %v3412 = vsel %vm3213, %v3370, 0
        %3414 = vmatpush.msra.mxu0 0.0
        %3415 = vmatpush.msra.mxu0 0.0
        %3416 = vmatpush.msra.mxu0 0.0
        %3417 = vmatpush.msra.mxu0 0.0
        %3418 = vmatpush.msra.mxu0 0.0
        %3419 = vmatpush.msra.mxu0 0.0
        %3420 = vmatpush.msra.mxu0 0.0
        %3421 = vmatpush.msra.mxu0 0.0
        %3422 = vmatpush.msra.mxu0 0.0
        %3423 = vmatpush.msra.mxu0 0.0
        %3424 = vmatpush.msra.mxu0 0.0
        %3425 = vmatpush.msra.mxu0 0.0
        %3426 = vmatpush.msra.mxu0 0.0
        %3427 = vmatpush.msra.mxu0 0.0
        %3428 = vmatpush.msra.mxu0 %v3412
        %3429 = vmatpush.msra.mxu0 %v3367
        %3430 = vmatmul.f32.gmra.mxu0 %v3373
        %v3431 = vpop.f32.mrf.mxu0
        %v3432 = vadd.f32 0.0, %v3431
        %3433 = vmatmul.f32.gmra.mxu0 %v3376
        %v3434 = vpop.f32.mrf.mxu0
        %v3435 = vadd.f32 0.0, %v3434
        %3436 = vmatmul.f32.gmra.mxu0 %v3379
        %v3437 = vpop.f32.mrf.mxu0
        %v3438 = vadd.f32 0.0, %v3437
        %3439 = vmatmul.f32.gmra.mxu0 %v3382
        %v3440 = vpop.f32.mrf.mxu0
        %v3441 = vadd.f32 0.0, %v3440
        %3442 = vmatmul.f32.gmra.mxu0 %v3385
        %v3443 = vpop.f32.mrf.mxu0
        %v3444 = vadd.f32 0.0, %v3443
        %3445 = vmatmul.f32.gmra.mxu0 %v3388
        %v3446 = vpop.f32.mrf.mxu0
        %v3447 = vadd.f32 0.0, %v3446
        %3448 = vmatmul.f32.gmra.mxu0 %v3391
        %v3449 = vpop.f32.mrf.mxu0
        %v3450 = vadd.f32 0.0, %v3449
        %3451 = vmatmul.f32.gmra.mxu0 %v3394
        %v3452 = vpop.f32.mrf.mxu0
        %v3453 = vadd.f32 0.0, %v3452
        %3454 = vmatmul.f32.gmra.mxu0 %v3397
        %v3455 = vpop.f32.mrf.mxu0
        %v3456 = vadd.f32 0.0, %v3455
        %3457 = vmatmul.f32.gmra.mxu0 %v3400
        %v3458 = vpop.f32.mrf.mxu0
        %v3459 = vadd.f32 0.0, %v3458
        %3460 = vmatmul.f32.gmra.mxu0 %v3403
        %v3461 = vpop.f32.mrf.mxu0
        %v3462 = vadd.f32 0.0, %v3461
        %3463 = vmatmul.f32.gmra.mxu0 %v3406
        %v3464 = vpop.f32.mrf.mxu0
        %v3465 = vadd.f32 0.0, %v3464
        %3466 = vmatmul.f32.gmra.mxu0 %v3409
        %v3467 = vpop.f32.mrf.mxu0
        %v3468 = vadd.f32 0.0, %v3467
        %3469 = vdwg.mxu0
        %s3470 = scalar_lea.vmem %s6, 104
        %v3471 = vld [vmem:[%s3470] sm:$0xff]
        %v3472 = vld [vmem:[%s3470 + $0x8] sm:$0xff]
        %v3473 = vld [vmem:[%s3470 + $0x10] sm:$0xff]
        %v3474 = vld [vmem:[%s3470 + $0x18] sm:$0xff]
        %v3475 = vld [vmem:[%s3470 + $0x20] sm:$0xff]
        %v3476 = vld [vmem:[%s3470 + $0x28] sm:$0xff]
        %v3477 = vld [vmem:[%s3470 + $0x30] sm:$0xff]
        %v3478 = vld [vmem:[%s3470 + $0x38] sm:$0xff]
        %v3479 = vld [vmem:[%s3470 + $0x40] sm:$0xff]
        %v3480 = vld [vmem:[%s3470 + $0x48] sm:$0xff]
        %v3481 = vld [vmem:[%s3470 + $0x50] sm:$0xff]
        %v3482 = vld [vmem:[%s3470 + $0x58] sm:$0xff]
        %v3483 = vld [vmem:[%s3470 + $0x60] sm:$0x3]
        %v3485 = vsel %vm3137, %v3119, 0
        %v3488 = vsel %vm3137, %v3134, 0
        %3490 = vmatpush.msra.mxu0 0.0
        %3491 = vmatpush.msra.mxu0 0.0
        %3492 = vmatpush.msra.mxu0 0.0
        %3493 = vmatpush.msra.mxu0 0.0
        %3494 = vmatpush.msra.mxu0 0.0
        %3495 = vmatpush.msra.mxu0 0.0
        %3496 = vmatpush.msra.mxu0 0.0
        %3497 = vmatpush.msra.mxu0 0.0
        %3498 = vmatpush.msra.mxu0 0.0
        %3499 = vmatpush.msra.mxu0 0.0
        %3500 = vmatpush.msra.mxu0 0.0
        %3501 = vmatpush.msra.mxu0 0.0
        %3502 = vmatpush.msra.mxu0 0.0
        %3503 = vmatpush.msra.mxu0 0.0
        %3504 = vmatpush.msra.mxu0 0.0
        %3505 = vmatpush.msra.mxu0 %v3146
        %3506 = vmatmul.f32.gmra.mxu0 %v3485
        %v3507 = vpop.f32.mrf.mxu0
        %v3508 = vadd.f32 0.0, %v3507
        %3509 = vmatmul.f32.gmra.mxu0 %v3488
        %v3510 = vpop.f32.mrf.mxu0
        %v3511 = vadd.f32 0.0, %v3510
        %3512 = vdwg.mxu0
        %v3514 = vsel %vm3209, %v3471, 0
        %v3517 = vsel %vm3209, %v3472, 0
        %v3520 = vsel %vm3209, %v3473, 0
        %v3523 = vsel %vm3209, %v3474, 0
        %v3526 = vsel %vm3209, %v3475, 0
        %v3529 = vsel %vm3209, %v3476, 0
        %v3532 = vsel %vm3209, %v3477, 0
        %v3535 = vsel %vm3209, %v3478, 0
        %v3538 = vsel %vm3209, %v3479, 0
        %v3541 = vsel %vm3209, %v3480, 0
        %v3544 = vsel %vm3209, %v3481, 0
        %v3547 = vsel %vm3209, %v3482, 0
        %v3550 = vsel %vm3209, %v3483, 0
        %v3553 = vsel %vm3213, %v3511, 0
        %3555 = vmatpush.msra.mxu0 0.0
        %3556 = vmatpush.msra.mxu0 0.0
        %3557 = vmatpush.msra.mxu0 0.0
        %3558 = vmatpush.msra.mxu0 0.0
        %3559 = vmatpush.msra.mxu0 0.0
        %3560 = vmatpush.msra.mxu0 0.0
        %3561 = vmatpush.msra.mxu0 0.0
        %3562 = vmatpush.msra.mxu0 0.0
        %3563 = vmatpush.msra.mxu0 0.0
        %3564 = vmatpush.msra.mxu0 0.0
        %3565 = vmatpush.msra.mxu0 0.0
        %3566 = vmatpush.msra.mxu0 0.0
        %3567 = vmatpush.msra.mxu0 0.0
        %3568 = vmatpush.msra.mxu0 0.0
        %3569 = vmatpush.msra.mxu0 %v3553
        %3570 = vmatpush.msra.mxu0 %v3508
        %3571 = vmatmul.f32.gmra.mxu0 %v3514
        %v3572 = vpop.f32.mrf.mxu0
        %v3573 = vadd.f32 0.0, %v3572
        %3574 = vmatmul.f32.gmra.mxu0 %v3517
        %v3575 = vpop.f32.mrf.mxu0
        %v3576 = vadd.f32 0.0, %v3575
        %3577 = vmatmul.f32.gmra.mxu0 %v3520
        %v3578 = vpop.f32.mrf.mxu0
        %v3579 = vadd.f32 0.0, %v3578
        %3580 = vmatmul.f32.gmra.mxu0 %v3523
        %v3581 = vpop.f32.mrf.mxu0
        %v3582 = vadd.f32 0.0, %v3581
        %3583 = vmatmul.f32.gmra.mxu0 %v3526
        %v3584 = vpop.f32.mrf.mxu0
        %v3585 = vadd.f32 0.0, %v3584
        %3586 = vmatmul.f32.gmra.mxu0 %v3529
        %v3587 = vpop.f32.mrf.mxu0
        %v3588 = vadd.f32 0.0, %v3587
        %3589 = vmatmul.f32.gmra.mxu0 %v3532
        %v3590 = vpop.f32.mrf.mxu0
        %v3591 = vadd.f32 0.0, %v3590
        %3592 = vmatmul.f32.gmra.mxu0 %v3535
        %v3593 = vpop.f32.mrf.mxu0
        %v3594 = vadd.f32 0.0, %v3593
        %3595 = vmatmul.f32.gmra.mxu0 %v3538
        %v3596 = vpop.f32.mrf.mxu0
        %v3597 = vadd.f32 0.0, %v3596
        %3598 = vmatmul.f32.gmra.mxu0 %v3541
        %v3599 = vpop.f32.mrf.mxu0
        %v3600 = vadd.f32 0.0, %v3599
        %3601 = vmatmul.f32.gmra.mxu0 %v3544
        %v3602 = vpop.f32.mrf.mxu0
        %v3603 = vadd.f32 0.0, %v3602
        %3604 = vmatmul.f32.gmra.mxu0 %v3547
        %v3605 = vpop.f32.mrf.mxu0
        %v3606 = vadd.f32 0.0, %v3605
        %3607 = vmatmul.f32.gmra.mxu0 %v3550
        %v3608 = vpop.f32.mrf.mxu0
        %v3609 = vadd.f32 0.0, %v3608
        %3610 = vdwg.mxu0
        %v3611 = vld [vmem:[%s9] sm:$0xff]
        %v3612 = vld [vmem:[%s9 + $0x8] sm:$0xff]
        %v3613 = vld [vmem:[%s9 + $0x10] sm:$0xff]
        %v3614 = vld [vmem:[%s9 + $0x18] sm:$0xff]
        %v3615 = vld [vmem:[%s9 + $0x20] sm:$0xff]
        %v3616 = vld [vmem:[%s9 + $0x28] sm:$0xff]
        %v3617 = vld [vmem:[%s9 + $0x30] sm:$0xff]
        %v3618 = vld [vmem:[%s9 + $0x38] sm:$0xff]
        %v3619 = vld [vmem:[%s9 + $0x40] sm:$0xff]
        %v3620 = vld [vmem:[%s9 + $0x48] sm:$0xff]
        %v3621 = vld [vmem:[%s9 + $0x50] sm:$0xff]
        %v3622 = vld [vmem:[%s9 + $0x58] sm:$0xff]
        %v3623 = vld [vmem:[%s9 + $0x60] sm:$0x3]
        %vm3624 = vcmask 15360
        %v3626 = vsel %vm3624, %v3611, 0
        %v3629 = vsel %vm3624, %v3612, 0
        %v3632 = vsel %vm3624, %v3613, 0
        %v3635 = vsel %vm3624, %v3614, 0
        %v3638 = vsel %vm3624, %v3615, 0
        %v3641 = vsel %vm3624, %v3616, 0
        %v3644 = vsel %vm3624, %v3617, 0
        %v3647 = vsel %vm3624, %v3618, 0
        %v3650 = vsel %vm3624, %v3619, 0
        %v3653 = vsel %vm3624, %v3620, 0
        %v3656 = vsel %vm3624, %v3621, 0
        %v3659 = vsel %vm3624, %v3622, 0
        %v3662 = vsel %vm3624, %v3623, 0
        %v3665 = vsel %vm2727, %v3329, 0
        %3667 = vmatpush.msra.mxu0 0.0
        %3668 = vmatpush.msra.mxu0 0.0
        %3669 = vmatpush.msra.mxu0 0.0
        %3670 = vmatpush.msra.mxu0 0.0
        %3671 = vmatpush.msra.mxu0 0.0
        %3672 = vmatpush.msra.mxu0 0.0
        %3673 = vmatpush.msra.mxu0 0.0
        %3674 = vmatpush.msra.mxu0 0.0
        %3675 = vmatpush.msra.mxu0 0.0
        %3676 = vmatpush.msra.mxu0 0.0
        %3677 = vmatpush.msra.mxu0 0.0
        %3678 = vmatpush.msra.mxu0 0.0
        %3679 = vmatpush.msra.mxu0 0.0
        %3680 = vmatpush.msra.mxu0 0.0
        %3681 = vmatpush.msra.mxu0 0.0
        %3682 = vmatpush.msra.mxu0 %v3665
        %3683 = vmatmul.f32.gmra.mxu0 %v3626
        %v3684 = vpop.f32.mrf.mxu0
        %v3685 = vadd.f32 0.0, %v3684
        %3686 = vmatmul.f32.gmra.mxu0 %v3629
        %v3687 = vpop.f32.mrf.mxu0
        %v3688 = vadd.f32 0.0, %v3687
        %3689 = vmatmul.f32.gmra.mxu0 %v3632
        %v3690 = vpop.f32.mrf.mxu0
        %v3691 = vadd.f32 0.0, %v3690
        %3692 = vmatmul.f32.gmra.mxu0 %v3635
        %v3693 = vpop.f32.mrf.mxu0
        %v3694 = vadd.f32 0.0, %v3693
        %3695 = vmatmul.f32.gmra.mxu0 %v3638
        %v3696 = vpop.f32.mrf.mxu0
        %v3697 = vadd.f32 0.0, %v3696
        %3698 = vmatmul.f32.gmra.mxu0 %v3641
        %v3699 = vpop.f32.mrf.mxu0
        %v3700 = vadd.f32 0.0, %v3699
        %3701 = vmatmul.f32.gmra.mxu0 %v3644
        %v3702 = vpop.f32.mrf.mxu0
        %v3703 = vadd.f32 0.0, %v3702
        %3704 = vmatmul.f32.gmra.mxu0 %v3647
        %v3705 = vpop.f32.mrf.mxu0
        %v3706 = vadd.f32 0.0, %v3705
        %3707 = vmatmul.f32.gmra.mxu0 %v3650
        %v3708 = vpop.f32.mrf.mxu0
        %v3709 = vadd.f32 0.0, %v3708
        %3710 = vmatmul.f32.gmra.mxu0 %v3653
        %v3711 = vpop.f32.mrf.mxu0
        %v3712 = vadd.f32 0.0, %v3711
        %3713 = vmatmul.f32.gmra.mxu0 %v3656
        %v3714 = vpop.f32.mrf.mxu0
        %v3715 = vadd.f32 0.0, %v3714
        %3716 = vmatmul.f32.gmra.mxu0 %v3659
        %v3717 = vpop.f32.mrf.mxu0
        %v3718 = vadd.f32 0.0, %v3717
        %3719 = vmatmul.f32.gmra.mxu0 %v3662
        %v3720 = vpop.f32.mrf.mxu0
        %v3721 = vadd.f32 0.0, %v3720
        %3722 = vdwg.mxu0
        %v3723 = vmul.f32 %v2663, %v3432
        %v3724 = vmul.f32 %v2666, %v3435
        %v3725 = vmul.f32 %v2669, %v3438
        %v3726 = vmul.f32 %v2672, %v3441
        %v3727 = vmul.f32 %v2675, %v3444
        %v3728 = vmul.f32 %v2678, %v3447
        %v3729 = vmul.f32 %v2681, %v3450
        %v3730 = vmul.f32 %v2684, %v3453
        %v3731 = vmul.f32 %v2687, %v3456
        %v3732 = vmul.f32 %v2690, %v3459
        %v3733 = vmul.f32 %v2693, %v3462
        %v3734 = vmul.f32 %v2696, %v3465
        %v3735 = vmul.f32 %v2699, %v3468
        %v3736 = vmul.f32 %v2664, %v3573
        %v3737 = vmul.f32 %v2667, %v3576
        %v3738 = vmul.f32 %v2670, %v3579
        %v3739 = vmul.f32 %v2673, %v3582
        %v3740 = vmul.f32 %v2676, %v3585
        %v3741 = vmul.f32 %v2679, %v3588
        %v3742 = vmul.f32 %v2682, %v3591
        %v3743 = vmul.f32 %v2685, %v3594
        %v3744 = vmul.f32 %v2688, %v3597
        %v3745 = vmul.f32 %v2691, %v3600
        %v3746 = vmul.f32 %v2694, %v3603
        %v3747 = vmul.f32 %v2697, %v3606
        %v3748 = vmul.f32 %v2700, %v3609
        %v3749 = vmul.f32 %v2665, %v3685
        %v3750 = vmul.f32 %v2668, %v3688
        %v3751 = vmul.f32 %v2671, %v3691
        %v3752 = vmul.f32 %v2674, %v3694
        %v3753 = vmul.f32 %v2677, %v3697
        %v3754 = vmul.f32 %v2680, %v3700
        %v3755 = vmul.f32 %v2683, %v3703
        %v3756 = vmul.f32 %v2686, %v3706
        %v3757 = vmul.f32 %v2689, %v3709
        %v3758 = vmul.f32 %v2692, %v3712
        %v3759 = vmul.f32 %v2695, %v3715
        %v3760 = vmul.f32 %v2698, %v3718
        %v3761 = vmul.f32 %v2701, %v3721
        %v3762 = vld [vmem:[%s3] sm:$0xff]
        %v3763 = vld [vmem:[%s3 + $0x8] sm:$0xff]
        %v3764 = vld [vmem:[%s3 + $0x10] sm:$0xff]
        %v3765 = vld [vmem:[%s3 + $0x18] sm:$0xff]
        %v3766 = vld [vmem:[%s3 + $0x20] sm:$0xff]
        %v3767 = vld [vmem:[%s3 + $0x28] sm:$0xff]
        %v3768 = vld [vmem:[%s3 + $0x30] sm:$0xff]
        %v3769 = vld [vmem:[%s3 + $0x38] sm:$0xff]
        %v3770 = vld [vmem:[%s3 + $0x40] sm:$0xff]
        %v3771 = vld [vmem:[%s3 + $0x48] sm:$0xff]
        %v3772 = vld [vmem:[%s3 + $0x50] sm:$0xff]
        %v3773 = vld [vmem:[%s3 + $0x58] sm:$0xff]
        %v3774 = vld [vmem:[%s3 + $0x60] sm:$0xff]
        %v3775 = vld [vmem:[%s3 + $0x68] sm:$0xff]
        %v3776 = vld [vmem:[%s3 + $0x70] sm:$0xff]
        %v3777 = vld [vmem:[%s3 + $0x78] sm:$0xff]
        %v3778 = vld [vmem:[%s3 + $0x80] sm:$0xff]
        %v3779 = vld [vmem:[%s3 + $0x88] sm:$0xff]
        %v3780 = vld [vmem:[%s3 + $0x90] sm:$0xff]
        %v3781 = vld [vmem:[%s3 + $0x98] sm:$0xff]
        %v3782 = vld [vmem:[%s3 + $0xa0] sm:$0xff]
        %v3783 = vld [vmem:[%s3 + $0xa8] sm:$0xff]
        %v3784 = vld [vmem:[%s3 + $0xb0] sm:$0xff]
        %v3785 = vld [vmem:[%s3 + $0xb8] sm:$0xff]
        %v3786 = vld [vmem:[%s3 + $0xc0] sm:$0xff]
        %v3787 = vld [vmem:[%s3 + $0xc8] sm:$0xff]
        %v3788 = vld [vmem:[%s3 + $0xd0] sm:$0xff]
        %v3789 = vld [vmem:[%s3 + $0xd8] sm:$0xff]
        %v3790 = vld [vmem:[%s3 + $0xe0] sm:$0xff]
        %v3791 = vld [vmem:[%s3 + $0xe8] sm:$0xff]
        %v3792 = vld [vmem:[%s3 + $0xf0] sm:$0xff]
        %v3793 = vld [vmem:[%s3 + $0xf8] sm:$0xff]
        %v3794 = vld [vmem:[%s3 + $0x100] sm:$0xff]
        %v3795 = vld [vmem:[%s3 + $0x108] sm:$0xff]
        %v3796 = vld [vmem:[%s3 + $0x110] sm:$0xff]
        %v3797 = vld [vmem:[%s3 + $0x118] sm:$0xff]
        %v3798 = vld [vmem:[%s3 + $0x120] sm:$0xff]
        %v3799 = vld [vmem:[%s3 + $0x128] sm:$0xff]
        %v3800 = vld [vmem:[%s3 + $0x130] sm:$0xff]
        %v3801 = vld [vmem:[%s3 + $0x138] sm:$0xff]
        %v3802 = vld [vmem:[%s3 + $0x140] sm:$0xff]
        %v3803 = vld [vmem:[%s3 + $0x148] sm:$0xff]
        %v3804 = vld [vmem:[%s3 + $0x150] sm:$0xff]
        %v3805 = vld [vmem:[%s3 + $0x158] sm:$0xff]
        %v3806 = vld [vmem:[%s3 + $0x160] sm:$0xff]
        %v3807 = vld [vmem:[%s3 + $0x168] sm:$0xff]
        %v3808 = vld [vmem:[%s3 + $0x170] sm:$0xff]
        %v3809 = vld [vmem:[%s3 + $0x178] sm:$0xff]
        %v3810 = vperm.slane %v522, 0
        %3811 = vmatpush.msra.mxu0 %v3777
        %3812 = vmatpush.msra.mxu0 %v3776
        %3813 = vmatpush.msra.mxu0 %v3775
        %3814 = vmatpush.msra.mxu0 %v3774
        %3815 = vmatpush.msra.mxu0 %v3773
        %3816 = vmatpush.msra.mxu0 %v3772
        %3817 = vmatpush.msra.mxu0 %v3771
        %3818 = vmatpush.msra.mxu0 %v3770
        %3819 = vmatpush.msra.mxu0 %v3769
        %3820 = vmatpush.msra.mxu0 %v3768
        %3821 = vmatpush.msra.mxu0 %v3767
        %3822 = vmatpush.msra.mxu0 %v3766
        %3823 = vmatpush.msra.mxu0 %v3765
        %3824 = vmatpush.msra.mxu0 %v3764
        %3825 = vmatpush.msra.mxu0 %v3763
        %3826 = vmatpush.msra.mxu0 %v3762
        %3827 = vmatmul.f32.gmra.mxu0 %v3723
        %v3828 = vpop.f32.mrf.mxu0
        %v3829 = vadd.f32 %v3810, %v3828
        %3830 = vmatmul.f32.gmra.mxu0 %v3724
        %v3831 = vpop.f32.mrf.mxu0
        %v3832 = vadd.f32 %v3810, %v3831
        %3833 = vmatmul.f32.gmra.mxu0 %v3725
        %v3834 = vpop.f32.mrf.mxu0
        %v3835 = vadd.f32 %v3810, %v3834
        %3836 = vmatmul.f32.gmra.mxu0 %v3726
        %v3837 = vpop.f32.mrf.mxu0
        %v3838 = vadd.f32 %v3810, %v3837
        %3839 = vmatmul.f32.gmra.mxu0 %v3727
        %v3840 = vpop.f32.mrf.mxu0
        %v3841 = vadd.f32 %v3810, %v3840
        %3842 = vmatmul.f32.gmra.mxu0 %v3728
        %v3843 = vpop.f32.mrf.mxu0
        %v3844 = vadd.f32 %v3810, %v3843
        %3845 = vmatmul.f32.gmra.mxu0 %v3729
        %v3846 = vpop.f32.mrf.mxu0
        %v3847 = vadd.f32 %v3810, %v3846
        %3848 = vmatmul.f32.gmra.mxu0 %v3730
        %v3849 = vpop.f32.mrf.mxu0
        %v3850 = vadd.f32 %v3810, %v3849
        %3851 = vmatmul.f32.gmra.mxu0 %v3731
        %v3852 = vpop.f32.mrf.mxu0
        %v3853 = vadd.f32 %v3810, %v3852
        %3854 = vmatmul.f32.gmra.mxu0 %v3732
        %v3855 = vpop.f32.mrf.mxu0
        %v3856 = vadd.f32 %v3810, %v3855
        %3857 = vmatmul.f32.gmra.mxu0 %v3733
        %v3858 = vpop.f32.mrf.mxu0
        %v3859 = vadd.f32 %v3810, %v3858
        %3860 = vmatmul.f32.gmra.mxu0 %v3734
        %v3861 = vpop.f32.mrf.mxu0
        %v3862 = vadd.f32 %v3810, %v3861
        %3863 = vmatmul.f32.gmra.mxu0 %v3735
        %v3864 = vpop.f32.mrf.mxu0
        %v3865 = vadd.f32 %v3810, %v3864
        %3866 = vdwg.mxu0
        %3867 = vmatpush.msra.mxu0 %v3793
        %3868 = vmatpush.msra.mxu0 %v3792
        %3869 = vmatpush.msra.mxu0 %v3791
        %3870 = vmatpush.msra.mxu0 %v3790
        %3871 = vmatpush.msra.mxu0 %v3789
        %3872 = vmatpush.msra.mxu0 %v3788
        %3873 = vmatpush.msra.mxu0 %v3787
        %3874 = vmatpush.msra.mxu0 %v3786
        %3875 = vmatpush.msra.mxu0 %v3785
        %3876 = vmatpush.msra.mxu0 %v3784
        %3877 = vmatpush.msra.mxu0 %v3783
        %3878 = vmatpush.msra.mxu0 %v3782
        %3879 = vmatpush.msra.mxu0 %v3781
        %3880 = vmatpush.msra.mxu0 %v3780
        %3881 = vmatpush.msra.mxu0 %v3779
        %3882 = vmatpush.msra.mxu0 %v3778
        %3883 = vmatmul.f32.gmra.mxu0 %v3736
        %v3884 = vpop.f32.mrf.mxu0
        %v3885 = vadd.f32 %v3829, %v3884
        %3886 = vmatmul.f32.gmra.mxu0 %v3737
        %v3887 = vpop.f32.mrf.mxu0
        %v3888 = vadd.f32 %v3832, %v3887
        %3889 = vmatmul.f32.gmra.mxu0 %v3738
        %v3890 = vpop.f32.mrf.mxu0
        %v3891 = vadd.f32 %v3835, %v3890
        %3892 = vmatmul.f32.gmra.mxu0 %v3739
        %v3893 = vpop.f32.mrf.mxu0
        %v3894 = vadd.f32 %v3838, %v3893
        %3895 = vmatmul.f32.gmra.mxu0 %v3740
        %v3896 = vpop.f32.mrf.mxu0
        %v3897 = vadd.f32 %v3841, %v3896
        %3898 = vmatmul.f32.gmra.mxu0 %v3741
        %v3899 = vpop.f32.mrf.mxu0
        %v3900 = vadd.f32 %v3844, %v3899
        %3901 = vmatmul.f32.gmra.mxu0 %v3742
        %v3902 = vpop.f32.mrf.mxu0
        %v3903 = vadd.f32 %v3847, %v3902
        %3904 = vmatmul.f32.gmra.mxu0 %v3743
        %v3905 = vpop.f32.mrf.mxu0
        %v3906 = vadd.f32 %v3850, %v3905
        %3907 = vmatmul.f32.gmra.mxu0 %v3744
        %v3908 = vpop.f32.mrf.mxu0
        %v3909 = vadd.f32 %v3853, %v3908
        %3910 = vmatmul.f32.gmra.mxu0 %v3745
        %v3911 = vpop.f32.mrf.mxu0
        %v3912 = vadd.f32 %v3856, %v3911
        %3913 = vmatmul.f32.gmra.mxu0 %v3746
        %v3914 = vpop.f32.mrf.mxu0
        %v3915 = vadd.f32 %v3859, %v3914
        %3916 = vmatmul.f32.gmra.mxu0 %v3747
        %v3917 = vpop.f32.mrf.mxu0
        %v3918 = vadd.f32 %v3862, %v3917
        %3919 = vmatmul.f32.gmra.mxu0 %v3748
        %v3920 = vpop.f32.mrf.mxu0
        %v3921 = vadd.f32 %v3865, %v3920
        %3922 = vdwg.mxu0
        %3923 = vmatpush.msra.mxu0 %v3809
        %3924 = vmatpush.msra.mxu0 %v3808
        %3925 = vmatpush.msra.mxu0 %v3807
        %3926 = vmatpush.msra.mxu0 %v3806
        %3927 = vmatpush.msra.mxu0 %v3805
        %3928 = vmatpush.msra.mxu0 %v3804
        %3929 = vmatpush.msra.mxu0 %v3803
        %3930 = vmatpush.msra.mxu0 %v3802
        %3931 = vmatpush.msra.mxu0 %v3801
        %3932 = vmatpush.msra.mxu0 %v3800
        %3933 = vmatpush.msra.mxu0 %v3799
        %3934 = vmatpush.msra.mxu0 %v3798
        %3935 = vmatpush.msra.mxu0 %v3797
        %3936 = vmatpush.msra.mxu0 %v3796
        %3937 = vmatpush.msra.mxu0 %v3795
        %3938 = vmatpush.msra.mxu0 %v3794
        %3939 = vmatmul.f32.gmra.mxu0 %v3749
        %v3940 = vpop.f32.mrf.mxu0
        %v3941 = vadd.f32 %v3885, %v3940
        %3942 = vmatmul.f32.gmra.mxu0 %v3750
        %v3943 = vpop.f32.mrf.mxu0
        %v3944 = vadd.f32 %v3888, %v3943
        %3945 = vmatmul.f32.gmra.mxu0 %v3751
        %v3946 = vpop.f32.mrf.mxu0
        %v3947 = vadd.f32 %v3891, %v3946
        %3948 = vmatmul.f32.gmra.mxu0 %v3752
        %v3949 = vpop.f32.mrf.mxu0
        %v3950 = vadd.f32 %v3894, %v3949
        %3951 = vmatmul.f32.gmra.mxu0 %v3753
        %v3952 = vpop.f32.mrf.mxu0
        %v3953 = vadd.f32 %v3897, %v3952
        %3954 = vmatmul.f32.gmra.mxu0 %v3754
        %v3955 = vpop.f32.mrf.mxu0
        %v3956 = vadd.f32 %v3900, %v3955
        %3957 = vmatmul.f32.gmra.mxu0 %v3755
        %v3958 = vpop.f32.mrf.mxu0
        %v3959 = vadd.f32 %v3903, %v3958
        %3960 = vmatmul.f32.gmra.mxu0 %v3756
        %v3961 = vpop.f32.mrf.mxu0
        %v3962 = vadd.f32 %v3906, %v3961
        %3963 = vmatmul.f32.gmra.mxu0 %v3757
        %v3964 = vpop.f32.mrf.mxu0
        %v3965 = vadd.f32 %v3909, %v3964
        %3966 = vmatmul.f32.gmra.mxu0 %v3758
        %v3967 = vpop.f32.mrf.mxu0
        %v3968 = vadd.f32 %v3912, %v3967
        %3969 = vmatmul.f32.gmra.mxu0 %v3759
        %v3970 = vpop.f32.mrf.mxu0
        %v3971 = vadd.f32 %v3915, %v3970
        %3972 = vmatmul.f32.gmra.mxu0 %v3760
        %v3973 = vpop.f32.mrf.mxu0
        %v3974 = vadd.f32 %v3918, %v3973
        %3975 = vmatmul.f32.gmra.mxu0 %v3761
        %v3976 = vpop.f32.mrf.mxu0
        %v3977 = vadd.f32 %v3921, %v3976
        %3978 = vdwg.mxu0
        %s3979 = sld [smem:[#allocation2 + $0x11]]
        %v3980 = vstv %s3979
        %v3981 = vmul.f32 %v3941, %v3980
        %v3982 = vmul.f32 %v3944, %v3980
        %v3983 = vmul.f32 %v3947, %v3980
        %v3984 = vmul.f32 %v3950, %v3980
        %v3985 = vmul.f32 %v3953, %v3980
        %v3986 = vmul.f32 %v3956, %v3980
        %v3987 = vmul.f32 %v3959, %v3980
        %v3988 = vmul.f32 %v3962, %v3980
        %v3989 = vmul.f32 %v3965, %v3980
        %v3990 = vmul.f32 %v3968, %v3980
        %v3991 = vmul.f32 %v3971, %v3980
        %v3992 = vmul.f32 %v3974, %v3980
        %v3993 = vmul.f32 %v3977, %v3980
        %s3994 = sld [smem:[#allocation2 + $0x12]]
        %v3995 = vstv %s3994
        %v3996 = vmul.f32 %v509, %v3995
        %v3997 = vmul.f32 %v510, %v3995
        %v3998 = vmul.f32 %v511, %v3995
        %v3999 = vmul.f32 %v512, %v3995
        %v4000 = vmul.f32 %v513, %v3995
        %v4001 = vmul.f32 %v514, %v3995
        %v4002 = vmul.f32 %v515, %v3995
        %v4003 = vmul.f32 %v516, %v3995
        %v4004 = vmul.f32 %v517, %v3995
        %v4005 = vmul.f32 %v518, %v3995
        %v4006 = vmul.f32 %v519, %v3995
        %v4007 = vmul.f32 %v520, %v3995
        %v4008 = vmul.f32 %v521, %v3995
        %v4009 = vadd.f32 %v3981, %v3996
        %v4010 = vadd.f32 %v3982, %v3997
        %v4011 = vadd.f32 %v3983, %v3998
        %v4012 = vadd.f32 %v3984, %v3999
        %v4013 = vadd.f32 %v3985, %v4000
        %v4014 = vadd.f32 %v3986, %v4001
        %v4015 = vadd.f32 %v3987, %v4002
        %v4016 = vadd.f32 %v3988, %v4003
        %v4017 = vadd.f32 %v3989, %v4004
        %v4018 = vadd.f32 %v3990, %v4005
        %v4019 = vadd.f32 %v3991, %v4006
        %v4020 = vadd.f32 %v3992, %v4007
        %v4021 = vadd.f32 %v3993, %v4008
        %4022 = vst [vmem:[%s508] sm:$0xff] %v4009
        %4023 = vst [vmem:[%s508 + $0x8] sm:$0xff] %v4010
        %4024 = vst [vmem:[%s508 + $0x10] sm:$0xff] %v4011
        %4025 = vst [vmem:[%s508 + $0x18] sm:$0xff] %v4012
        %4026 = vst [vmem:[%s508 + $0x20] sm:$0xff] %v4013
        %4027 = vst [vmem:[%s508 + $0x28] sm:$0xff] %v4014
        %4028 = vst [vmem:[%s508 + $0x30] sm:$0xff] %v4015
        %4029 = vst [vmem:[%s508 + $0x38] sm:$0xff] %v4016
        %4030 = vst [vmem:[%s508 + $0x40] sm:$0xff] %v4017
        %4031 = vst [vmem:[%s508 + $0x48] sm:$0xff] %v4018
        %4032 = vst [vmem:[%s508 + $0x50] sm:$0xff] %v4019
        %4033 = vst [vmem:[%s508 + $0x58] sm:$0xff] %v4020
        %4034 = vst [vmem:[%s508 + $0x60] sm:$0x3] %v4021
        %p4035 = scmp.lt.s32.totalorder %s27, 1
        %s4036 = scalar_select %p4035, %s27, 1
        %s4037 = smul.addr %s4036, 13
        %s4038 = smul.addr %s4037, 8
        %s4039 = scalar_lea.vmem %s15, %s4038
        // Predicated region
        $region85: #{eisa_forward.1} parent=79 // pred_check
          %p4040 = pneg %p365
        $region86: #{eisa_forward.1} parent=79 // pred_check_branch
          %4042 = sbr.rel (%p4040) target = $region88
        $region87: #{eisa_forward.1} parent=79 // pred_region
          _
        $region88: #{eisa_forward.1} parent=79 // pred_fallthru
          _
      $region80: #{eisa_forward.1} parent=5 // pred_fallthru
        _
      %p4043 = scmp.le.s32.totalorder 2, %s22
      // Predicated region
      $region89: #{eisa_forward.1} parent=5 // pred_check
        %p4044 = pneg %p4043
      $region90: #{eisa_forward.1} parent=5 // pred_check_branch
        %4046 = sbr.rel (%p4044) target = $region92
      $region91: #{eisa_forward.1} parent=5 // pred_region
        %s4047 = ssub.s32 %s22, 2
        // Predicated region
        $region93: #{eisa_forward.1} parent=91 // pred_check
          %p4048 = pneg %p371
        $region94: #{eisa_forward.1} parent=91 // pred_check_branch
          %4050 = sbr.rel (%p4048) target = $region96
        $region95: #{eisa_forward.1} parent=91 // pred_region
          %p4051 = scmp.lt.s32.totalorder %s28, 1
          %s4052 = scalar_select %p4051, %s28, 1
          %s4053 = smul.addr %s4052, 13
          %s4054 = smul.addr %s4053, 8
          %s4055 = scalar_lea.vmem %s15, %s4054
        $region96: #{eisa_forward.1} parent=91 // pred_fallthru
          _
      $region92: #{eisa_forward.1} parent=5 // pred_fallthru
        _
    $region6: #{eisa_forward.1} parent=1 // loop_footer
      %s26 = sadd.s32 1, %s22
    $region7: #{eisa_forward.1} parent=1 // loop_footer_branch
      %21 = sbr.rel target = $region3
    $region8: #{eisa_forward.1} parent=1 // loop_exit
      _
    %4056 = vsyncpa [#allocation3], 1
    %s4057 = scalar_lea.sflag [#allocation3], 1
    %4058 = vsyncpa %s4057, 1

</llo_original>
